<compile_context>
chip_gen: v7x
topology: tpu7x:2x2x1
jax: 0.10.0
libtpu: 0.0.40
codegen_flags: <defaults>
</compile_context>

<pallas_src>
import math

import jax
import jax.numpy as jnp
from jax.experimental import pallas as pl
from jax.experimental.pallas import tpu as pltpu

# ----------------------------------------------------------------------------
# Synthetic "DistilBERT" config (small, deterministic — not a checkpoint load)
# ----------------------------------------------------------------------------
LABELS = ("sadness", "joy", "love", "anger", "fear", "surprise")
NUM_CLASSES = len(LABELS)

VOCAB_SIZE = 100
MAX_POS = 16
HIDDEN = 32
N_LAYERS = 2
N_HEADS = 4
HEAD_DIM = HIDDEN // N_HEADS
FFN_DIM = 4 * HIDDEN          # 128 — already lane-dense
QKV_PAD = 128                 # 3*HIDDEN = 96, padded to a full 128-lane slab
CLS_PAD = 128                 # NUM_CLASSES = 6, padded to a full 128-lane slab
LN_EPS = 1e-12

BATCH = 2
SEQ = 8


# ----------------------------------------------------------------------------
# Fused forward kernel (single pallas_call, everything VMEM-resident)
# ----------------------------------------------------------------------------
def _fused_forward_kernel(
    x_ref, bias_ref, emb_g_ref, emb_b_ref,
    qkv_w_ref, qkv_b_ref, o_w_ref, o_b_ref, sa_g_ref, sa_b_ref,
    ff1_w_ref, ff1_b_ref, ff2_w_ref, ff2_b_ref, out_g_ref, out_b_ref,
    fc_w_ref, fc_b_ref,
    logits_ref,
):
    def ln(x, g, b):
        mu = jnp.mean(x, axis=-1, keepdims=True)
        var = jnp.mean(jnp.square(x - mu), axis=-1, keepdims=True)
        return (x - mu) * jax.lax.rsqrt(var + LN_EPS) * g + b

    def mm(x_f32, w_bf16):
        # bf16 MXU operands, f32 accumulation.
        return jnp.dot(x_f32.astype(jnp.bfloat16), w_bf16,
                       preferred_element_type=jnp.float32)

    def gelu(y):
        # TODO(synk): DistilBERT uses exact erf GELU; tanh approximation kept
        # here for Mosaic-safe (EUP tanh) lowering.
        c = jnp.float32(0.7978845608028654)  # sqrt(2/pi)
        return 0.5 * y * (1.0 + jnp.tanh(c * (y + 0.044715 * y * y * y)))

    # Embedding LayerNorm.
    x = ln(x_ref[...].astype(jnp.float32), emb_g_ref[...], emb_b_ref[...])
    bias_all = bias_ref[...]                      # (B, S) additive key mask

    for l in range(N_LAYERS):                     # static unroll over layers
        # ---- fused QKV projection: one matmul, 128-lane-dense output -------
        qkv = mm(x, qkv_w_ref[l]) + qkv_b_ref[l]  # (B*S, 128) f32
        # 1/sqrt(head_dim) is pre-folded into the Q weight/bias columns.
        q = qkv[:, 0 * HIDDEN:1 * HIDDEN].astype(jnp.bfloat16)
        k = qkv[:, 1 * HIDDEN:2 * HIDDEN].astype(jnp.bfloat16)
        v = qkv[:, 2 * HIDDEN:3 * HIDDEN].astype(jnp.bfloat16)

        # ---- attention: statically unrolled (batch, head), no transposes ---
        ctx_rows = []
        for b in range(BATCH):
            r0 = b * SEQ
            bias_b = bias_all[b:b + 1, :]          # (1, S) broadcasts over q
            head_ctx = []
            for h in range(N_HEADS):
                c0 = h * HEAD_DIM
                qh = q[r0:r0 + SEQ, c0:c0 + HEAD_DIM]   # (S, Dh)
                kh = k[r0:r0 + SEQ, c0:c0 + HEAD_DIM]
                vh = v[r0:r0 + SEQ, c0:c0 + HEAD_DIM]
                # q · k^T via dot_general contraction (no explicit transpose).
                s = jax.lax.dot_general(
                    qh, kh, (((1,), (1,)), ((), ())),
                    preferred_element_type=jnp.float32) + bias_b
                m = jnp.max(s, axis=-1, keepdims=True)
                p = jnp.exp(s - m)
                p = p / jnp.sum(p, axis=-1, keepdims=True)
                head_ctx.append(
                    jnp.dot(p.astype(jnp.bfloat16), vh,
                            preferred_element_type=jnp.float32))
            ctx_rows.append(jnp.concatenate(head_ctx, axis=-1))   # (S, H)
        ctx = jnp.concatenate(ctx_rows, axis=0)                   # (B*S, H)

        # ---- output projection + residual + LN ------------------------------
        attn_out = mm(ctx, o_w_ref[l]) + o_b_ref[l]
        x = ln(x + attn_out, sa_g_ref[l], sa_b_ref[l])

        # ---- FFN (128-wide intermediate is already lane-dense) --------------
        h1 = gelu(mm(x, ff1_w_ref[l]) + ff1_b_ref[l])
        h2 = mm(h1, ff2_w_ref[l]) + ff2_b_ref[l]
        x = ln(x + h2, out_g_ref[l], out_b_ref[l])

    # ---- CLS pooling + classifier head (output padded to 128 lanes) --------
    cls = jnp.concatenate([x[b * SEQ:b * SEQ + 1, :] for b in range(BATCH)],
                          axis=0)                                 # (B, H)
    # dropout(p=0.3) -> identity in eval mode
    logits_ref[...] = mm(cls, fc_w_ref[...]) + fc_b_ref[...]      # (B, 128)


def fused_forward(x_emb, mask_bias, fp):
    args = (
        x_emb, mask_bias,
        fp["emb_ln_g"], fp["emb_ln_b"],
        fp["qkv_w"], fp["qkv_b"], fp["o_w"], fp["o_b"],
        fp["sa_ln_g"], fp["sa_ln_b"],
        fp["ff1_w"], fp["ff1_b"], fp["ff2_w"], fp["ff2_b"],
        fp["out_ln_g"], fp["out_ln_b"],
        fp["fc_w"], fp["fc_b"],
    )
    out = pl.pallas_call(
        _fused_forward_kernel,
        out_shape=jax.ShapeDtypeStruct((BATCH, CLS_PAD), jnp.float32),
        in_specs=[pl.BlockSpec(memory_space=pltpu.MemorySpace.VMEM)] * len(args),
        out_specs=pl.BlockSpec(memory_space=pltpu.MemorySpace.VMEM),
    )(*args)
    return out[:, :NUM_CLASSES]


# ----------------------------------------------------------------------------
# Model glue (plain JAX): embedding gather + call the fused kernel
# ----------------------------------------------------------------------------
@jax.jit
def emotion_classifier_forward(fp, input_ids, attention_mask):
    """Eval-mode forward. Returns (B, NUM_CLASSES) logits."""
    B, S = input_ids.shape
    x = (fp["word_emb"][input_ids]
         + fp["pos_emb"][jnp.arange(S)][None, :, :])              # (B, S, H)
    x = x.reshape(B * S, HIDDEN).astype(jnp.float32)
    mask_bias = jnp.where(attention_mask > 0, 0.0, -1e9).astype(jnp.float32)
    return fused_forward(x, mask_bias, fp)


# ----------------------------------------------------------------------------
# Deterministic parameter init + packing into fused-kernel layout
# ----------------------------------------------------------------------------
def init_params(key):
    def nrm(k, shape, scale=0.02):
        return (scale * jax.random.normal(k, shape)).astype(jnp.float32)

    keys = iter(jax.random.split(key, 8 + N_LAYERS * 16))
    params = {
        "word_emb": nrm(next(keys), (VOCAB_SIZE, HIDDEN)),
        "pos_emb": nrm(next(keys), (MAX_POS, HIDDEN)),
        "emb_ln_g": jnp.ones((HIDDEN,), jnp.float32),
        "emb_ln_b": jnp.zeros((HIDDEN,), jnp.float32),
        "fc_w": nrm(next(keys), (HIDDEN, NUM_CLASSES)),
        "fc_b": jnp.zeros((NUM_CLASSES,), jnp.float32),
        "layers": [],
    }
    for _ in range(N_LAYERS):
        lp = {
            "q_w": nrm(next(keys), (HIDDEN, HIDDEN)),
            "q_b": jnp.zeros((HIDDEN,), jnp.float32),
            "k_w": nrm(next(keys), (HIDDEN, HIDDEN)),
            "k_b": jnp.zeros((HIDDEN,), jnp.float32),
            "v_w": nrm(next(keys), (HIDDEN, HIDDEN)),
            "v_b": jnp.zeros((HIDDEN,), jnp.float32),
            "o_w": nrm(next(keys), (HIDDEN, HIDDEN)),
            "o_b": jnp.zeros((HIDDEN,), jnp.float32),
            "sa_ln_g": jnp.ones((HIDDEN,), jnp.float32),
            "sa_ln_b": jnp.zeros((HIDDEN,), jnp.float32),
            "ff1_w": nrm(next(keys), (HIDDEN, FFN_DIM)),
            "ff1_b": jnp.zeros((FFN_DIM,), jnp.float32),
            "ff2_w": nrm(next(keys), (FFN_DIM, HIDDEN)),
            "ff2_b": jnp.zeros((HIDDEN,), jnp.float32),
            "out_ln_g": jnp.ones((HIDDEN,), jnp.float32),
            "out_ln_b": jnp.zeros((HIDDEN,), jnp.float32),
        }
        params["layers"].append(lp)
    return params


def pack_params(params):
    """Pack per-layer params into stacked, lane-dense, bf16-weight arrays."""
    scale = 1.0 / math.sqrt(HEAD_DIM)

    def stack(fn):
        return jnp.stack([fn(lp) for lp in params["layers"]], axis=0)

    def qkv_w(lp):
        w = jnp.concatenate([lp["q_w"] * scale, lp["k_w"], lp["v_w"]], axis=1)
        return jnp.pad(w, ((0, 0), (0, QKV_PAD - 3 * HIDDEN))).astype(jnp.bfloat16)

    def qkv_b(lp):
        b = jnp.concatenate([lp["q_b"] * scale, lp["k_b"], lp["v_b"]])
        return jnp.pad(b, (0, QKV_PAD - 3 * HIDDEN)).reshape(1, QKV_PAD)

    return {
        "word_emb": params["word_emb"],
        "pos_emb": params["pos_emb"],
        "emb_ln_g": params["emb_ln_g"].reshape(1, HIDDEN),
        "emb_ln_b": params["emb_ln_b"].reshape(1, HIDDEN),
        "qkv_w": stack(qkv_w),                                    # (L, H, 128) bf16
        "qkv_b": stack(qkv_b),                                    # (L, 1, 128) f32
        "o_w": stack(lambda lp: lp["o_w"].astype(jnp.bfloat16)),  # (L, H, H)
        "o_b": stack(lambda lp: lp["o_b"].reshape(1, HIDDEN)),
        "sa_ln_g": stack(lambda lp: lp["sa_ln_g"].reshape(1, HIDDEN)),
        "sa_ln_b": stack(lambda lp: lp["sa_ln_b"].reshape(1, HIDDEN)),
        "ff1_w": stack(lambda lp: lp["ff1_w"].astype(jnp.bfloat16)),  # (L, H, 128)
        "ff1_b": stack(lambda lp: lp["ff1_b"].reshape(1, FFN_DIM)),
        "ff2_w": stack(lambda lp: lp["ff2_w"].astype(jnp.bfloat16)),  # (L, 128, H)
        "ff2_b": stack(lambda lp: lp["ff2_b"].reshape(1, HIDDEN)),
        "out_ln_g": stack(lambda lp: lp["out_ln_g"].reshape(1, HIDDEN)),
        "out_ln_b": stack(lambda lp: lp["out_ln_b"].reshape(1, HIDDEN)),
        "fc_w": jnp.pad(params["fc_w"],
                        ((0, 0), (0, CLS_PAD - NUM_CLASSES))).astype(jnp.bfloat16),
        "fc_b": jnp.pad(params["fc_b"], (0, CLS_PAD - NUM_CLASSES)).reshape(1, CLS_PAD),
    }


# ----------------------------------------------------------------------------
# Main
# ----------------------------------------------------------------------------
if __name__ == "__main__":
    root = jax.random.PRNGKey(0)
    k_param, k_ids = jax.random.split(root)

    params = init_params(k_param)
    fp = pack_params(params)

    input_ids = jax.random.randint(k_ids, (BATCH, SEQ), 0, VOCAB_SIZE, dtype=jnp.int32)
    # first sequence fully valid; second sequence has 3 padding positions
    attention_mask = jnp.array(
        [[1, 1, 1, 1, 1, 1, 1, 1],
         [1, 1, 1, 1, 1, 0, 0, 0]], dtype=jnp.int32)

    logits = emotion_classifier_forward(fp, input_ids, attention_mask)
    logits = jax.block_until_ready(logits)

    assert logits.shape == (BATCH, NUM_CLASSES)
    assert bool(jnp.all(jnp.isfinite(logits)))
    print("KERNEL_OK")
</pallas_src>

<mosaic_0001>
module attributes {stable_mosaic.version = 11 : i64} {
  func.func @_fused_forward_kernel(%arg0: memref<16x32xf32, #tpu.memory_space<vmem>>, %arg1: memref<2x8xf32, #tpu.memory_space<vmem>>, %arg2: memref<1x32xf32, #tpu.memory_space<vmem>>, %arg3: memref<1x32xf32, #tpu.memory_space<vmem>>, %arg4: memref<2x32x128xbf16, #tpu.memory_space<vmem>>, %arg5: memref<2x1x128xf32, #tpu.memory_space<vmem>>, %arg6: memref<2x32x32xbf16, #tpu.memory_space<vmem>>, %arg7: memref<2x1x32xf32, #tpu.memory_space<vmem>>, %arg8: memref<2x1x32xf32, #tpu.memory_space<vmem>>, %arg9: memref<2x1x32xf32, #tpu.memory_space<vmem>>, %arg10: memref<2x32x128xbf16, #tpu.memory_space<vmem>>, %arg11: memref<2x1x128xf32, #tpu.memory_space<vmem>>, %arg12: memref<2x128x32xbf16, #tpu.memory_space<vmem>>, %arg13: memref<2x1x32xf32, #tpu.memory_space<vmem>>, %arg14: memref<2x1x32xf32, #tpu.memory_space<vmem>>, %arg15: memref<2x1x32xf32, #tpu.memory_space<vmem>>, %arg16: memref<32x128xbf16, #tpu.memory_space<vmem>>, %arg17: memref<1x128xf32, #tpu.memory_space<vmem>>, %arg18: memref<2x128xf32, #tpu.memory_space<vmem>>) attributes {dimension_semantics = [], scalar_prefetch = 0 : i64, scratch_operands = 0 : i64, tpu.core_type = #tpu.core_type<tc>} {
    %c0 = arith.constant 0 : index
    %c0_0 = arith.constant 0 : index
    %0 = vector.load %arg0[%c0, %c0_0] : memref<16x32xf32, #tpu.memory_space<vmem>>, vector<16x32xf32>
    %c0_1 = arith.constant 0 : index
    %c0_2 = arith.constant 0 : index
    %1 = vector.load %arg2[%c0_1, %c0_2] : memref<1x32xf32, #tpu.memory_space<vmem>>, vector<1x32xf32>
    %c0_3 = arith.constant 0 : index
    %c0_4 = arith.constant 0 : index
    %2 = vector.load %arg3[%c0_3, %c0_4] : memref<1x32xf32, #tpu.memory_space<vmem>>, vector<1x32xf32>
    %cst = arith.constant dense<0.000000e+00> : vector<16xf32>
    %3 = vector.multi_reduction <add>, %0, %cst [1] : vector<16x32xf32> to vector<16xf32>
    %4 = vector.shape_cast %3 : vector<16xf32> to vector<16x1xf32>
    %cst_5 = arith.constant 3.200000e+01 : f32
    %5 = vector.broadcast %cst_5 : f32 to vector<16x1xf32>
    %6 = arith.divf %4, %5 : vector<16x1xf32>
    %7 = vector.broadcast %6 : vector<16x1xf32> to vector<16x32xf32>
    %8 = arith.subf %0, %7 : vector<16x32xf32>
    %9 = arith.mulf %8, %8 : vector<16x32xf32>
    %cst_6 = arith.constant dense<0.000000e+00> : vector<16xf32>
    %10 = vector.multi_reduction <add>, %9, %cst_6 [1] : vector<16x32xf32> to vector<16xf32>
    %11 = vector.shape_cast %10 : vector<16xf32> to vector<16x1xf32>
    %cst_7 = arith.constant 3.200000e+01 : f32
    %12 = vector.broadcast %cst_7 : f32 to vector<16x1xf32>
    %13 = arith.divf %11, %12 : vector<16x1xf32>
    %14 = vector.broadcast %6 : vector<16x1xf32> to vector<16x32xf32>
    %15 = arith.subf %0, %14 : vector<16x32xf32>
    %cst_8 = arith.constant 9.99999996E-13 : f32
    %16 = vector.broadcast %cst_8 : f32 to vector<16x1xf32>
    %17 = arith.addf %13, %16 : vector<16x1xf32>
    %18 = math.rsqrt %17 : vector<16x1xf32>
    %19 = vector.broadcast %18 : vector<16x1xf32> to vector<16x32xf32>
    %20 = arith.mulf %15, %19 : vector<16x32xf32>
    %21 = vector.broadcast %1 : vector<1x32xf32> to vector<16x32xf32>
    %22 = arith.mulf %20, %21 : vector<16x32xf32>
    %23 = vector.broadcast %2 : vector<1x32xf32> to vector<16x32xf32>
    %24 = arith.addf %22, %23 : vector<16x32xf32>
    %c0_9 = arith.constant 0 : index
    %c0_10 = arith.constant 0 : index
    %25 = vector.load %arg1[%c0_9, %c0_10] : memref<2x8xf32, #tpu.memory_space<vmem>>, vector<2x8xf32>
    %c0_11 = arith.constant 0 : index
    %c0_12 = arith.constant 0 : index
    %c0_13 = arith.constant 0 : index
    %26 = vector.load %arg4[%c0_11, %c0_12, %c0_13] : memref<2x32x128xbf16, #tpu.memory_space<vmem>>, vector<1x32x128xbf16>
    %27 = vector.shape_cast %26 : vector<1x32x128xbf16> to vector<32x128xbf16>
    %28 = arith.truncf %24 : vector<16x32xf32> to vector<16x32xbf16>
    %cst_14 = arith.constant dense<0.000000e+00> : vector<16x128xf32>
    %29 = tpu.matmul %28, %27, %cst_14 {dimension_numbers = #tpu.dot_dimension_numbers<[1], [0], [0], [1], [0, 0, 1, 1], [], []>} : vector<16x32xbf16>, vector<32x128xbf16>, vector<16x128xf32> -> vector<16x128xf32>
    %c0_15 = arith.constant 0 : index
    %c0_16 = arith.constant 0 : index
    %c0_17 = arith.constant 0 : index
    %30 = vector.load %arg5[%c0_15, %c0_16, %c0_17] : memref<2x1x128xf32, #tpu.memory_space<vmem>>, vector<1x1x128xf32>
    %31 = vector.shape_cast %30 : vector<1x1x128xf32> to vector<1x128xf32>
    %32 = vector.broadcast %31 : vector<1x128xf32> to vector<16x128xf32>
    %33 = arith.addf %29, %32 : vector<16x128xf32>
    %34 = vector.extract_strided_slice %33 {offsets = [0, 0], sizes = [16, 32], strides = [1, 1]} : vector<16x128xf32> to vector<16x32xf32>
    %35 = arith.truncf %34 : vector<16x32xf32> to vector<16x32xbf16>
    %36 = vector.extract_strided_slice %33 {offsets = [0, 32], sizes = [16, 32], strides = [1, 1]} : vector<16x128xf32> to vector<16x32xf32>
    %37 = arith.truncf %36 : vector<16x32xf32> to vector<16x32xbf16>
    %38 = vector.extract_strided_slice %33 {offsets = [0, 64], sizes = [16, 32], strides = [1, 1]} : vector<16x128xf32> to vector<16x32xf32>
    %39 = arith.truncf %38 : vector<16x32xf32> to vector<16x32xbf16>
    %40 = vector.extract_strided_slice %25 {offsets = [0, 0], sizes = [1, 8], strides = [1, 1]} : vector<2x8xf32> to vector<1x8xf32>
    %41 = vector.extract_strided_slice %35 {offsets = [0, 0], sizes = [8, 8], strides = [1, 1]} : vector<16x32xbf16> to vector<8x8xbf16>
    %42 = vector.extract_strided_slice %37 {offsets = [0, 0], sizes = [8, 8], strides = [1, 1]} : vector<16x32xbf16> to vector<8x8xbf16>
    %43 = vector.extract_strided_slice %39 {offsets = [0, 0], sizes = [8, 8], strides = [1, 1]} : vector<16x32xbf16> to vector<8x8xbf16>
    %cst_18 = arith.constant dense<0.000000e+00> : vector<8x8xf32>
    %44 = tpu.matmul %41, %42, %cst_18 {dimension_numbers = #tpu.dot_dimension_numbers<[1], [1], [0], [0], [0, 0, 1, 0], [], []>} : vector<8x8xbf16>, vector<8x8xbf16>, vector<8x8xf32> -> vector<8x8xf32>
    %45 = vector.broadcast %40 : vector<1x8xf32> to vector<8x8xf32>
    %46 = arith.addf %44, %45 : vector<8x8xf32>
    %cst_19 = arith.constant dense<0xFF800000> : vector<8xf32>
    %47 = vector.multi_reduction <maximumf>, %46, %cst_19 [1] : vector<8x8xf32> to vector<8xf32>
    %48 = vector.shape_cast %47 : vector<8xf32> to vector<8x1xf32>
    %49 = vector.broadcast %48 : vector<8x1xf32> to vector<8x8xf32>
    %50 = arith.subf %46, %49 : vector<8x8xf32>
    %51 = math.exp %50 : vector<8x8xf32>
    %cst_20 = arith.constant dense<0.000000e+00> : vector<8xf32>
    %52 = vector.multi_reduction <add>, %51, %cst_20 [1] : vector<8x8xf32> to vector<8xf32>
    %53 = vector.shape_cast %52 : vector<8xf32> to vector<8x1xf32>
    %54 = vector.broadcast %53 : vector<8x1xf32> to vector<8x8xf32>
    %55 = arith.divf %51, %54 : vector<8x8xf32>
    %56 = arith.truncf %55 : vector<8x8xf32> to vector<8x8xbf16>
    %cst_21 = arith.constant dense<0.000000e+00> : vector<8x8xf32>
    %57 = tpu.matmul %56, %43, %cst_21 {dimension_numbers = #tpu.dot_dimension_numbers<[1], [0], [0], [1], [0, 0, 1, 1], [], []>} : vector<8x8xbf16>, vector<8x8xbf16>, vector<8x8xf32> -> vector<8x8xf32>
    %58 = vector.extract_strided_slice %35 {offsets = [0, 8], sizes = [8, 8], strides = [1, 1]} : vector<16x32xbf16> to vector<8x8xbf16>
    %59 = vector.extract_strided_slice %37 {offsets = [0, 8], sizes = [8, 8], strides = [1, 1]} : vector<16x32xbf16> to vector<8x8xbf16>
    %60 = vector.extract_strided_slice %39 {offsets = [0, 8], sizes = [8, 8], strides = [1, 1]} : vector<16x32xbf16> to vector<8x8xbf16>
    %cst_22 = arith.constant dense<0.000000e+00> : vector<8x8xf32>
    %61 = tpu.matmul %58, %59, %cst_22 {dimension_numbers = #tpu.dot_dimension_numbers<[1], [1], [0], [0], [0, 0, 1, 0], [], []>} : vector<8x8xbf16>, vector<8x8xbf16>, vector<8x8xf32> -> vector<8x8xf32>
    %62 = vector.broadcast %40 : vector<1x8xf32> to vector<8x8xf32>
    %63 = arith.addf %61, %62 : vector<8x8xf32>
    %cst_23 = arith.constant dense<0xFF800000> : vector<8xf32>
    %64 = vector.multi_reduction <maximumf>, %63, %cst_23 [1] : vector<8x8xf32> to vector<8xf32>
    %65 = vector.shape_cast %64 : vector<8xf32> to vector<8x1xf32>
    %66 = vector.broadcast %65 : vector<8x1xf32> to vector<8x8xf32>
    %67 = arith.subf %63, %66 : vector<8x8xf32>
    %68 = math.exp %67 : vector<8x8xf32>
    %cst_24 = arith.constant dense<0.000000e+00> : vector<8xf32>
    %69 = vector.multi_reduction <add>, %68, %cst_24 [1] : vector<8x8xf32> to vector<8xf32>
    %70 = vector.shape_cast %69 : vector<8xf32> to vector<8x1xf32>
    %71 = vector.broadcast %70 : vector<8x1xf32> to vector<8x8xf32>
    %72 = arith.divf %68, %71 : vector<8x8xf32>
    %73 = arith.truncf %72 : vector<8x8xf32> to vector<8x8xbf16>
    %cst_25 = arith.constant dense<0.000000e+00> : vector<8x8xf32>
    %74 = tpu.matmul %73, %60, %cst_25 {dimension_numbers = #tpu.dot_dimension_numbers<[1], [0], [0], [1], [0, 0, 1, 1], [], []>} : vector<8x8xbf16>, vector<8x8xbf16>, vector<8x8xf32> -> vector<8x8xf32>
    %75 = vector.extract_strided_slice %35 {offsets = [0, 16], sizes = [8, 8], strides = [1, 1]} : vector<16x32xbf16> to vector<8x8xbf16>
    %76 = vector.extract_strided_slice %37 {offsets = [0, 16], sizes = [8, 8], strides = [1, 1]} : vector<16x32xbf16> to vector<8x8xbf16>
    %77 = vector.extract_strided_slice %39 {offsets = [0, 16], sizes = [8, 8], strides = [1, 1]} : vector<16x32xbf16> to vector<8x8xbf16>
    %cst_26 = arith.constant dense<0.000000e+00> : vector<8x8xf32>
    %78 = tpu.matmul %75, %76, %cst_26 {dimension_numbers = #tpu.dot_dimension_numbers<[1], [1], [0], [0], [0, 0, 1, 0], [], []>} : vector<8x8xbf16>, vector<8x8xbf16>, vector<8x8xf32> -> vector<8x8xf32>
    %79 = vector.broadcast %40 : vector<1x8xf32> to vector<8x8xf32>
    %80 = arith.addf %78, %79 : vector<8x8xf32>
    %cst_27 = arith.constant dense<0xFF800000> : vector<8xf32>
    %81 = vector.multi_reduction <maximumf>, %80, %cst_27 [1] : vector<8x8xf32> to vector<8xf32>
    %82 = vector.shape_cast %81 : vector<8xf32> to vector<8x1xf32>
    %83 = vector.broadcast %82 : vector<8x1xf32> to vector<8x8xf32>
    %84 = arith.subf %80, %83 : vector<8x8xf32>
    %85 = math.exp %84 : vector<8x8xf32>
    %cst_28 = arith.constant dense<0.000000e+00> : vector<8xf32>
    %86 = vector.multi_reduction <add>, %85, %cst_28 [1] : vector<8x8xf32> to vector<8xf32>
    %87 = vector.shape_cast %86 : vector<8xf32> to vector<8x1xf32>
    %88 = vector.broadcast %87 : vector<8x1xf32> to vector<8x8xf32>
    %89 = arith.divf %85, %88 : vector<8x8xf32>
    %90 = arith.truncf %89 : vector<8x8xf32> to vector<8x8xbf16>
    %cst_29 = arith.constant dense<0.000000e+00> : vector<8x8xf32>
    %91 = tpu.matmul %90, %77, %cst_29 {dimension_numbers = #tpu.dot_dimension_numbers<[1], [0], [0], [1], [0, 0, 1, 1], [], []>} : vector<8x8xbf16>, vector<8x8xbf16>, vector<8x8xf32> -> vector<8x8xf32>
    %92 = vector.extract_strided_slice %35 {offsets = [0, 24], sizes = [8, 8], strides = [1, 1]} : vector<16x32xbf16> to vector<8x8xbf16>
    %93 = vector.extract_strided_slice %37 {offsets = [0, 24], sizes = [8, 8], strides = [1, 1]} : vector<16x32xbf16> to vector<8x8xbf16>
    %94 = vector.extract_strided_slice %39 {offsets = [0, 24], sizes = [8, 8], strides = [1, 1]} : vector<16x32xbf16> to vector<8x8xbf16>
    %cst_30 = arith.constant dense<0.000000e+00> : vector<8x8xf32>
    %95 = tpu.matmul %92, %93, %cst_30 {dimension_numbers = #tpu.dot_dimension_numbers<[1], [1], [0], [0], [0, 0, 1, 0], [], []>} : vector<8x8xbf16>, vector<8x8xbf16>, vector<8x8xf32> -> vector<8x8xf32>
    %96 = vector.broadcast %40 : vector<1x8xf32> to vector<8x8xf32>
    %97 = arith.addf %95, %96 : vector<8x8xf32>
    %cst_31 = arith.constant dense<0xFF800000> : vector<8xf32>
    %98 = vector.multi_reduction <maximumf>, %97, %cst_31 [1] : vector<8x8xf32> to vector<8xf32>
    %99 = vector.shape_cast %98 : vector<8xf32> to vector<8x1xf32>
    %100 = vector.broadcast %99 : vector<8x1xf32> to vector<8x8xf32>
    %101 = arith.subf %97, %100 : vector<8x8xf32>
    %102 = math.exp %101 : vector<8x8xf32>
    %cst_32 = arith.constant dense<0.000000e+00> : vector<8xf32>
    %103 = vector.multi_reduction <add>, %102, %cst_32 [1] : vector<8x8xf32> to vector<8xf32>
    %104 = vector.shape_cast %103 : vector<8xf32> to vector<8x1xf32>
    %105 = vector.broadcast %104 : vector<8x1xf32> to vector<8x8xf32>
    %106 = arith.divf %102, %105 : vector<8x8xf32>
    %107 = arith.truncf %106 : vector<8x8xf32> to vector<8x8xbf16>
    %cst_33 = arith.constant dense<0.000000e+00> : vector<8x8xf32>
    %108 = tpu.matmul %107, %94, %cst_33 {dimension_numbers = #tpu.dot_dimension_numbers<[1], [0], [0], [1], [0, 0, 1, 1], [], []>} : vector<8x8xbf16>, vector<8x8xbf16>, vector<8x8xf32> -> vector<8x8xf32>
    %109 = tpu.concatenate %57, %74, %91, %108 in 1 : vector<8x8xf32>, vector<8x8xf32>, vector<8x8xf32>, vector<8x8xf32> -> vector<8x32xf32>
    %110 = vector.extract_strided_slice %25 {offsets = [1, 0], sizes = [1, 8], strides = [1, 1]} : vector<2x8xf32> to vector<1x8xf32>
    %111 = vector.extract_strided_slice %35 {offsets = [8, 0], sizes = [8, 8], strides = [1, 1]} : vector<16x32xbf16> to vector<8x8xbf16>
    %112 = vector.extract_strided_slice %37 {offsets = [8, 0], sizes = [8, 8], strides = [1, 1]} : vector<16x32xbf16> to vector<8x8xbf16>
    %113 = vector.extract_strided_slice %39 {offsets = [8, 0], sizes = [8, 8], strides = [1, 1]} : vector<16x32xbf16> to vector<8x8xbf16>
    %cst_34 = arith.constant dense<0.000000e+00> : vector<8x8xf32>
    %114 = tpu.matmul %111, %112, %cst_34 {dimension_numbers = #tpu.dot_dimension_numbers<[1], [1], [0], [0], [0, 0, 1, 0], [], []>} : vector<8x8xbf16>, vector<8x8xbf16>, vector<8x8xf32> -> vector<8x8xf32>
    %115 = vector.broadcast %110 : vector<1x8xf32> to vector<8x8xf32>
    %116 = arith.addf %114, %115 : vector<8x8xf32>
    %cst_35 = arith.constant dense<0xFF800000> : vector<8xf32>
    %117 = vector.multi_reduction <maximumf>, %116, %cst_35 [1] : vector<8x8xf32> to vector<8xf32>
    %118 = vector.shape_cast %117 : vector<8xf32> to vector<8x1xf32>
    %119 = vector.broadcast %118 : vector<8x1xf32> to vector<8x8xf32>
    %120 = arith.subf %116, %119 : vector<8x8xf32>
    %121 = math.exp %120 : vector<8x8xf32>
    %cst_36 = arith.constant dense<0.000000e+00> : vector<8xf32>
    %122 = vector.multi_reduction <add>, %121, %cst_36 [1] : vector<8x8xf32> to vector<8xf32>
    %123 = vector.shape_cast %122 : vector<8xf32> to vector<8x1xf32>
    %124 = vector.broadcast %123 : vector<8x1xf32> to vector<8x8xf32>
    %125 = arith.divf %121, %124 : vector<8x8xf32>
    %126 = arith.truncf %125 : vector<8x8xf32> to vector<8x8xbf16>
    %cst_37 = arith.constant dense<0.000000e+00> : vector<8x8xf32>
    %127 = tpu.matmul %126, %113, %cst_37 {dimension_numbers = #tpu.dot_dimension_numbers<[1], [0], [0], [1], [0, 0, 1, 1], [], []>} : vector<8x8xbf16>, vector<8x8xbf16>, vector<8x8xf32> -> vector<8x8xf32>
    %128 = vector.extract_strided_slice %35 {offsets = [8, 8], sizes = [8, 8], strides = [1, 1]} : vector<16x32xbf16> to vector<8x8xbf16>
    %129 = vector.extract_strided_slice %37 {offsets = [8, 8], sizes = [8, 8], strides = [1, 1]} : vector<16x32xbf16> to vector<8x8xbf16>
    %130 = vector.extract_strided_slice %39 {offsets = [8, 8], sizes = [8, 8], strides = [1, 1]} : vector<16x32xbf16> to vector<8x8xbf16>
    %cst_38 = arith.constant dense<0.000000e+00> : vector<8x8xf32>
    %131 = tpu.matmul %128, %129, %cst_38 {dimension_numbers = #tpu.dot_dimension_numbers<[1], [1], [0], [0], [0, 0, 1, 0], [], []>} : vector<8x8xbf16>, vector<8x8xbf16>, vector<8x8xf32> -> vector<8x8xf32>
    %132 = vector.broadcast %110 : vector<1x8xf32> to vector<8x8xf32>
    %133 = arith.addf %131, %132 : vector<8x8xf32>
    %cst_39 = arith.constant dense<0xFF800000> : vector<8xf32>
    %134 = vector.multi_reduction <maximumf>, %133, %cst_39 [1] : vector<8x8xf32> to vector<8xf32>
    %135 = vector.shape_cast %134 : vector<8xf32> to vector<8x1xf32>
    %136 = vector.broadcast %135 : vector<8x1xf32> to vector<8x8xf32>
    %137 = arith.subf %133, %136 : vector<8x8xf32>
    %138 = math.exp %137 : vector<8x8xf32>
    %cst_40 = arith.constant dense<0.000000e+00> : vector<8xf32>
    %139 = vector.multi_reduction <add>, %138, %cst_40 [1] : vector<8x8xf32> to vector<8xf32>
    %140 = vector.shape_cast %139 : vector<8xf32> to vector<8x1xf32>
    %141 = vector.broadcast %140 : vector<8x1xf32> to vector<8x8xf32>
    %142 = arith.divf %138, %141 : vector<8x8xf32>
    %143 = arith.truncf %142 : vector<8x8xf32> to vector<8x8xbf16>
    %cst_41 = arith.constant dense<0.000000e+00> : vector<8x8xf32>
    %144 = tpu.matmul %143, %130, %cst_41 {dimension_numbers = #tpu.dot_dimension_numbers<[1], [0], [0], [1], [0, 0, 1, 1], [], []>} : vector<8x8xbf16>, vector<8x8xbf16>, vector<8x8xf32> -> vector<8x8xf32>
    %145 = vector.extract_strided_slice %35 {offsets = [8, 16], sizes = [8, 8], strides = [1, 1]} : vector<16x32xbf16> to vector<8x8xbf16>
    %146 = vector.extract_strided_slice %37 {offsets = [8, 16], sizes = [8, 8], strides = [1, 1]} : vector<16x32xbf16> to vector<8x8xbf16>
    %147 = vector.extract_strided_slice %39 {offsets = [8, 16], sizes = [8, 8], strides = [1, 1]} : vector<16x32xbf16> to vector<8x8xbf16>
    %cst_42 = arith.constant dense<0.000000e+00> : vector<8x8xf32>
    %148 = tpu.matmul %145, %146, %cst_42 {dimension_numbers = #tpu.dot_dimension_numbers<[1], [1], [0], [0], [0, 0, 1, 0], [], []>} : vector<8x8xbf16>, vector<8x8xbf16>, vector<8x8xf32> -> vector<8x8xf32>
    %149 = vector.broadcast %110 : vector<1x8xf32> to vector<8x8xf32>
    %150 = arith.addf %148, %149 : vector<8x8xf32>
    %cst_43 = arith.constant dense<0xFF800000> : vector<8xf32>
    %151 = vector.multi_reduction <maximumf>, %150, %cst_43 [1] : vector<8x8xf32> to vector<8xf32>
    %152 = vector.shape_cast %151 : vector<8xf32> to vector<8x1xf32>
    %153 = vector.broadcast %152 : vector<8x1xf32> to vector<8x8xf32>
    %154 = arith.subf %150, %153 : vector<8x8xf32>
    %155 = math.exp %154 : vector<8x8xf32>
    %cst_44 = arith.constant dense<0.000000e+00> : vector<8xf32>
    %156 = vector.multi_reduction <add>, %155, %cst_44 [1] : vector<8x8xf32> to vector<8xf32>
    %157 = vector.shape_cast %156 : vector<8xf32> to vector<8x1xf32>
    %158 = vector.broadcast %157 : vector<8x1xf32> to vector<8x8xf32>
    %159 = arith.divf %155, %158 : vector<8x8xf32>
    %160 = arith.truncf %159 : vector<8x8xf32> to vector<8x8xbf16>
    %cst_45 = arith.constant dense<0.000000e+00> : vector<8x8xf32>
    %161 = tpu.matmul %160, %147, %cst_45 {dimension_numbers = #tpu.dot_dimension_numbers<[1], [0], [0], [1], [0, 0, 1, 1], [], []>} : vector<8x8xbf16>, vector<8x8xbf16>, vector<8x8xf32> -> vector<8x8xf32>
    %162 = vector.extract_strided_slice %35 {offsets = [8, 24], sizes = [8, 8], strides = [1, 1]} : vector<16x32xbf16> to vector<8x8xbf16>
    %163 = vector.extract_strided_slice %37 {offsets = [8, 24], sizes = [8, 8], strides = [1, 1]} : vector<16x32xbf16> to vector<8x8xbf16>
    %164 = vector.extract_strided_slice %39 {offsets = [8, 24], sizes = [8, 8], strides = [1, 1]} : vector<16x32xbf16> to vector<8x8xbf16>
    %cst_46 = arith.constant dense<0.000000e+00> : vector<8x8xf32>
    %165 = tpu.matmul %162, %163, %cst_46 {dimension_numbers = #tpu.dot_dimension_numbers<[1], [1], [0], [0], [0, 0, 1, 0], [], []>} : vector<8x8xbf16>, vector<8x8xbf16>, vector<8x8xf32> -> vector<8x8xf32>
    %166 = vector.broadcast %110 : vector<1x8xf32> to vector<8x8xf32>
    %167 = arith.addf %165, %166 : vector<8x8xf32>
    %cst_47 = arith.constant dense<0xFF800000> : vector<8xf32>
    %168 = vector.multi_reduction <maximumf>, %167, %cst_47 [1] : vector<8x8xf32> to vector<8xf32>
    %169 = vector.shape_cast %168 : vector<8xf32> to vector<8x1xf32>
    %170 = vector.broadcast %169 : vector<8x1xf32> to vector<8x8xf32>
    %171 = arith.subf %167, %170 : vector<8x8xf32>
    %172 = math.exp %171 : vector<8x8xf32>
    %cst_48 = arith.constant dense<0.000000e+00> : vector<8xf32>
    %173 = vector.multi_reduction <add>, %172, %cst_48 [1] : vector<8x8xf32> to vector<8xf32>
    %174 = vector.shape_cast %173 : vector<8xf32> to vector<8x1xf32>
    %175 = vector.broadcast %174 : vector<8x1xf32> to vector<8x8xf32>
    %176 = arith.divf %172, %175 : vector<8x8xf32>
    %177 = arith.truncf %176 : vector<8x8xf32> to vector<8x8xbf16>
    %cst_49 = arith.constant dense<0.000000e+00> : vector<8x8xf32>
    %178 = tpu.matmul %177, %164, %cst_49 {dimension_numbers = #tpu.dot_dimension_numbers<[1], [0], [0], [1], [0, 0, 1, 1], [], []>} : vector<8x8xbf16>, vector<8x8xbf16>, vector<8x8xf32> -> vector<8x8xf32>
    %179 = tpu.concatenate %127, %144, %161, %178 in 1 : vector<8x8xf32>, vector<8x8xf32>, vector<8x8xf32>, vector<8x8xf32> -> vector<8x32xf32>
    %180 = tpu.concatenate %109, %179 in 0 : vector<8x32xf32>, vector<8x32xf32> -> vector<16x32xf32>
    %c0_50 = arith.constant 0 : index
    %c0_51 = arith.constant 0 : index
    %c0_52 = arith.constant 0 : index
    %181 = vector.load %arg6[%c0_50, %c0_51, %c0_52] : memref<2x32x32xbf16, #tpu.memory_space<vmem>>, vector<1x32x32xbf16>
    %182 = vector.shape_cast %181 : vector<1x32x32xbf16> to vector<32x32xbf16>
    %183 = arith.truncf %180 : vector<16x32xf32> to vector<16x32xbf16>
    %cst_53 = arith.constant dense<0.000000e+00> : vector<16x32xf32>
    %184 = tpu.matmul %183, %182, %cst_53 {dimension_numbers = #tpu.dot_dimension_numbers<[1], [0], [0], [1], [0, 0, 1, 1], [], []>} : vector<16x32xbf16>, vector<32x32xbf16>, vector<16x32xf32> -> vector<16x32xf32>
    %c0_54 = arith.constant 0 : index
    %c0_55 = arith.constant 0 : index
    %c0_56 = arith.constant 0 : index
    %185 = vector.load %arg7[%c0_54, %c0_55, %c0_56] : memref<2x1x32xf32, #tpu.memory_space<vmem>>, vector<1x1x32xf32>
    %186 = vector.shape_cast %185 : vector<1x1x32xf32> to vector<1x32xf32>
    %187 = vector.broadcast %186 : vector<1x32xf32> to vector<16x32xf32>
    %188 = arith.addf %184, %187 : vector<16x32xf32>
    %189 = arith.addf %24, %188 : vector<16x32xf32>
    %c0_57 = arith.constant 0 : index
    %c0_58 = arith.constant 0 : index
    %c0_59 = arith.constant 0 : index
    %190 = vector.load %arg8[%c0_57, %c0_58, %c0_59] : memref<2x1x32xf32, #tpu.memory_space<vmem>>, vector<1x1x32xf32>
    %191 = vector.shape_cast %190 : vector<1x1x32xf32> to vector<1x32xf32>
    %c0_60 = arith.constant 0 : index
    %c0_61 = arith.constant 0 : index
    %c0_62 = arith.constant 0 : index
    %192 = vector.load %arg9[%c0_60, %c0_61, %c0_62] : memref<2x1x32xf32, #tpu.memory_space<vmem>>, vector<1x1x32xf32>
    %193 = vector.shape_cast %192 : vector<1x1x32xf32> to vector<1x32xf32>
    %cst_63 = arith.constant dense<0.000000e+00> : vector<16xf32>
    %194 = vector.multi_reduction <add>, %189, %cst_63 [1] : vector<16x32xf32> to vector<16xf32>
    %195 = vector.shape_cast %194 : vector<16xf32> to vector<16x1xf32>
    %cst_64 = arith.constant 3.200000e+01 : f32
    %196 = vector.broadcast %cst_64 : f32 to vector<16x1xf32>
    %197 = arith.divf %195, %196 : vector<16x1xf32>
    %198 = vector.broadcast %197 : vector<16x1xf32> to vector<16x32xf32>
    %199 = arith.subf %189, %198 : vector<16x32xf32>
    %200 = arith.mulf %199, %199 : vector<16x32xf32>
    %cst_65 = arith.constant dense<0.000000e+00> : vector<16xf32>
    %201 = vector.multi_reduction <add>, %200, %cst_65 [1] : vector<16x32xf32> to vector<16xf32>
    %202 = vector.shape_cast %201 : vector<16xf32> to vector<16x1xf32>
    %cst_66 = arith.constant 3.200000e+01 : f32
    %203 = vector.broadcast %cst_66 : f32 to vector<16x1xf32>
    %204 = arith.divf %202, %203 : vector<16x1xf32>
    %205 = vector.broadcast %197 : vector<16x1xf32> to vector<16x32xf32>
    %206 = arith.subf %189, %205 : vector<16x32xf32>
    %cst_67 = arith.constant 9.99999996E-13 : f32
    %207 = vector.broadcast %cst_67 : f32 to vector<16x1xf32>
    %208 = arith.addf %204, %207 : vector<16x1xf32>
    %209 = math.rsqrt %208 : vector<16x1xf32>
    %210 = vector.broadcast %209 : vector<16x1xf32> to vector<16x32xf32>
    %211 = arith.mulf %206, %210 : vector<16x32xf32>
    %212 = vector.broadcast %191 : vector<1x32xf32> to vector<16x32xf32>
    %213 = arith.mulf %211, %212 : vector<16x32xf32>
    %214 = vector.broadcast %193 : vector<1x32xf32> to vector<16x32xf32>
    %215 = arith.addf %213, %214 : vector<16x32xf32>
    %c0_68 = arith.constant 0 : index
    %c0_69 = arith.constant 0 : index
    %c0_70 = arith.constant 0 : index
    %216 = vector.load %arg10[%c0_68, %c0_69, %c0_70] : memref<2x32x128xbf16, #tpu.memory_space<vmem>>, vector<1x32x128xbf16>
    %217 = vector.shape_cast %216 : vector<1x32x128xbf16> to vector<32x128xbf16>
    %218 = arith.truncf %215 : vector<16x32xf32> to vector<16x32xbf16>
    %cst_71 = arith.constant dense<0.000000e+00> : vector<16x128xf32>
    %219 = tpu.matmul %218, %217, %cst_71 {dimension_numbers = #tpu.dot_dimension_numbers<[1], [0], [0], [1], [0, 0, 1, 1], [], []>} : vector<16x32xbf16>, vector<32x128xbf16>, vector<16x128xf32> -> vector<16x128xf32>
    %c0_72 = arith.constant 0 : index
    %c0_73 = arith.constant 0 : index
    %c0_74 = arith.constant 0 : index
    %220 = vector.load %arg11[%c0_72, %c0_73, %c0_74] : memref<2x1x128xf32, #tpu.memory_space<vmem>>, vector<1x1x128xf32>
    %221 = vector.shape_cast %220 : vector<1x1x128xf32> to vector<1x128xf32>
    %222 = vector.broadcast %221 : vector<1x128xf32> to vector<16x128xf32>
    %223 = arith.addf %219, %222 : vector<16x128xf32>
    %cst_75 = arith.constant 5.000000e-01 : f32
    %224 = vector.broadcast %cst_75 : f32 to vector<16x128xf32>
    %225 = arith.mulf %224, %223 : vector<16x128xf32>
    %cst_76 = arith.constant 4.471500e-02 : f32
    %226 = vector.broadcast %cst_76 : f32 to vector<16x128xf32>
    %227 = arith.mulf %226, %223 : vector<16x128xf32>
    %228 = arith.mulf %227, %223 : vector<16x128xf32>
    %229 = arith.mulf %228, %223 : vector<16x128xf32>
    %230 = arith.addf %223, %229 : vector<16x128xf32>
    %cst_77 = arith.constant 0.797884583 : f32
    %231 = vector.broadcast %cst_77 : f32 to vector<16x128xf32>
    %232 = arith.mulf %231, %230 : vector<16x128xf32>
    %233 = math.tanh %232 : vector<16x128xf32>
    %cst_78 = arith.constant 1.000000e+00 : f32
    %234 = vector.broadcast %cst_78 : f32 to vector<16x128xf32>
    %235 = arith.addf %234, %233 : vector<16x128xf32>
    %236 = arith.mulf %225, %235 : vector<16x128xf32>
    %c0_79 = arith.constant 0 : index
    %c0_80 = arith.constant 0 : index
    %c0_81 = arith.constant 0 : index
    %237 = vector.load %arg12[%c0_79, %c0_80, %c0_81] : memref<2x128x32xbf16, #tpu.memory_space<vmem>>, vector<1x128x32xbf16>
    %238 = vector.shape_cast %237 : vector<1x128x32xbf16> to vector<128x32xbf16>
    %239 = arith.truncf %236 : vector<16x128xf32> to vector<16x128xbf16>
    %cst_82 = arith.constant dense<0.000000e+00> : vector<16x32xf32>
    %240 = tpu.matmul %239, %238, %cst_82 {dimension_numbers = #tpu.dot_dimension_numbers<[1], [0], [0], [1], [0, 0, 1, 1], [], []>} : vector<16x128xbf16>, vector<128x32xbf16>, vector<16x32xf32> -> vector<16x32xf32>
    %c0_83 = arith.constant 0 : index
    %c0_84 = arith.constant 0 : index
    %c0_85 = arith.constant 0 : index
    %241 = vector.load %arg13[%c0_83, %c0_84, %c0_85] : memref<2x1x32xf32, #tpu.memory_space<vmem>>, vector<1x1x32xf32>
    %242 = vector.shape_cast %241 : vector<1x1x32xf32> to vector<1x32xf32>
    %243 = vector.broadcast %242 : vector<1x32xf32> to vector<16x32xf32>
    %244 = arith.addf %240, %243 : vector<16x32xf32>
    %245 = arith.addf %215, %244 : vector<16x32xf32>
    %c0_86 = arith.constant 0 : index
    %c0_87 = arith.constant 0 : index
    %c0_88 = arith.constant 0 : index
    %246 = vector.load %arg14[%c0_86, %c0_87, %c0_88] : memref<2x1x32xf32, #tpu.memory_space<vmem>>, vector<1x1x32xf32>
    %247 = vector.shape_cast %246 : vector<1x1x32xf32> to vector<1x32xf32>
    %c0_89 = arith.constant 0 : index
    %c0_90 = arith.constant 0 : index
    %c0_91 = arith.constant 0 : index
    %248 = vector.load %arg15[%c0_89, %c0_90, %c0_91] : memref<2x1x32xf32, #tpu.memory_space<vmem>>, vector<1x1x32xf32>
    %249 = vector.shape_cast %248 : vector<1x1x32xf32> to vector<1x32xf32>
    %cst_92 = arith.constant dense<0.000000e+00> : vector<16xf32>
    %250 = vector.multi_reduction <add>, %245, %cst_92 [1] : vector<16x32xf32> to vector<16xf32>
    %251 = vector.shape_cast %250 : vector<16xf32> to vector<16x1xf32>
    %cst_93 = arith.constant 3.200000e+01 : f32
    %252 = vector.broadcast %cst_93 : f32 to vector<16x1xf32>
    %253 = arith.divf %251, %252 : vector<16x1xf32>
    %254 = vector.broadcast %253 : vector<16x1xf32> to vector<16x32xf32>
    %255 = arith.subf %245, %254 : vector<16x32xf32>
    %256 = arith.mulf %255, %255 : vector<16x32xf32>
    %cst_94 = arith.constant dense<0.000000e+00> : vector<16xf32>
    %257 = vector.multi_reduction <add>, %256, %cst_94 [1] : vector<16x32xf32> to vector<16xf32>
    %258 = vector.shape_cast %257 : vector<16xf32> to vector<16x1xf32>
    %cst_95 = arith.constant 3.200000e+01 : f32
    %259 = vector.broadcast %cst_95 : f32 to vector<16x1xf32>
    %260 = arith.divf %258, %259 : vector<16x1xf32>
    %261 = vector.broadcast %253 : vector<16x1xf32> to vector<16x32xf32>
    %262 = arith.subf %245, %261 : vector<16x32xf32>
    %cst_96 = arith.constant 9.99999996E-13 : f32
    %263 = vector.broadcast %cst_96 : f32 to vector<16x1xf32>
    %264 = arith.addf %260, %263 : vector<16x1xf32>
    %265 = math.rsqrt %264 : vector<16x1xf32>
    %266 = vector.broadcast %265 : vector<16x1xf32> to vector<16x32xf32>
    %267 = arith.mulf %262, %266 : vector<16x32xf32>
    %268 = vector.broadcast %247 : vector<1x32xf32> to vector<16x32xf32>
    %269 = arith.mulf %267, %268 : vector<16x32xf32>
    %270 = vector.broadcast %249 : vector<1x32xf32> to vector<16x32xf32>
    %271 = arith.addf %269, %270 : vector<16x32xf32>
    %c1 = arith.constant 1 : index
    %c0_97 = arith.constant 0 : index
    %c0_98 = arith.constant 0 : index
    %272 = vector.load %arg4[%c1, %c0_97, %c0_98] : memref<2x32x128xbf16, #tpu.memory_space<vmem>>, vector<1x32x128xbf16>
    %273 = vector.shape_cast %272 : vector<1x32x128xbf16> to vector<32x128xbf16>
    %274 = arith.truncf %271 : vector<16x32xf32> to vector<16x32xbf16>
    %cst_99 = arith.constant dense<0.000000e+00> : vector<16x128xf32>
    %275 = tpu.matmul %274, %273, %cst_99 {dimension_numbers = #tpu.dot_dimension_numbers<[1], [0], [0], [1], [0, 0, 1, 1], [], []>} : vector<16x32xbf16>, vector<32x128xbf16>, vector<16x128xf32> -> vector<16x128xf32>
    %c1_100 = arith.constant 1 : index
    %c0_101 = arith.constant 0 : index
    %c0_102 = arith.constant 0 : index
    %276 = vector.load %arg5[%c1_100, %c0_101, %c0_102] : memref<2x1x128xf32, #tpu.memory_space<vmem>>, vector<1x1x128xf32>
    %277 = vector.shape_cast %276 : vector<1x1x128xf32> to vector<1x128xf32>
    %278 = vector.broadcast %277 : vector<1x128xf32> to vector<16x128xf32>
    %279 = arith.addf %275, %278 : vector<16x128xf32>
    %280 = vector.extract_strided_slice %279 {offsets = [0, 0], sizes = [16, 32], strides = [1, 1]} : vector<16x128xf32> to vector<16x32xf32>
    %281 = arith.truncf %280 : vector<16x32xf32> to vector<16x32xbf16>
    %282 = vector.extract_strided_slice %279 {offsets = [0, 32], sizes = [16, 32], strides = [1, 1]} : vector<16x128xf32> to vector<16x32xf32>
    %283 = arith.truncf %282 : vector<16x32xf32> to vector<16x32xbf16>
    %284 = vector.extract_strided_slice %279 {offsets = [0, 64], sizes = [16, 32], strides = [1, 1]} : vector<16x128xf32> to vector<16x32xf32>
    %285 = arith.truncf %284 : vector<16x32xf32> to vector<16x32xbf16>
    %286 = vector.extract_strided_slice %25 {offsets = [0, 0], sizes = [1, 8], strides = [1, 1]} : vector<2x8xf32> to vector<1x8xf32>
    %287 = vector.extract_strided_slice %281 {offsets = [0, 0], sizes = [8, 8], strides = [1, 1]} : vector<16x32xbf16> to vector<8x8xbf16>
    %288 = vector.extract_strided_slice %283 {offsets = [0, 0], sizes = [8, 8], strides = [1, 1]} : vector<16x32xbf16> to vector<8x8xbf16>
    %289 = vector.extract_strided_slice %285 {offsets = [0, 0], sizes = [8, 8], strides = [1, 1]} : vector<16x32xbf16> to vector<8x8xbf16>
    %cst_103 = arith.constant dense<0.000000e+00> : vector<8x8xf32>
    %290 = tpu.matmul %287, %288, %cst_103 {dimension_numbers = #tpu.dot_dimension_numbers<[1], [1], [0], [0], [0, 0, 1, 0], [], []>} : vector<8x8xbf16>, vector<8x8xbf16>, vector<8x8xf32> -> vector<8x8xf32>
    %291 = vector.broadcast %286 : vector<1x8xf32> to vector<8x8xf32>
    %292 = arith.addf %290, %291 : vector<8x8xf32>
    %cst_104 = arith.constant dense<0xFF800000> : vector<8xf32>
    %293 = vector.multi_reduction <maximumf>, %292, %cst_104 [1] : vector<8x8xf32> to vector<8xf32>
    %294 = vector.shape_cast %293 : vector<8xf32> to vector<8x1xf32>
    %295 = vector.broadcast %294 : vector<8x1xf32> to vector<8x8xf32>
    %296 = arith.subf %292, %295 : vector<8x8xf32>
    %297 = math.exp %296 : vector<8x8xf32>
    %cst_105 = arith.constant dense<0.000000e+00> : vector<8xf32>
    %298 = vector.multi_reduction <add>, %297, %cst_105 [1] : vector<8x8xf32> to vector<8xf32>
    %299 = vector.shape_cast %298 : vector<8xf32> to vector<8x1xf32>
    %300 = vector.broadcast %299 : vector<8x1xf32> to vector<8x8xf32>
    %301 = arith.divf %297, %300 : vector<8x8xf32>
    %302 = arith.truncf %301 : vector<8x8xf32> to vector<8x8xbf16>
    %cst_106 = arith.constant dense<0.000000e+00> : vector<8x8xf32>
    %303 = tpu.matmul %302, %289, %cst_106 {dimension_numbers = #tpu.dot_dimension_numbers<[1], [0], [0], [1], [0, 0, 1, 1], [], []>} : vector<8x8xbf16>, vector<8x8xbf16>, vector<8x8xf32> -> vector<8x8xf32>
    %304 = vector.extract_strided_slice %281 {offsets = [0, 8], sizes = [8, 8], strides = [1, 1]} : vector<16x32xbf16> to vector<8x8xbf16>
    %305 = vector.extract_strided_slice %283 {offsets = [0, 8], sizes = [8, 8], strides = [1, 1]} : vector<16x32xbf16> to vector<8x8xbf16>
    %306 = vector.extract_strided_slice %285 {offsets = [0, 8], sizes = [8, 8], strides = [1, 1]} : vector<16x32xbf16> to vector<8x8xbf16>
    %cst_107 = arith.constant dense<0.000000e+00> : vector<8x8xf32>
    %307 = tpu.matmul %304, %305, %cst_107 {dimension_numbers = #tpu.dot_dimension_numbers<[1], [1], [0], [0], [0, 0, 1, 0], [], []>} : vector<8x8xbf16>, vector<8x8xbf16>, vector<8x8xf32> -> vector<8x8xf32>
    %308 = vector.broadcast %286 : vector<1x8xf32> to vector<8x8xf32>
    %309 = arith.addf %307, %308 : vector<8x8xf32>
    %cst_108 = arith.constant dense<0xFF800000> : vector<8xf32>
    %310 = vector.multi_reduction <maximumf>, %309, %cst_108 [1] : vector<8x8xf32> to vector<8xf32>
    %311 = vector.shape_cast %310 : vector<8xf32> to vector<8x1xf32>
    %312 = vector.broadcast %311 : vector<8x1xf32> to vector<8x8xf32>
    %313 = arith.subf %309, %312 : vector<8x8xf32>
    %314 = math.exp %313 : vector<8x8xf32>
    %cst_109 = arith.constant dense<0.000000e+00> : vector<8xf32>
    %315 = vector.multi_reduction <add>, %314, %cst_109 [1] : vector<8x8xf32> to vector<8xf32>
    %316 = vector.shape_cast %315 : vector<8xf32> to vector<8x1xf32>
    %317 = vector.broadcast %316 : vector<8x1xf32> to vector<8x8xf32>
    %318 = arith.divf %314, %317 : vector<8x8xf32>
    %319 = arith.truncf %318 : vector<8x8xf32> to vector<8x8xbf16>
    %cst_110 = arith.constant dense<0.000000e+00> : vector<8x8xf32>
    %320 = tpu.matmul %319, %306, %cst_110 {dimension_numbers = #tpu.dot_dimension_numbers<[1], [0], [0], [1], [0, 0, 1, 1], [], []>} : vector<8x8xbf16>, vector<8x8xbf16>, vector<8x8xf32> -> vector<8x8xf32>
    %321 = vector.extract_strided_slice %281 {offsets = [0, 16], sizes = [8, 8], strides = [1, 1]} : vector<16x32xbf16> to vector<8x8xbf16>
    %322 = vector.extract_strided_slice %283 {offsets = [0, 16], sizes = [8, 8], strides = [1, 1]} : vector<16x32xbf16> to vector<8x8xbf16>
    %323 = vector.extract_strided_slice %285 {offsets = [0, 16], sizes = [8, 8], strides = [1, 1]} : vector<16x32xbf16> to vector<8x8xbf16>
    %cst_111 = arith.constant dense<0.000000e+00> : vector<8x8xf32>
    %324 = tpu.matmul %321, %322, %cst_111 {dimension_numbers = #tpu.dot_dimension_numbers<[1], [1], [0], [0], [0, 0, 1, 0], [], []>} : vector<8x8xbf16>, vector<8x8xbf16>, vector<8x8xf32> -> vector<8x8xf32>
    %325 = vector.broadcast %286 : vector<1x8xf32> to vector<8x8xf32>
    %326 = arith.addf %324, %325 : vector<8x8xf32>
    %cst_112 = arith.constant dense<0xFF800000> : vector<8xf32>
    %327 = vector.multi_reduction <maximumf>, %326, %cst_112 [1] : vector<8x8xf32> to vector<8xf32>
    %328 = vector.shape_cast %327 : vector<8xf32> to vector<8x1xf32>
    %329 = vector.broadcast %328 : vector<8x1xf32> to vector<8x8xf32>
    %330 = arith.subf %326, %329 : vector<8x8xf32>
    %331 = math.exp %330 : vector<8x8xf32>
    %cst_113 = arith.constant dense<0.000000e+00> : vector<8xf32>
    %332 = vector.multi_reduction <add>, %331, %cst_113 [1] : vector<8x8xf32> to vector<8xf32>
    %333 = vector.shape_cast %332 : vector<8xf32> to vector<8x1xf32>
    %334 = vector.broadcast %333 : vector<8x1xf32> to vector<8x8xf32>
    %335 = arith.divf %331, %334 : vector<8x8xf32>
    %336 = arith.truncf %335 : vector<8x8xf32> to vector<8x8xbf16>
    %cst_114 = arith.constant dense<0.000000e+00> : vector<8x8xf32>
    %337 = tpu.matmul %336, %323, %cst_114 {dimension_numbers = #tpu.dot_dimension_numbers<[1], [0], [0], [1], [0, 0, 1, 1], [], []>} : vector<8x8xbf16>, vector<8x8xbf16>, vector<8x8xf32> -> vector<8x8xf32>
    %338 = vector.extract_strided_slice %281 {offsets = [0, 24], sizes = [8, 8], strides = [1, 1]} : vector<16x32xbf16> to vector<8x8xbf16>
    %339 = vector.extract_strided_slice %283 {offsets = [0, 24], sizes = [8, 8], strides = [1, 1]} : vector<16x32xbf16> to vector<8x8xbf16>
    %340 = vector.extract_strided_slice %285 {offsets = [0, 24], sizes = [8, 8], strides = [1, 1]} : vector<16x32xbf16> to vector<8x8xbf16>
    %cst_115 = arith.constant dense<0.000000e+00> : vector<8x8xf32>
    %341 = tpu.matmul %338, %339, %cst_115 {dimension_numbers = #tpu.dot_dimension_numbers<[1], [1], [0], [0], [0, 0, 1, 0], [], []>} : vector<8x8xbf16>, vector<8x8xbf16>, vector<8x8xf32> -> vector<8x8xf32>
    %342 = vector.broadcast %286 : vector<1x8xf32> to vector<8x8xf32>
    %343 = arith.addf %341, %342 : vector<8x8xf32>
    %cst_116 = arith.constant dense<0xFF800000> : vector<8xf32>
    %344 = vector.multi_reduction <maximumf>, %343, %cst_116 [1] : vector<8x8xf32> to vector<8xf32>
    %345 = vector.shape_cast %344 : vector<8xf32> to vector<8x1xf32>
    %346 = vector.broadcast %345 : vector<8x1xf32> to vector<8x8xf32>
    %347 = arith.subf %343, %346 : vector<8x8xf32>
    %348 = math.exp %347 : vector<8x8xf32>
    %cst_117 = arith.constant dense<0.000000e+00> : vector<8xf32>
    %349 = vector.multi_reduction <add>, %348, %cst_117 [1] : vector<8x8xf32> to vector<8xf32>
    %350 = vector.shape_cast %349 : vector<8xf32> to vector<8x1xf32>
    %351 = vector.broadcast %350 : vector<8x1xf32> to vector<8x8xf32>
    %352 = arith.divf %348, %351 : vector<8x8xf32>
    %353 = arith.truncf %352 : vector<8x8xf32> to vector<8x8xbf16>
    %cst_118 = arith.constant dense<0.000000e+00> : vector<8x8xf32>
    %354 = tpu.matmul %353, %340, %cst_118 {dimension_numbers = #tpu.dot_dimension_numbers<[1], [0], [0], [1], [0, 0, 1, 1], [], []>} : vector<8x8xbf16>, vector<8x8xbf16>, vector<8x8xf32> -> vector<8x8xf32>
    %355 = tpu.concatenate %303, %320, %337, %354 in 1 : vector<8x8xf32>, vector<8x8xf32>, vector<8x8xf32>, vector<8x8xf32> -> vector<8x32xf32>
    %356 = vector.extract_strided_slice %25 {offsets = [1, 0], sizes = [1, 8], strides = [1, 1]} : vector<2x8xf32> to vector<1x8xf32>
    %357 = vector.extract_strided_slice %281 {offsets = [8, 0], sizes = [8, 8], strides = [1, 1]} : vector<16x32xbf16> to vector<8x8xbf16>
    %358 = vector.extract_strided_slice %283 {offsets = [8, 0], sizes = [8, 8], strides = [1, 1]} : vector<16x32xbf16> to vector<8x8xbf16>
    %359 = vector.extract_strided_slice %285 {offsets = [8, 0], sizes = [8, 8], strides = [1, 1]} : vector<16x32xbf16> to vector<8x8xbf16>
    %cst_119 = arith.constant dense<0.000000e+00> : vector<8x8xf32>
    %360 = tpu.matmul %357, %358, %cst_119 {dimension_numbers = #tpu.dot_dimension_numbers<[1], [1], [0], [0], [0, 0, 1, 0], [], []>} : vector<8x8xbf16>, vector<8x8xbf16>, vector<8x8xf32> -> vector<8x8xf32>
    %361 = vector.broadcast %356 : vector<1x8xf32> to vector<8x8xf32>
    %362 = arith.addf %360, %361 : vector<8x8xf32>
    %cst_120 = arith.constant dense<0xFF800000> : vector<8xf32>
    %363 = vector.multi_reduction <maximumf>, %362, %cst_120 [1] : vector<8x8xf32> to vector<8xf32>
    %364 = vector.shape_cast %363 : vector<8xf32> to vector<8x1xf32>
    %365 = vector.broadcast %364 : vector<8x1xf32> to vector<8x8xf32>
    %366 = arith.subf %362, %365 : vector<8x8xf32>
    %367 = math.exp %366 : vector<8x8xf32>
    %cst_121 = arith.constant dense<0.000000e+00> : vector<8xf32>
    %368 = vector.multi_reduction <add>, %367, %cst_121 [1] : vector<8x8xf32> to vector<8xf32>
    %369 = vector.shape_cast %368 : vector<8xf32> to vector<8x1xf32>
    %370 = vector.broadcast %369 : vector<8x1xf32> to vector<8x8xf32>
    %371 = arith.divf %367, %370 : vector<8x8xf32>
    %372 = arith.truncf %371 : vector<8x8xf32> to vector<8x8xbf16>
    %cst_122 = arith.constant dense<0.000000e+00> : vector<8x8xf32>
    %373 = tpu.matmul %372, %359, %cst_122 {dimension_numbers = #tpu.dot_dimension_numbers<[1], [0], [0], [1], [0, 0, 1, 1], [], []>} : vector<8x8xbf16>, vector<8x8xbf16>, vector<8x8xf32> -> vector<8x8xf32>
    %374 = vector.extract_strided_slice %281 {offsets = [8, 8], sizes = [8, 8], strides = [1, 1]} : vector<16x32xbf16> to vector<8x8xbf16>
    %375 = vector.extract_strided_slice %283 {offsets = [8, 8], sizes = [8, 8], strides = [1, 1]} : vector<16x32xbf16> to vector<8x8xbf16>
    %376 = vector.extract_strided_slice %285 {offsets = [8, 8], sizes = [8, 8], strides = [1, 1]} : vector<16x32xbf16> to vector<8x8xbf16>
    %cst_123 = arith.constant dense<0.000000e+00> : vector<8x8xf32>
    %377 = tpu.matmul %374, %375, %cst_123 {dimension_numbers = #tpu.dot_dimension_numbers<[1], [1], [0], [0], [0, 0, 1, 0], [], []>} : vector<8x8xbf16>, vector<8x8xbf16>, vector<8x8xf32> -> vector<8x8xf32>
    %378 = vector.broadcast %356 : vector<1x8xf32> to vector<8x8xf32>
    %379 = arith.addf %377, %378 : vector<8x8xf32>
    %cst_124 = arith.constant dense<0xFF800000> : vector<8xf32>
    %380 = vector.multi_reduction <maximumf>, %379, %cst_124 [1] : vector<8x8xf32> to vector<8xf32>
    %381 = vector.shape_cast %380 : vector<8xf32> to vector<8x1xf32>
    %382 = vector.broadcast %381 : vector<8x1xf32> to vector<8x8xf32>
    %383 = arith.subf %379, %382 : vector<8x8xf32>
    %384 = math.exp %383 : vector<8x8xf32>
    %cst_125 = arith.constant dense<0.000000e+00> : vector<8xf32>
    %385 = vector.multi_reduction <add>, %384, %cst_125 [1] : vector<8x8xf32> to vector<8xf32>
    %386 = vector.shape_cast %385 : vector<8xf32> to vector<8x1xf32>
    %387 = vector.broadcast %386 : vector<8x1xf32> to vector<8x8xf32>
    %388 = arith.divf %384, %387 : vector<8x8xf32>
    %389 = arith.truncf %388 : vector<8x8xf32> to vector<8x8xbf16>
    %cst_126 = arith.constant dense<0.000000e+00> : vector<8x8xf32>
    %390 = tpu.matmul %389, %376, %cst_126 {dimension_numbers = #tpu.dot_dimension_numbers<[1], [0], [0], [1], [0, 0, 1, 1], [], []>} : vector<8x8xbf16>, vector<8x8xbf16>, vector<8x8xf32> -> vector<8x8xf32>
    %391 = vector.extract_strided_slice %281 {offsets = [8, 16], sizes = [8, 8], strides = [1, 1]} : vector<16x32xbf16> to vector<8x8xbf16>
    %392 = vector.extract_strided_slice %283 {offsets = [8, 16], sizes = [8, 8], strides = [1, 1]} : vector<16x32xbf16> to vector<8x8xbf16>
    %393 = vector.extract_strided_slice %285 {offsets = [8, 16], sizes = [8, 8], strides = [1, 1]} : vector<16x32xbf16> to vector<8x8xbf16>
    %cst_127 = arith.constant dense<0.000000e+00> : vector<8x8xf32>
    %394 = tpu.matmul %391, %392, %cst_127 {dimension_numbers = #tpu.dot_dimension_numbers<[1], [1], [0], [0], [0, 0, 1, 0], [], []>} : vector<8x8xbf16>, vector<8x8xbf16>, vector<8x8xf32> -> vector<8x8xf32>
    %395 = vector.broadcast %356 : vector<1x8xf32> to vector<8x8xf32>
    %396 = arith.addf %394, %395 : vector<8x8xf32>
    %cst_128 = arith.constant dense<0xFF800000> : vector<8xf32>
    %397 = vector.multi_reduction <maximumf>, %396, %cst_128 [1] : vector<8x8xf32> to vector<8xf32>
    %398 = vector.shape_cast %397 : vector<8xf32> to vector<8x1xf32>
    %399 = vector.broadcast %398 : vector<8x1xf32> to vector<8x8xf32>
    %400 = arith.subf %396, %399 : vector<8x8xf32>
    %401 = math.exp %400 : vector<8x8xf32>
    %cst_129 = arith.constant dense<0.000000e+00> : vector<8xf32>
    %402 = vector.multi_reduction <add>, %401, %cst_129 [1] : vector<8x8xf32> to vector<8xf32>
    %403 = vector.shape_cast %402 : vector<8xf32> to vector<8x1xf32>
    %404 = vector.broadcast %403 : vector<8x1xf32> to vector<8x8xf32>
    %405 = arith.divf %401, %404 : vector<8x8xf32>
    %406 = arith.truncf %405 : vector<8x8xf32> to vector<8x8xbf16>
    %cst_130 = arith.constant dense<0.000000e+00> : vector<8x8xf32>
    %407 = tpu.matmul %406, %393, %cst_130 {dimension_numbers = #tpu.dot_dimension_numbers<[1], [0], [0], [1], [0, 0, 1, 1], [], []>} : vector<8x8xbf16>, vector<8x8xbf16>, vector<8x8xf32> -> vector<8x8xf32>
    %408 = vector.extract_strided_slice %281 {offsets = [8, 24], sizes = [8, 8], strides = [1, 1]} : vector<16x32xbf16> to vector<8x8xbf16>
    %409 = vector.extract_strided_slice %283 {offsets = [8, 24], sizes = [8, 8], strides = [1, 1]} : vector<16x32xbf16> to vector<8x8xbf16>
    %410 = vector.extract_strided_slice %285 {offsets = [8, 24], sizes = [8, 8], strides = [1, 1]} : vector<16x32xbf16> to vector<8x8xbf16>
    %cst_131 = arith.constant dense<0.000000e+00> : vector<8x8xf32>
    %411 = tpu.matmul %408, %409, %cst_131 {dimension_numbers = #tpu.dot_dimension_numbers<[1], [1], [0], [0], [0, 0, 1, 0], [], []>} : vector<8x8xbf16>, vector<8x8xbf16>, vector<8x8xf32> -> vector<8x8xf32>
    %412 = vector.broadcast %356 : vector<1x8xf32> to vector<8x8xf32>
    %413 = arith.addf %411, %412 : vector<8x8xf32>
    %cst_132 = arith.constant dense<0xFF800000> : vector<8xf32>
    %414 = vector.multi_reduction <maximumf>, %413, %cst_132 [1] : vector<8x8xf32> to vector<8xf32>
    %415 = vector.shape_cast %414 : vector<8xf32> to vector<8x1xf32>
    %416 = vector.broadcast %415 : vector<8x1xf32> to vector<8x8xf32>
    %417 = arith.subf %413, %416 : vector<8x8xf32>
    %418 = math.exp %417 : vector<8x8xf32>
    %cst_133 = arith.constant dense<0.000000e+00> : vector<8xf32>
    %419 = vector.multi_reduction <add>, %418, %cst_133 [1] : vector<8x8xf32> to vector<8xf32>
    %420 = vector.shape_cast %419 : vector<8xf32> to vector<8x1xf32>
    %421 = vector.broadcast %420 : vector<8x1xf32> to vector<8x8xf32>
    %422 = arith.divf %418, %421 : vector<8x8xf32>
    %423 = arith.truncf %422 : vector<8x8xf32> to vector<8x8xbf16>
    %cst_134 = arith.constant dense<0.000000e+00> : vector<8x8xf32>
    %424 = tpu.matmul %423, %410, %cst_134 {dimension_numbers = #tpu.dot_dimension_numbers<[1], [0], [0], [1], [0, 0, 1, 1], [], []>} : vector<8x8xbf16>, vector<8x8xbf16>, vector<8x8xf32> -> vector<8x8xf32>
    %425 = tpu.concatenate %373, %390, %407, %424 in 1 : vector<8x8xf32>, vector<8x8xf32>, vector<8x8xf32>, vector<8x8xf32> -> vector<8x32xf32>
    %426 = tpu.concatenate %355, %425 in 0 : vector<8x32xf32>, vector<8x32xf32> -> vector<16x32xf32>
    %c1_135 = arith.constant 1 : index
    %c0_136 = arith.constant 0 : index
    %c0_137 = arith.constant 0 : index
    %427 = vector.load %arg6[%c1_135, %c0_136, %c0_137] : memref<2x32x32xbf16, #tpu.memory_space<vmem>>, vector<1x32x32xbf16>
    %428 = vector.shape_cast %427 : vector<1x32x32xbf16> to vector<32x32xbf16>
    %429 = arith.truncf %426 : vector<16x32xf32> to vector<16x32xbf16>
    %cst_138 = arith.constant dense<0.000000e+00> : vector<16x32xf32>
    %430 = tpu.matmul %429, %428, %cst_138 {dimension_numbers = #tpu.dot_dimension_numbers<[1], [0], [0], [1], [0, 0, 1, 1], [], []>} : vector<16x32xbf16>, vector<32x32xbf16>, vector<16x32xf32> -> vector<16x32xf32>
    %c1_139 = arith.constant 1 : index
    %c0_140 = arith.constant 0 : index
    %c0_141 = arith.constant 0 : index
    %431 = vector.load %arg7[%c1_139, %c0_140, %c0_141] : memref<2x1x32xf32, #tpu.memory_space<vmem>>, vector<1x1x32xf32>
    %432 = vector.shape_cast %431 : vector<1x1x32xf32> to vector<1x32xf32>
    %433 = vector.broadcast %432 : vector<1x32xf32> to vector<16x32xf32>
    %434 = arith.addf %430, %433 : vector<16x32xf32>
    %435 = arith.addf %271, %434 : vector<16x32xf32>
    %c1_142 = arith.constant 1 : index
    %c0_143 = arith.constant 0 : index
    %c0_144 = arith.constant 0 : index
    %436 = vector.load %arg8[%c1_142, %c0_143, %c0_144] : memref<2x1x32xf32, #tpu.memory_space<vmem>>, vector<1x1x32xf32>
    %437 = vector.shape_cast %436 : vector<1x1x32xf32> to vector<1x32xf32>
    %c1_145 = arith.constant 1 : index
    %c0_146 = arith.constant 0 : index
    %c0_147 = arith.constant 0 : index
    %438 = vector.load %arg9[%c1_145, %c0_146, %c0_147] : memref<2x1x32xf32, #tpu.memory_space<vmem>>, vector<1x1x32xf32>
    %439 = vector.shape_cast %438 : vector<1x1x32xf32> to vector<1x32xf32>
    %cst_148 = arith.constant dense<0.000000e+00> : vector<16xf32>
    %440 = vector.multi_reduction <add>, %435, %cst_148 [1] : vector<16x32xf32> to vector<16xf32>
    %441 = vector.shape_cast %440 : vector<16xf32> to vector<16x1xf32>
    %cst_149 = arith.constant 3.200000e+01 : f32
    %442 = vector.broadcast %cst_149 : f32 to vector<16x1xf32>
    %443 = arith.divf %441, %442 : vector<16x1xf32>
    %444 = vector.broadcast %443 : vector<16x1xf32> to vector<16x32xf32>
    %445 = arith.subf %435, %444 : vector<16x32xf32>
    %446 = arith.mulf %445, %445 : vector<16x32xf32>
    %cst_150 = arith.constant dense<0.000000e+00> : vector<16xf32>
    %447 = vector.multi_reduction <add>, %446, %cst_150 [1] : vector<16x32xf32> to vector<16xf32>
    %448 = vector.shape_cast %447 : vector<16xf32> to vector<16x1xf32>
    %cst_151 = arith.constant 3.200000e+01 : f32
    %449 = vector.broadcast %cst_151 : f32 to vector<16x1xf32>
    %450 = arith.divf %448, %449 : vector<16x1xf32>
    %451 = vector.broadcast %443 : vector<16x1xf32> to vector<16x32xf32>
    %452 = arith.subf %435, %451 : vector<16x32xf32>
    %cst_152 = arith.constant 9.99999996E-13 : f32
    %453 = vector.broadcast %cst_152 : f32 to vector<16x1xf32>
    %454 = arith.addf %450, %453 : vector<16x1xf32>
    %455 = math.rsqrt %454 : vector<16x1xf32>
    %456 = vector.broadcast %455 : vector<16x1xf32> to vector<16x32xf32>
    %457 = arith.mulf %452, %456 : vector<16x32xf32>
    %458 = vector.broadcast %437 : vector<1x32xf32> to vector<16x32xf32>
    %459 = arith.mulf %457, %458 : vector<16x32xf32>
    %460 = vector.broadcast %439 : vector<1x32xf32> to vector<16x32xf32>
    %461 = arith.addf %459, %460 : vector<16x32xf32>
    %c1_153 = arith.constant 1 : index
    %c0_154 = arith.constant 0 : index
    %c0_155 = arith.constant 0 : index
    %462 = vector.load %arg10[%c1_153, %c0_154, %c0_155] : memref<2x32x128xbf16, #tpu.memory_space<vmem>>, vector<1x32x128xbf16>
    %463 = vector.shape_cast %462 : vector<1x32x128xbf16> to vector<32x128xbf16>
    %464 = arith.truncf %461 : vector<16x32xf32> to vector<16x32xbf16>
    %cst_156 = arith.constant dense<0.000000e+00> : vector<16x128xf32>
    %465 = tpu.matmul %464, %463, %cst_156 {dimension_numbers = #tpu.dot_dimension_numbers<[1], [0], [0], [1], [0, 0, 1, 1], [], []>} : vector<16x32xbf16>, vector<32x128xbf16>, vector<16x128xf32> -> vector<16x128xf32>
    %c1_157 = arith.constant 1 : index
    %c0_158 = arith.constant 0 : index
    %c0_159 = arith.constant 0 : index
    %466 = vector.load %arg11[%c1_157, %c0_158, %c0_159] : memref<2x1x128xf32, #tpu.memory_space<vmem>>, vector<1x1x128xf32>
    %467 = vector.shape_cast %466 : vector<1x1x128xf32> to vector<1x128xf32>
    %468 = vector.broadcast %467 : vector<1x128xf32> to vector<16x128xf32>
    %469 = arith.addf %465, %468 : vector<16x128xf32>
    %cst_160 = arith.constant 5.000000e-01 : f32
    %470 = vector.broadcast %cst_160 : f32 to vector<16x128xf32>
    %471 = arith.mulf %470, %469 : vector<16x128xf32>
    %cst_161 = arith.constant 4.471500e-02 : f32
    %472 = vector.broadcast %cst_161 : f32 to vector<16x128xf32>
    %473 = arith.mulf %472, %469 : vector<16x128xf32>
    %474 = arith.mulf %473, %469 : vector<16x128xf32>
    %475 = arith.mulf %474, %469 : vector<16x128xf32>
    %476 = arith.addf %469, %475 : vector<16x128xf32>
    %cst_162 = arith.constant 0.797884583 : f32
    %477 = vector.broadcast %cst_162 : f32 to vector<16x128xf32>
    %478 = arith.mulf %477, %476 : vector<16x128xf32>
    %479 = math.tanh %478 : vector<16x128xf32>
    %cst_163 = arith.constant 1.000000e+00 : f32
    %480 = vector.broadcast %cst_163 : f32 to vector<16x128xf32>
    %481 = arith.addf %480, %479 : vector<16x128xf32>
    %482 = arith.mulf %471, %481 : vector<16x128xf32>
    %c1_164 = arith.constant 1 : index
    %c0_165 = arith.constant 0 : index
    %c0_166 = arith.constant 0 : index
    %483 = vector.load %arg12[%c1_164, %c0_165, %c0_166] : memref<2x128x32xbf16, #tpu.memory_space<vmem>>, vector<1x128x32xbf16>
    %484 = vector.shape_cast %483 : vector<1x128x32xbf16> to vector<128x32xbf16>
    %485 = arith.truncf %482 : vector<16x128xf32> to vector<16x128xbf16>
    %cst_167 = arith.constant dense<0.000000e+00> : vector<16x32xf32>
    %486 = tpu.matmul %485, %484, %cst_167 {dimension_numbers = #tpu.dot_dimension_numbers<[1], [0], [0], [1], [0, 0, 1, 1], [], []>} : vector<16x128xbf16>, vector<128x32xbf16>, vector<16x32xf32> -> vector<16x32xf32>
    %c1_168 = arith.constant 1 : index
    %c0_169 = arith.constant 0 : index
    %c0_170 = arith.constant 0 : index
    %487 = vector.load %arg13[%c1_168, %c0_169, %c0_170] : memref<2x1x32xf32, #tpu.memory_space<vmem>>, vector<1x1x32xf32>
    %488 = vector.shape_cast %487 : vector<1x1x32xf32> to vector<1x32xf32>
    %489 = vector.broadcast %488 : vector<1x32xf32> to vector<16x32xf32>
    %490 = arith.addf %486, %489 : vector<16x32xf32>
    %491 = arith.addf %461, %490 : vector<16x32xf32>
    %c1_171 = arith.constant 1 : index
    %c0_172 = arith.constant 0 : index
    %c0_173 = arith.constant 0 : index
    %492 = vector.load %arg14[%c1_171, %c0_172, %c0_173] : memref<2x1x32xf32, #tpu.memory_space<vmem>>, vector<1x1x32xf32>
    %493 = vector.shape_cast %492 : vector<1x1x32xf32> to vector<1x32xf32>
    %c1_174 = arith.constant 1 : index
    %c0_175 = arith.constant 0 : index
    %c0_176 = arith.constant 0 : index
    %494 = vector.load %arg15[%c1_174, %c0_175, %c0_176] : memref<2x1x32xf32, #tpu.memory_space<vmem>>, vector<1x1x32xf32>
    %495 = vector.shape_cast %494 : vector<1x1x32xf32> to vector<1x32xf32>
    %cst_177 = arith.constant dense<0.000000e+00> : vector<16xf32>
    %496 = vector.multi_reduction <add>, %491, %cst_177 [1] : vector<16x32xf32> to vector<16xf32>
    %497 = vector.shape_cast %496 : vector<16xf32> to vector<16x1xf32>
    %cst_178 = arith.constant 3.200000e+01 : f32
    %498 = vector.broadcast %cst_178 : f32 to vector<16x1xf32>
    %499 = arith.divf %497, %498 : vector<16x1xf32>
    %500 = vector.broadcast %499 : vector<16x1xf32> to vector<16x32xf32>
    %501 = arith.subf %491, %500 : vector<16x32xf32>
    %502 = arith.mulf %501, %501 : vector<16x32xf32>
    %cst_179 = arith.constant dense<0.000000e+00> : vector<16xf32>
    %503 = vector.multi_reduction <add>, %502, %cst_179 [1] : vector<16x32xf32> to vector<16xf32>
    %504 = vector.shape_cast %503 : vector<16xf32> to vector<16x1xf32>
    %cst_180 = arith.constant 3.200000e+01 : f32
    %505 = vector.broadcast %cst_180 : f32 to vector<16x1xf32>
    %506 = arith.divf %504, %505 : vector<16x1xf32>
    %507 = vector.broadcast %499 : vector<16x1xf32> to vector<16x32xf32>
    %508 = arith.subf %491, %507 : vector<16x32xf32>
    %cst_181 = arith.constant 9.99999996E-13 : f32
    %509 = vector.broadcast %cst_181 : f32 to vector<16x1xf32>
    %510 = arith.addf %506, %509 : vector<16x1xf32>
    %511 = math.rsqrt %510 : vector<16x1xf32>
    %512 = vector.broadcast %511 : vector<16x1xf32> to vector<16x32xf32>
    %513 = arith.mulf %508, %512 : vector<16x32xf32>
    %514 = vector.broadcast %493 : vector<1x32xf32> to vector<16x32xf32>
    %515 = arith.mulf %513, %514 : vector<16x32xf32>
    %516 = vector.broadcast %495 : vector<1x32xf32> to vector<16x32xf32>
    %517 = arith.addf %515, %516 : vector<16x32xf32>
    %518 = vector.extract_strided_slice %517 {offsets = [0, 0], sizes = [1, 32], strides = [1, 1]} : vector<16x32xf32> to vector<1x32xf32>
    %519 = vector.extract_strided_slice %517 {offsets = [8, 0], sizes = [1, 32], strides = [1, 1]} : vector<16x32xf32> to vector<1x32xf32>
    %520 = tpu.concatenate %518, %519 in 0 : vector<1x32xf32>, vector<1x32xf32> -> vector<2x32xf32>
    %c0_182 = arith.constant 0 : index
    %c0_183 = arith.constant 0 : index
    %521 = vector.load %arg16[%c0_182, %c0_183] : memref<32x128xbf16, #tpu.memory_space<vmem>>, vector<32x128xbf16>
    %522 = arith.truncf %520 : vector<2x32xf32> to vector<2x32xbf16>
    %cst_184 = arith.constant dense<0.000000e+00> : vector<2x128xf32>
    %523 = tpu.matmul %522, %521, %cst_184 {dimension_numbers = #tpu.dot_dimension_numbers<[1], [0], [0], [1], [0, 0, 1, 1], [], []>} : vector<2x32xbf16>, vector<32x128xbf16>, vector<2x128xf32> -> vector<2x128xf32>
    %c0_185 = arith.constant 0 : index
    %c0_186 = arith.constant 0 : index
    %524 = vector.load %arg17[%c0_185, %c0_186] : memref<1x128xf32, #tpu.memory_space<vmem>>, vector<1x128xf32>
    %525 = vector.broadcast %524 : vector<1x128xf32> to vector<2x128xf32>
    %526 = arith.addf %523, %525 : vector<2x128xf32>
    %c0_187 = arith.constant 0 : index
    %c0_188 = arith.constant 0 : index
    %527 = vector.load %arg18[%c0_187, %c0_188] : memref<2x128xf32, #tpu.memory_space<vmem>>, vector<2x128xf32>
    tpu.vector_store %arg18[%c0_187, %c0_188], %526 {strides = array<i32>} : memref<2x128xf32, #tpu.memory_space<vmem>>, vector<2x128xf32>,
    return
  }
}

</mosaic_0001>

<llo_original>
// kernel: emotion_classifier_forward.1
$region0: #{emotion_classifier_forward.1}
  #allocation0 [shape = 'u32[]', space=smem, size = 0x4, offset = 0x4, fixed_abs, tag = 'smem constant byte address 0x4 - core index']
  #allocation1 [shape = 'u32[144,128]{1,0:T(1,128)}', space=vmem, size = 0x12000, scoped, tag = 'internal scratch']
  %s0 = inlined_call_operand.vmem [shape: f32[16,32], index: 0, kind: input, shape index: {}]
  %s1 = inlined_call_operand.vmem [shape: f32[2,8], index: 1, kind: input, shape index: {}]
  %s2 = inlined_call_operand.vmem [shape: f32[1,32], index: 2, kind: input, shape index: {}]
  %s3 = inlined_call_operand.vmem [shape: f32[1,32], index: 3, kind: input, shape index: {}]
  %s4 = inlined_call_operand.vmem [shape: bf16[2,32,128], index: 4, kind: input, shape index: {}]
  %s5 = inlined_call_operand.vmem [shape: f32[2,1,128], index: 5, kind: input, shape index: {}]
  %s6 = inlined_call_operand.vmem [shape: bf16[2,32,32], index: 6, kind: input, shape index: {}]
  %s7 = inlined_call_operand.vmem [shape: f32[2,1,32], index: 7, kind: input, shape index: {}]
  %s8 = inlined_call_operand.vmem [shape: f32[2,1,32], index: 8, kind: input, shape index: {}]
  %s9 = inlined_call_operand.vmem [shape: f32[2,1,32], index: 9, kind: input, shape index: {}]
  %s10 = inlined_call_operand.vmem [shape: bf16[2,32,128], index: 10, kind: input, shape index: {}]
  %s11 = inlined_call_operand.vmem [shape: f32[2,1,128], index: 11, kind: input, shape index: {}]
  %s12 = inlined_call_operand.vmem [shape: bf16[2,128,32], index: 12, kind: input, shape index: {}]
  %s13 = inlined_call_operand.vmem [shape: f32[2,1,32], index: 13, kind: input, shape index: {}]
  %s14 = inlined_call_operand.vmem [shape: f32[2,1,32], index: 14, kind: input, shape index: {}]
  %s15 = inlined_call_operand.vmem [shape: f32[2,1,32], index: 15, kind: input, shape index: {}]
  %s16 = inlined_call_operand.vmem [shape: bf16[32,128], index: 16, kind: input, shape index: {}]
  %s17 = inlined_call_operand.vmem [shape: f32[1,128], index: 17, kind: input, shape index: {}]
  %s18 = inlined_call_operand.hbm [shape: f32[2,128], index: 18, kind: output, shape index: {}]
  %s19 = sld [smem:[#allocation0]]
  $region82: #{emotion_classifier_forward.1} parent=0
    _
  %s21 = ssub.s32 1, %s19
  %s22 = scalar_select 0, %s21, %s19
  $region1: #{emotion_classifier_forward.1} parent=0
    #allocation2 [shape = 'u8[1024]{0}', space=vmem, size = 0x400, scoped, tag = 'output window, operand 0, single buffered']
    #allocation3 [shape = 's32[1]{0}', space=sflag, size = 0x4, scoped, tag = 'scoped memory for emotion_classifier_forward.1']
    %23 = vsyncpa [#allocation3], 0
    // Predicated region
    $region2: #{emotion_classifier_forward.1} parent=1 // pred_check
      _
    $region3: #{emotion_classifier_forward.1} parent=1 // pred_check_branch
      %25 = sbr.rel (0) target = $region5
    $region4: #{emotion_classifier_forward.1} parent=1 // pred_region
      _
    $region5: #{emotion_classifier_forward.1} parent=1 // pred_fallthru
      _
    // Predicated region
    $region6: #{emotion_classifier_forward.1} parent=1 // pred_check
      _
    $region7: #{emotion_classifier_forward.1} parent=1 // pred_check_branch
      %27 = sbr.rel (0) target = $region9
    $region8: #{emotion_classifier_forward.1} parent=1 // pred_region
      _
    $region9: #{emotion_classifier_forward.1} parent=1 // pred_fallthru
      _
    // Predicated region
    $region10: #{emotion_classifier_forward.1} parent=1 // pred_check
      _
    $region11: #{emotion_classifier_forward.1} parent=1 // pred_check_branch
      %29 = sbr.rel (0) target = $region13
    $region12: #{emotion_classifier_forward.1} parent=1 // pred_region
      _
    $region13: #{emotion_classifier_forward.1} parent=1 // pred_fallthru
      _
    // Predicated region
    $region14: #{emotion_classifier_forward.1} parent=1 // pred_check
      _
    $region15: #{emotion_classifier_forward.1} parent=1 // pred_check_branch
      %31 = sbr.rel (0) target = $region17
    $region16: #{emotion_classifier_forward.1} parent=1 // pred_region
      _
    $region17: #{emotion_classifier_forward.1} parent=1 // pred_fallthru
      _
    // Predicated region
    $region18: #{emotion_classifier_forward.1} parent=1 // pred_check
      _
    $region19: #{emotion_classifier_forward.1} parent=1 // pred_check_branch
      %33 = sbr.rel (0) target = $region21
    $region20: #{emotion_classifier_forward.1} parent=1 // pred_region
      _
    $region21: #{emotion_classifier_forward.1} parent=1 // pred_fallthru
      _
    // Predicated region
    $region22: #{emotion_classifier_forward.1} parent=1 // pred_check
      _
    $region23: #{emotion_classifier_forward.1} parent=1 // pred_check_branch
      %35 = sbr.rel (0) target = $region25
    $region24: #{emotion_classifier_forward.1} parent=1 // pred_region
      _
    $region25: #{emotion_classifier_forward.1} parent=1 // pred_fallthru
      _
    // Predicated region
    $region26: #{emotion_classifier_forward.1} parent=1 // pred_check
      _
    $region27: #{emotion_classifier_forward.1} parent=1 // pred_check_branch
      %37 = sbr.rel (0) target = $region29
    $region28: #{emotion_classifier_forward.1} parent=1 // pred_region
      _
    $region29: #{emotion_classifier_forward.1} parent=1 // pred_fallthru
      _
    // Predicated region
    $region30: #{emotion_classifier_forward.1} parent=1 // pred_check
      _
    $region31: #{emotion_classifier_forward.1} parent=1 // pred_check_branch
      %39 = sbr.rel (0) target = $region33
    $region32: #{emotion_classifier_forward.1} parent=1 // pred_region
      _
    $region33: #{emotion_classifier_forward.1} parent=1 // pred_fallthru
      _
    // Predicated region
    $region34: #{emotion_classifier_forward.1} parent=1 // pred_check
      _
    $region35: #{emotion_classifier_forward.1} parent=1 // pred_check_branch
      %41 = sbr.rel (0) target = $region37
    $region36: #{emotion_classifier_forward.1} parent=1 // pred_region
      _
    $region37: #{emotion_classifier_forward.1} parent=1 // pred_fallthru
      _
    // Predicated region
    $region38: #{emotion_classifier_forward.1} parent=1 // pred_check
      _
    $region39: #{emotion_classifier_forward.1} parent=1 // pred_check_branch
      %43 = sbr.rel (0) target = $region41
    $region40: #{emotion_classifier_forward.1} parent=1 // pred_region
      _
    $region41: #{emotion_classifier_forward.1} parent=1 // pred_fallthru
      _
    // Predicated region
    $region42: #{emotion_classifier_forward.1} parent=1 // pred_check
      _
    $region43: #{emotion_classifier_forward.1} parent=1 // pred_check_branch
      %45 = sbr.rel (0) target = $region45
    $region44: #{emotion_classifier_forward.1} parent=1 // pred_region
      _
    $region45: #{emotion_classifier_forward.1} parent=1 // pred_fallthru
      _
    // Predicated region
    $region46: #{emotion_classifier_forward.1} parent=1 // pred_check
      _
    $region47: #{emotion_classifier_forward.1} parent=1 // pred_check_branch
      %47 = sbr.rel (0) target = $region49
    $region48: #{emotion_classifier_forward.1} parent=1 // pred_region
      _
    $region49: #{emotion_classifier_forward.1} parent=1 // pred_fallthru
      _
    // Predicated region
    $region50: #{emotion_classifier_forward.1} parent=1 // pred_check
      _
    $region51: #{emotion_classifier_forward.1} parent=1 // pred_check_branch
      %49 = sbr.rel (0) target = $region53
    $region52: #{emotion_classifier_forward.1} parent=1 // pred_region
      _
    $region53: #{emotion_classifier_forward.1} parent=1 // pred_fallthru
      _
    // Predicated region
    $region54: #{emotion_classifier_forward.1} parent=1 // pred_check
      _
    $region55: #{emotion_classifier_forward.1} parent=1 // pred_check_branch
      %51 = sbr.rel (0) target = $region57
    $region56: #{emotion_classifier_forward.1} parent=1 // pred_region
      _
    $region57: #{emotion_classifier_forward.1} parent=1 // pred_fallthru
      _
    // Predicated region
    $region58: #{emotion_classifier_forward.1} parent=1 // pred_check
      _
    $region59: #{emotion_classifier_forward.1} parent=1 // pred_check_branch
      %53 = sbr.rel (0) target = $region61
    $region60: #{emotion_classifier_forward.1} parent=1 // pred_region
      _
    $region61: #{emotion_classifier_forward.1} parent=1 // pred_fallthru
      _
    // Predicated region
    $region62: #{emotion_classifier_forward.1} parent=1 // pred_check
      _
    $region63: #{emotion_classifier_forward.1} parent=1 // pred_check_branch
      %55 = sbr.rel (0) target = $region65
    $region64: #{emotion_classifier_forward.1} parent=1 // pred_region
      _
    $region65: #{emotion_classifier_forward.1} parent=1 // pred_fallthru
      _
    // Predicated region
    $region66: #{emotion_classifier_forward.1} parent=1 // pred_check
      _
    $region67: #{emotion_classifier_forward.1} parent=1 // pred_check_branch
      %57 = sbr.rel (0) target = $region69
    $region68: #{emotion_classifier_forward.1} parent=1 // pred_region
      _
    $region69: #{emotion_classifier_forward.1} parent=1 // pred_fallthru
      _
    // Predicated region
    $region70: #{emotion_classifier_forward.1} parent=1 // pred_check
      _
    $region71: #{emotion_classifier_forward.1} parent=1 // pred_check_branch
      %59 = sbr.rel (0) target = $region73
    $region72: #{emotion_classifier_forward.1} parent=1 // pred_region
      _
    $region73: #{emotion_classifier_forward.1} parent=1 // pred_fallthru
      _
    %v61 = vld [vmem:[%s0] sm:$0xff]
    %v62 = vld [vmem:[%s0 + $0x8] sm:$0xff]
    %v63 = vld [vmem:[%s2] sm:$0x1]
    %v64 = vld [vmem:[%s3] sm:$0x1]
    %vm65 = vcmask 261120
    %v66 = vsel %vm65, %v61, 0.0
    %67 = vadd.xlane.f32.xlu0 %v66
    %v68 = vpop.xlane.xlu0 %67
    %v69 = vsel %vm65, %v62, 0.0
    %70 = vadd.xlane.f32.xlu0 %v69
    %v71 = vpop.xlane.xlu0 %70
    %v72 = vrcp.pop 32.0
    %v73 = vmul.f32 %v68, %v72
    %v74 = vmul.f32 %v71, %v72
    %v75 = vsub.f32 %v61, %v73
    %v76 = vsub.f32 %v62, %v74
    %v77 = vmul.f32 %v75, %v75
    %v78 = vmul.f32 %v76, %v76
    %v79 = vsel %vm65, %v77, 0.0
    %80 = vadd.xlane.f32.xlu0 %v79
    %v81 = vpop.xlane.xlu0 %80
    %v82 = vsel %vm65, %v78, 0.0
    %83 = vadd.xlane.f32.xlu0 %v82
    %v84 = vpop.xlane.xlu0 %83
    %v85 = vmul.f32 %v81, %v72
    %v86 = vmul.f32 %v84, %v72
    %v87 = vadd.f32 %v85, 1e-12
    %v88 = vadd.f32 %v86, 1e-12
    %v89 = vrsqrt.pop %v87
    %v90 = vrsqrt.pop %v88
    %v91 = vmul.f32 %v75, %v89
    %v92 = vmul.f32 %v76, %v90
    %v94 = vlaneseq
    %v95 = vshrl.u32 %v94, 7
    %v96 = vsub.s32 0, %v95
    %v97 = vrot.slane %v63, %v96
    %v99 = vmul.f32 %v91, %v97
    %v100 = vmul.f32 %v92, %v97
    %v102 = vlaneseq
    %v103 = vshrl.u32 %v102, 7
    %v104 = vsub.s32 0, %v103
    %v105 = vrot.slane %v64, %v104
    %v107 = vadd.f32 %v99, %v105
    %v108 = vadd.f32 %v100, %v105
    %v109 = vld [vmem:[%s1] sm:$0x3]
    %v110 = vld [vmem:[%s4] sm:$0xf]
    %v111 = vld [vmem:[%s4 + $0x4] sm:$0xf]
    %v112 = vld [vmem:[%s4 + $0x8] sm:$0xf]
    %v113 = vld [vmem:[%s4 + $0xc] sm:$0xf]
    %v114 = vpack.c.bf16 %v108, %v107
    %v115 = vld [vmem:[%s5] sm:$0x1]
    %v117 = vlaneseq
    %v118 = vshrl.u32 %v117, 7
    %v119 = vsub.s32 0, %v118
    %v120 = vrot.slane %v115, %v119
    %v126 = vunpack.c.l.b16 %v110
    %v127 = vunpack.c.l.b16 %v111
    %v128 = vunpack.c.l.b16 %v112
    %v129 = vunpack.c.l.b16 %v113
    %v130 = vpack.c.b16 %v127, %v126
    %v131 = vpack.c.b16 %v129, %v128
    %v135 = vsel %vm65, %v114, 0
    %137 = vmatprep.subr.bf16.mxu0 0
    %138 = vmatpush1.bf16.msra.mxu0 %v130
    %139 = vmatprep.subr.bf16.mxu0 0
    %140 = vmatpush1.bf16.msra.mxu0 %v131
    %141 = vmatprep.subr.bf16.mxu0 0
    %142 = vmatpush1.bf16.msra.mxu0 0
    %143 = vmatprep.subr.bf16.mxu0 0
    %144 = vmatpush1.bf16.msra.mxu0 0
    %145 = vmatprep.subr.bf16.mxu0 0
    %146 = vmatpush1.bf16.msra.mxu0 0
    %147 = vmatprep.subr.bf16.mxu0 0
    %148 = vmatpush1.bf16.msra.mxu0 0
    %149 = vmatprep.subr.bf16.mxu0 0
    %150 = vmatpush1.bf16.msra.mxu0 0
    %151 = vmatprep.subr.bf16.mxu0 0
    %152 = vmatpush1.bf16.msra.mxu0 0
    %153 = vmatprep.subr.bf16.mxu0 0
    %154 = vmatpush1.bf16.msra.mxu0 0
    %155 = vmatprep.subr.bf16.mxu0 0
    %156 = vmatpush1.bf16.msra.mxu0 0
    %157 = vmatprep.subr.bf16.mxu0 0
    %158 = vmatpush1.bf16.msra.mxu0 0
    %159 = vmatprep.subr.bf16.mxu0 0
    %160 = vmatpush1.bf16.msra.mxu0 0
    %161 = vmatprep.subr.bf16.mxu0 0
    %162 = vmatpush1.bf16.msra.mxu0 0
    %163 = vmatprep.subr.bf16.mxu0 0
    %164 = vmatpush1.bf16.msra.mxu0 0
    %165 = vmatprep.subr.bf16.mxu0 0
    %166 = vmatpush1.bf16.msra.mxu0 0
    %167 = vmatprep.subr.bf16.mxu0 0
    %168 = vmatpush1.bf16.msra.mxu0 0
    %169 = vmatprep.mubr.bf16.mxu0 0
    %170 = vmatmul.mubr.bf16.gmra.mrb[0].mxu0 %v135
    %v171 = vpop.f32.mrb[0].mxu0
    %v172 = vadd.f32 %v120, %v171
    %v173 = vpop.f32.mrb[0].mxu0
    %v174 = vpop.f32.mrb[0].mxu0
    %v175 = vadd.f32 %v120, %v174
    %v176 = vpop.f32.mrb[0].mxu0
    %177 = vdwg.mxu0
    %v178 = vpack.c.bf16 %v175, %v172
    %v179 = vlaneseq
    %v180 = vshrl.u32 %v179, 7
    %v181 = vsub.s32 0, %v180
    %v182 = vrot.slane %v109, %v181
    %184 = vrot.lane.b32.xlu0 %v178, 96
    %v185 = vpop.permute.xlu0 %184
    %vm186 = vcmask 64512
    %v188 = vsel %vm186, %v178, 0
    %v191 = vsel %vm186, %v185, 0
    %193 = vmatprep.subr.bf16.mxu0 0
    %194 = vmatpush1.bf16.xpose.msra.mxu0 %v191
    %195 = vmatprep.subr.bf16.mxu0 0
    %196 = vmatpush1.bf16.xpose.msra.mxu0 0
    %197 = vmatprep.subr.bf16.mxu0 0
    %198 = vmatpush1.bf16.xpose.msra.mxu0 0
    %199 = vmatprep.subr.bf16.mxu0 0
    %200 = vmatpush1.bf16.xpose.msra.mxu0 0
    %201 = vmatprep.subr.bf16.mxu0 0
    %202 = vmatpush1.bf16.xpose.msra.mxu0 0
    %203 = vmatprep.subr.bf16.mxu0 0
    %204 = vmatpush1.bf16.xpose.msra.mxu0 0
    %205 = vmatprep.subr.bf16.mxu0 0
    %206 = vmatpush1.bf16.xpose.msra.mxu0 0
    %207 = vmatprep.subr.bf16.mxu0 0
    %208 = vmatpush1.bf16.xpose.msra.mxu0 0
    %209 = vmatprep.subr.bf16.mxu0 0
    %210 = vmatpush1.bf16.xpose.msra.mxu0 0
    %211 = vmatprep.subr.bf16.mxu0 0
    %212 = vmatpush1.bf16.xpose.msra.mxu0 0
    %213 = vmatprep.subr.bf16.mxu0 0
    %214 = vmatpush1.bf16.xpose.msra.mxu0 0
    %215 = vmatprep.subr.bf16.mxu0 0
    %216 = vmatpush1.bf16.xpose.msra.mxu0 0
    %217 = vmatprep.subr.bf16.mxu0 0
    %218 = vmatpush1.bf16.xpose.msra.mxu0 0
    %219 = vmatprep.subr.bf16.mxu0 0
    %220 = vmatpush1.bf16.xpose.msra.mxu0 0
    %221 = vmatprep.subr.bf16.mxu0 0
    %222 = vmatpush1.bf16.xpose.msra.mxu0 0
    %223 = vmatprep.subr.bf16.mxu0 0
    %224 = vmatpush1.bf16.xpose.msra.mxu0 0
    %225 = vmatprep.mubr.bf16.mxu0 0
    %226 = vmatmul.mubr.bf16.gmra.mrb[0].mxu0 %v188
    %v227 = vpop.f32.mrb[0].mxu0
    %v228 = vadd.f32 %v182, %v227
    %v229 = vpop.f32.mrb[0].mxu0
    %v230 = vpop.f32.mrb[0].mxu0
    %v231 = vpop.f32.mrb[0].mxu0
    %232 = vdwg.mxu0
    %v233 = vsel %vm186, %v228, -inf
    %234 = vmax.xlane.f32.xlu0 %v233
    %v235 = vpop.xlane.xlu0 %234
    %v236 = vsub.f32 %v228, %v235
    %v237 = vmul.f32 %v236, 1.442695
    %v238 = vpow.pop %v237
    %v239 = vsel %vm186, %v238, 0.0
    %240 = vadd.xlane.f32.xlu0 %v239
    %v241 = vpop.xlane.xlu0 %240
    %v242 = vrcp.pop %v241
    %v243 = vmul.f32 %v238, %v242
    %v244 = vpack.c.bf16 %v243, %v243
    %245 = vrot.lane.b32.xlu0 %v178, 64
    %v246 = vpop.permute.xlu0 %245
    %v248 = vsel %vm186, %v244, 0
    %vm250 = vcmask 1043456
    %v252 = vsel %vm250, %v246, 0
    %254 = vmatprep.subr.bf16.mxu0 0
    %255 = vmatpush1.bf16.msra.mxu0 %v252
    %256 = vmatprep.subr.bf16.mxu0 0
    %257 = vmatpush1.bf16.msra.mxu0 0
    %258 = vmatprep.subr.bf16.mxu0 0
    %259 = vmatpush1.bf16.msra.mxu0 0
    %260 = vmatprep.subr.bf16.mxu0 0
    %261 = vmatpush1.bf16.msra.mxu0 0
    %262 = vmatprep.subr.bf16.mxu0 0
    %263 = vmatpush1.bf16.msra.mxu0 0
    %264 = vmatprep.subr.bf16.mxu0 0
    %265 = vmatpush1.bf16.msra.mxu0 0
    %266 = vmatprep.subr.bf16.mxu0 0
    %267 = vmatpush1.bf16.msra.mxu0 0
    %268 = vmatprep.subr.bf16.mxu0 0
    %269 = vmatpush1.bf16.msra.mxu0 0
    %270 = vmatprep.subr.bf16.mxu0 0
    %271 = vmatpush1.bf16.msra.mxu0 0
    %272 = vmatprep.subr.bf16.mxu0 0
    %273 = vmatpush1.bf16.msra.mxu0 0
    %274 = vmatprep.subr.bf16.mxu0 0
    %275 = vmatpush1.bf16.msra.mxu0 0
    %276 = vmatprep.subr.bf16.mxu0 0
    %277 = vmatpush1.bf16.msra.mxu0 0
    %278 = vmatprep.subr.bf16.mxu0 0
    %279 = vmatpush1.bf16.msra.mxu0 0
    %280 = vmatprep.subr.bf16.mxu0 0
    %281 = vmatpush1.bf16.msra.mxu0 0
    %282 = vmatprep.subr.bf16.mxu0 0
    %283 = vmatpush1.bf16.msra.mxu0 0
    %284 = vmatprep.subr.bf16.mxu0 0
    %285 = vmatpush1.bf16.msra.mxu0 0
    %286 = vmatprep.mubr.bf16.mxu0 0
    %287 = vmatmul.mubr.bf16.gmra.mrb[0].mxu0 %v248
    %v288 = vpop.f32.mrb[0].mxu0
    %v289 = vadd.f32 0.0, %v288
    %v290 = vpop.f32.mrb[0].mxu0
    %v291 = vpop.f32.mrb[0].mxu0
    %v292 = vpop.f32.mrb[0].mxu0
    %293 = vdwg.mxu0
    %294 = vrot.lane.b32.xlu0 %v178, 120
    %v295 = vpop.permute.xlu0 %294
    %296 = vrot.lane.b32.xlu0 %v178, 88
    %v297 = vpop.permute.xlu0 %296
    %v299 = vsel %vm186, %v295, 0
    %v302 = vsel %vm186, %v297, 0
    %304 = vmatprep.subr.bf16.mxu0 0
    %305 = vmatpush1.bf16.xpose.msra.mxu0 %v302
    %306 = vmatprep.subr.bf16.mxu0 0
    %307 = vmatpush1.bf16.xpose.msra.mxu0 0
    %308 = vmatprep.subr.bf16.mxu0 0
    %309 = vmatpush1.bf16.xpose.msra.mxu0 0
    %310 = vmatprep.subr.bf16.mxu0 0
    %311 = vmatpush1.bf16.xpose.msra.mxu0 0
    %312 = vmatprep.subr.bf16.mxu0 0
    %313 = vmatpush1.bf16.xpose.msra.mxu0 0
    %314 = vmatprep.subr.bf16.mxu0 0
    %315 = vmatpush1.bf16.xpose.msra.mxu0 0
    %316 = vmatprep.subr.bf16.mxu0 0
    %317 = vmatpush1.bf16.xpose.msra.mxu0 0
    %318 = vmatprep.subr.bf16.mxu0 0
    %319 = vmatpush1.bf16.xpose.msra.mxu0 0
    %320 = vmatprep.subr.bf16.mxu0 0
    %321 = vmatpush1.bf16.xpose.msra.mxu0 0
    %322 = vmatprep.subr.bf16.mxu0 0
    %323 = vmatpush1.bf16.xpose.msra.mxu0 0
    %324 = vmatprep.subr.bf16.mxu0 0
    %325 = vmatpush1.bf16.xpose.msra.mxu0 0
    %326 = vmatprep.subr.bf16.mxu0 0
    %327 = vmatpush1.bf16.xpose.msra.mxu0 0
    %328 = vmatprep.subr.bf16.mxu0 0
    %329 = vmatpush1.bf16.xpose.msra.mxu0 0
    %330 = vmatprep.subr.bf16.mxu0 0
    %331 = vmatpush1.bf16.xpose.msra.mxu0 0
    %332 = vmatprep.subr.bf16.mxu0 0
    %333 = vmatpush1.bf16.xpose.msra.mxu0 0
    %334 = vmatprep.subr.bf16.mxu0 0
    %335 = vmatpush1.bf16.xpose.msra.mxu0 0
    %336 = vmatprep.mubr.bf16.mxu0 0
    %337 = vmatmul.mubr.bf16.gmra.mrb[0].mxu0 %v299
    %v338 = vpop.f32.mrb[0].mxu0
    %v339 = vadd.f32 %v182, %v338
    %v340 = vpop.f32.mrb[0].mxu0
    %v341 = vpop.f32.mrb[0].mxu0
    %v342 = vpop.f32.mrb[0].mxu0
    %343 = vdwg.mxu0
    %v344 = vsel %vm186, %v339, -inf
    %345 = vmax.xlane.f32.xlu0 %v344
    %v346 = vpop.xlane.xlu0 %345
    %v347 = vsub.f32 %v339, %v346
    %v348 = vmul.f32 %v347, 1.442695
    %v349 = vpow.pop %v348
    %v350 = vsel %vm186, %v349, 0.0
    %351 = vadd.xlane.f32.xlu0 %v350
    %v352 = vpop.xlane.xlu0 %351
    %v353 = vrcp.pop %v352
    %v354 = vmul.f32 %v349, %v353
    %v355 = vpack.c.bf16 %v354, %v354
    %356 = vrot.lane.b32.xlu0 %v178, 56
    %v357 = vpop.permute.xlu0 %356
    %v359 = vsel %vm186, %v355, 0
    %v362 = vsel %vm250, %v357, 0
    %364 = vmatprep.subr.bf16.mxu0 0
    %365 = vmatpush1.bf16.msra.mxu0 %v362
    %366 = vmatprep.subr.bf16.mxu0 0
    %367 = vmatpush1.bf16.msra.mxu0 0
    %368 = vmatprep.subr.bf16.mxu0 0
    %369 = vmatpush1.bf16.msra.mxu0 0
    %370 = vmatprep.subr.bf16.mxu0 0
    %371 = vmatpush1.bf16.msra.mxu0 0
    %372 = vmatprep.subr.bf16.mxu0 0
    %373 = vmatpush1.bf16.msra.mxu0 0
    %374 = vmatprep.subr.bf16.mxu0 0
    %375 = vmatpush1.bf16.msra.mxu0 0
    %376 = vmatprep.subr.bf16.mxu0 0
    %377 = vmatpush1.bf16.msra.mxu0 0
    %378 = vmatprep.subr.bf16.mxu0 0
    %379 = vmatpush1.bf16.msra.mxu0 0
    %380 = vmatprep.subr.bf16.mxu0 0
    %381 = vmatpush1.bf16.msra.mxu0 0
    %382 = vmatprep.subr.bf16.mxu0 0
    %383 = vmatpush1.bf16.msra.mxu0 0
    %384 = vmatprep.subr.bf16.mxu0 0
    %385 = vmatpush1.bf16.msra.mxu0 0
    %386 = vmatprep.subr.bf16.mxu0 0
    %387 = vmatpush1.bf16.msra.mxu0 0
    %388 = vmatprep.subr.bf16.mxu0 0
    %389 = vmatpush1.bf16.msra.mxu0 0
    %390 = vmatprep.subr.bf16.mxu0 0
    %391 = vmatpush1.bf16.msra.mxu0 0
    %392 = vmatprep.subr.bf16.mxu0 0
    %393 = vmatpush1.bf16.msra.mxu0 0
    %394 = vmatprep.subr.bf16.mxu0 0
    %395 = vmatpush1.bf16.msra.mxu0 0
    %396 = vmatprep.mubr.bf16.mxu0 0
    %397 = vmatmul.mubr.bf16.gmra.mrb[0].mxu0 %v359
    %v398 = vpop.f32.mrb[0].mxu0
    %v399 = vadd.f32 0.0, %v398
    %v400 = vpop.f32.mrb[0].mxu0
    %v401 = vpop.f32.mrb[0].mxu0
    %v402 = vpop.f32.mrb[0].mxu0
    %403 = vdwg.mxu0
    %404 = vrot.lane.b32.xlu0 %v178, 112
    %v405 = vpop.permute.xlu0 %404
    %406 = vrot.lane.b32.xlu0 %v178, 80
    %v407 = vpop.permute.xlu0 %406
    %v409 = vsel %vm186, %v405, 0
    %v412 = vsel %vm186, %v407, 0
    %414 = vmatprep.subr.bf16.mxu0 0
    %415 = vmatpush1.bf16.xpose.msra.mxu0 %v412
    %416 = vmatprep.subr.bf16.mxu0 0
    %417 = vmatpush1.bf16.xpose.msra.mxu0 0
    %418 = vmatprep.subr.bf16.mxu0 0
    %419 = vmatpush1.bf16.xpose.msra.mxu0 0
    %420 = vmatprep.subr.bf16.mxu0 0
    %421 = vmatpush1.bf16.xpose.msra.mxu0 0
    %422 = vmatprep.subr.bf16.mxu0 0
    %423 = vmatpush1.bf16.xpose.msra.mxu0 0
    %424 = vmatprep.subr.bf16.mxu0 0
    %425 = vmatpush1.bf16.xpose.msra.mxu0 0
    %426 = vmatprep.subr.bf16.mxu0 0
    %427 = vmatpush1.bf16.xpose.msra.mxu0 0
    %428 = vmatprep.subr.bf16.mxu0 0
    %429 = vmatpush1.bf16.xpose.msra.mxu0 0
    %430 = vmatprep.subr.bf16.mxu0 0
    %431 = vmatpush1.bf16.xpose.msra.mxu0 0
    %432 = vmatprep.subr.bf16.mxu0 0
    %433 = vmatpush1.bf16.xpose.msra.mxu0 0
    %434 = vmatprep.subr.bf16.mxu0 0
    %435 = vmatpush1.bf16.xpose.msra.mxu0 0
    %436 = vmatprep.subr.bf16.mxu0 0
    %437 = vmatpush1.bf16.xpose.msra.mxu0 0
    %438 = vmatprep.subr.bf16.mxu0 0
    %439 = vmatpush1.bf16.xpose.msra.mxu0 0
    %440 = vmatprep.subr.bf16.mxu0 0
    %441 = vmatpush1.bf16.xpose.msra.mxu0 0
    %442 = vmatprep.subr.bf16.mxu0 0
    %443 = vmatpush1.bf16.xpose.msra.mxu0 0
    %444 = vmatprep.subr.bf16.mxu0 0
    %445 = vmatpush1.bf16.xpose.msra.mxu0 0
    %446 = vmatprep.mubr.bf16.mxu0 0
    %447 = vmatmul.mubr.bf16.gmra.mrb[0].mxu0 %v409
    %v448 = vpop.f32.mrb[0].mxu0
    %v449 = vadd.f32 %v182, %v448
    %v450 = vpop.f32.mrb[0].mxu0
    %v451 = vpop.f32.mrb[0].mxu0
    %v452 = vpop.f32.mrb[0].mxu0
    %453 = vdwg.mxu0
    %v454 = vsel %vm186, %v449, -inf
    %455 = vmax.xlane.f32.xlu0 %v454
    %v456 = vpop.xlane.xlu0 %455
    %v457 = vsub.f32 %v449, %v456
    %v458 = vmul.f32 %v457, 1.442695
    %v459 = vpow.pop %v458
    %v460 = vsel %vm186, %v459, 0.0
    %461 = vadd.xlane.f32.xlu0 %v460
    %v462 = vpop.xlane.xlu0 %461
    %v463 = vrcp.pop %v462
    %v464 = vmul.f32 %v459, %v463
    %v465 = vpack.c.bf16 %v464, %v464
    %466 = vrot.lane.b32.xlu0 %v178, 48
    %v467 = vpop.permute.xlu0 %466
    %v469 = vsel %vm186, %v465, 0
    %v472 = vsel %vm250, %v467, 0
    %474 = vmatprep.subr.bf16.mxu0 0
    %475 = vmatpush1.bf16.msra.mxu0 %v472
    %476 = vmatprep.subr.bf16.mxu0 0
    %477 = vmatpush1.bf16.msra.mxu0 0
    %478 = vmatprep.subr.bf16.mxu0 0
    %479 = vmatpush1.bf16.msra.mxu0 0
    %480 = vmatprep.subr.bf16.mxu0 0
    %481 = vmatpush1.bf16.msra.mxu0 0
    %482 = vmatprep.subr.bf16.mxu0 0
    %483 = vmatpush1.bf16.msra.mxu0 0
    %484 = vmatprep.subr.bf16.mxu0 0
    %485 = vmatpush1.bf16.msra.mxu0 0
    %486 = vmatprep.subr.bf16.mxu0 0
    %487 = vmatpush1.bf16.msra.mxu0 0
    %488 = vmatprep.subr.bf16.mxu0 0
    %489 = vmatpush1.bf16.msra.mxu0 0
    %490 = vmatprep.subr.bf16.mxu0 0
    %491 = vmatpush1.bf16.msra.mxu0 0
    %492 = vmatprep.subr.bf16.mxu0 0
    %493 = vmatpush1.bf16.msra.mxu0 0
    %494 = vmatprep.subr.bf16.mxu0 0
    %495 = vmatpush1.bf16.msra.mxu0 0
    %496 = vmatprep.subr.bf16.mxu0 0
    %497 = vmatpush1.bf16.msra.mxu0 0
    %498 = vmatprep.subr.bf16.mxu0 0
    %499 = vmatpush1.bf16.msra.mxu0 0
    %500 = vmatprep.subr.bf16.mxu0 0
    %501 = vmatpush1.bf16.msra.mxu0 0
    %502 = vmatprep.subr.bf16.mxu0 0
    %503 = vmatpush1.bf16.msra.mxu0 0
    %504 = vmatprep.subr.bf16.mxu0 0
    %505 = vmatpush1.bf16.msra.mxu0 0
    %506 = vmatprep.mubr.bf16.mxu0 0
    %507 = vmatmul.mubr.bf16.gmra.mrb[0].mxu0 %v469
    %v508 = vpop.f32.mrb[0].mxu0
    %v509 = vadd.f32 0.0, %v508
    %v510 = vpop.f32.mrb[0].mxu0
    %v511 = vpop.f32.mrb[0].mxu0
    %v512 = vpop.f32.mrb[0].mxu0
    %513 = vdwg.mxu0
    %514 = vrot.lane.b32.xlu0 %v178, 104
    %v515 = vpop.permute.xlu0 %514
    %516 = vrot.lane.b32.xlu0 %v178, 72
    %v517 = vpop.permute.xlu0 %516
    %v519 = vsel %vm186, %v515, 0
    %v522 = vsel %vm186, %v517, 0
    %524 = vmatprep.subr.bf16.mxu0 0
    %525 = vmatpush1.bf16.xpose.msra.mxu0 %v522
    %526 = vmatprep.subr.bf16.mxu0 0
    %527 = vmatpush1.bf16.xpose.msra.mxu0 0
    %528 = vmatprep.subr.bf16.mxu0 0
    %529 = vmatpush1.bf16.xpose.msra.mxu0 0
    %530 = vmatprep.subr.bf16.mxu0 0
    %531 = vmatpush1.bf16.xpose.msra.mxu0 0
    %532 = vmatprep.subr.bf16.mxu0 0
    %533 = vmatpush1.bf16.xpose.msra.mxu0 0
    %534 = vmatprep.subr.bf16.mxu0 0
    %535 = vmatpush1.bf16.xpose.msra.mxu0 0
    %536 = vmatprep.subr.bf16.mxu0 0
    %537 = vmatpush1.bf16.xpose.msra.mxu0 0
    %538 = vmatprep.subr.bf16.mxu0 0
    %539 = vmatpush1.bf16.xpose.msra.mxu0 0
    %540 = vmatprep.subr.bf16.mxu0 0
    %541 = vmatpush1.bf16.xpose.msra.mxu0 0
    %542 = vmatprep.subr.bf16.mxu0 0
    %543 = vmatpush1.bf16.xpose.msra.mxu0 0
    %544 = vmatprep.subr.bf16.mxu0 0
    %545 = vmatpush1.bf16.xpose.msra.mxu0 0
    %546 = vmatprep.subr.bf16.mxu0 0
    %547 = vmatpush1.bf16.xpose.msra.mxu0 0
    %548 = vmatprep.subr.bf16.mxu0 0
    %549 = vmatpush1.bf16.xpose.msra.mxu0 0
    %550 = vmatprep.subr.bf16.mxu0 0
    %551 = vmatpush1.bf16.xpose.msra.mxu0 0
    %552 = vmatprep.subr.bf16.mxu0 0
    %553 = vmatpush1.bf16.xpose.msra.mxu0 0
    %554 = vmatprep.subr.bf16.mxu0 0
    %555 = vmatpush1.bf16.xpose.msra.mxu0 0
    %556 = vmatprep.mubr.bf16.mxu0 0
    %557 = vmatmul.mubr.bf16.gmra.mrb[0].mxu0 %v519
    %v558 = vpop.f32.mrb[0].mxu0
    %v559 = vadd.f32 %v182, %v558
    %v560 = vpop.f32.mrb[0].mxu0
    %v561 = vpop.f32.mrb[0].mxu0
    %v562 = vpop.f32.mrb[0].mxu0
    %563 = vdwg.mxu0
    %v564 = vsel %vm186, %v559, -inf
    %565 = vmax.xlane.f32.xlu0 %v564
    %v566 = vpop.xlane.xlu0 %565
    %v567 = vsub.f32 %v559, %v566
    %v568 = vmul.f32 %v567, 1.442695
    %v569 = vpow.pop %v568
    %v570 = vsel %vm186, %v569, 0.0
    %571 = vadd.xlane.f32.xlu0 %v570
    %v572 = vpop.xlane.xlu0 %571
    %v573 = vrcp.pop %v572
    %v574 = vmul.f32 %v569, %v573
    %v575 = vpack.c.bf16 %v574, %v574
    %576 = vrot.lane.b32.xlu0 %v178, 40
    %v577 = vpop.permute.xlu0 %576
    %v579 = vsel %vm186, %v575, 0
    %v582 = vsel %vm250, %v577, 0
    %584 = vmatprep.subr.bf16.mxu0 0
    %585 = vmatpush1.bf16.msra.mxu0 %v582
    %586 = vmatprep.subr.bf16.mxu0 0
    %587 = vmatpush1.bf16.msra.mxu0 0
    %588 = vmatprep.subr.bf16.mxu0 0
    %589 = vmatpush1.bf16.msra.mxu0 0
    %590 = vmatprep.subr.bf16.mxu0 0
    %591 = vmatpush1.bf16.msra.mxu0 0
    %592 = vmatprep.subr.bf16.mxu0 0
    %593 = vmatpush1.bf16.msra.mxu0 0
    %594 = vmatprep.subr.bf16.mxu0 0
    %595 = vmatpush1.bf16.msra.mxu0 0
    %596 = vmatprep.subr.bf16.mxu0 0
    %597 = vmatpush1.bf16.msra.mxu0 0
    %598 = vmatprep.subr.bf16.mxu0 0
    %599 = vmatpush1.bf16.msra.mxu0 0
    %600 = vmatprep.subr.bf16.mxu0 0
    %601 = vmatpush1.bf16.msra.mxu0 0
    %602 = vmatprep.subr.bf16.mxu0 0
    %603 = vmatpush1.bf16.msra.mxu0 0
    %604 = vmatprep.subr.bf16.mxu0 0
    %605 = vmatpush1.bf16.msra.mxu0 0
    %606 = vmatprep.subr.bf16.mxu0 0
    %607 = vmatpush1.bf16.msra.mxu0 0
    %608 = vmatprep.subr.bf16.mxu0 0
    %609 = vmatpush1.bf16.msra.mxu0 0
    %610 = vmatprep.subr.bf16.mxu0 0
    %611 = vmatpush1.bf16.msra.mxu0 0
    %612 = vmatprep.subr.bf16.mxu0 0
    %613 = vmatpush1.bf16.msra.mxu0 0
    %614 = vmatprep.subr.bf16.mxu0 0
    %615 = vmatpush1.bf16.msra.mxu0 0
    %616 = vmatprep.mubr.bf16.mxu0 0
    %617 = vmatmul.mubr.bf16.gmra.mrb[0].mxu0 %v579
    %v618 = vpop.f32.mrb[0].mxu0
    %v619 = vadd.f32 0.0, %v618
    %v620 = vpop.f32.mrb[0].mxu0
    %v621 = vpop.f32.mrb[0].mxu0
    %v622 = vpop.f32.mrb[0].mxu0
    %623 = vdwg.mxu0
    %625 = vrot.lane.b32.xlu0 %v399, 8
    %v626 = vpop.permute.xlu0 %625
    %629 = vrot.lane.b32.xlu0 %v509, 16
    %v630 = vpop.permute.xlu0 %629
    %633 = vrot.lane.b32.xlu0 %v619, 24
    %v634 = vpop.permute.xlu0 %633
    %v636 = vsel %vm186, %v289, %v626
    %vm637 = vcmask 130048
    %v638 = vsel %vm637, %v636, %v630
    %vm639 = vcmask 195584
    %v640 = vsel %vm639, %v638, %v634
    %v641 = vlaneseq
    %v642 = vshrl.u32 %v641, 7
    %v643 = vsub.s32 1, %v642
    %v644 = vrot.slane %v109, %v643
    %v645 = vrot.slane %v178, 4
    %646 = vrot.lane.b32.xlu0 %v645, 96
    %v647 = vpop.permute.xlu0 %646
    %v649 = vsel %vm186, %v645, 0
    %v652 = vsel %vm186, %v647, 0
    %654 = vmatprep.subr.bf16.mxu0 0
    %655 = vmatpush1.bf16.xpose.msra.mxu0 %v652
    %656 = vmatprep.subr.bf16.mxu0 0
    %657 = vmatpush1.bf16.xpose.msra.mxu0 0
    %658 = vmatprep.subr.bf16.mxu0 0
    %659 = vmatpush1.bf16.xpose.msra.mxu0 0
    %660 = vmatprep.subr.bf16.mxu0 0
    %661 = vmatpush1.bf16.xpose.msra.mxu0 0
    %662 = vmatprep.subr.bf16.mxu0 0
    %663 = vmatpush1.bf16.xpose.msra.mxu0 0
    %664 = vmatprep.subr.bf16.mxu0 0
    %665 = vmatpush1.bf16.xpose.msra.mxu0 0
    %666 = vmatprep.subr.bf16.mxu0 0
    %667 = vmatpush1.bf16.xpose.msra.mxu0 0
    %668 = vmatprep.subr.bf16.mxu0 0
    %669 = vmatpush1.bf16.xpose.msra.mxu0 0
    %670 = vmatprep.subr.bf16.mxu0 0
    %671 = vmatpush1.bf16.xpose.msra.mxu0 0
    %672 = vmatprep.subr.bf16.mxu0 0
    %673 = vmatpush1.bf16.xpose.msra.mxu0 0
    %674 = vmatprep.subr.bf16.mxu0 0
    %675 = vmatpush1.bf16.xpose.msra.mxu0 0
    %676 = vmatprep.subr.bf16.mxu0 0
    %677 = vmatpush1.bf16.xpose.msra.mxu0 0
    %678 = vmatprep.subr.bf16.mxu0 0
    %679 = vmatpush1.bf16.xpose.msra.mxu0 0
    %680 = vmatprep.subr.bf16.mxu0 0
    %681 = vmatpush1.bf16.xpose.msra.mxu0 0
    %682 = vmatprep.subr.bf16.mxu0 0
    %683 = vmatpush1.bf16.xpose.msra.mxu0 0
    %684 = vmatprep.subr.bf16.mxu0 0
    %685 = vmatpush1.bf16.xpose.msra.mxu0 0
    %686 = vmatprep.mubr.bf16.mxu0 0
    %687 = vmatmul.mubr.bf16.gmra.mrb[0].mxu0 %v649
    %v688 = vpop.f32.mrb[0].mxu0
    %v689 = vadd.f32 %v644, %v688
    %v690 = vpop.f32.mrb[0].mxu0
    %v691 = vpop.f32.mrb[0].mxu0
    %v692 = vpop.f32.mrb[0].mxu0
    %693 = vdwg.mxu0
    %v694 = vsel %vm186, %v689, -inf
    %695 = vmax.xlane.f32.xlu0 %v694
    %v696 = vpop.xlane.xlu0 %695
    %v697 = vsub.f32 %v689, %v696
    %v698 = vmul.f32 %v697, 1.442695
    %v699 = vpow.pop %v698
    %v700 = vsel %vm186, %v699, 0.0
    %701 = vadd.xlane.f32.xlu0 %v700
    %v702 = vpop.xlane.xlu0 %701
    %v703 = vrcp.pop %v702
    %v704 = vmul.f32 %v699, %v703
    %v705 = vpack.c.bf16 %v704, %v704
    %706 = vrot.lane.b32.xlu0 %v645, 64
    %v707 = vpop.permute.xlu0 %706
    %v709 = vsel %vm186, %v705, 0
    %v712 = vsel %vm250, %v707, 0
    %714 = vmatprep.subr.bf16.mxu0 0
    %715 = vmatpush1.bf16.msra.mxu0 %v712
    %716 = vmatprep.subr.bf16.mxu0 0
    %717 = vmatpush1.bf16.msra.mxu0 0
    %718 = vmatprep.subr.bf16.mxu0 0
    %719 = vmatpush1.bf16.msra.mxu0 0
    %720 = vmatprep.subr.bf16.mxu0 0
    %721 = vmatpush1.bf16.msra.mxu0 0
    %722 = vmatprep.subr.bf16.mxu0 0
    %723 = vmatpush1.bf16.msra.mxu0 0
    %724 = vmatprep.subr.bf16.mxu0 0
    %725 = vmatpush1.bf16.msra.mxu0 0
    %726 = vmatprep.subr.bf16.mxu0 0
    %727 = vmatpush1.bf16.msra.mxu0 0
    %728 = vmatprep.subr.bf16.mxu0 0
    %729 = vmatpush1.bf16.msra.mxu0 0
    %730 = vmatprep.subr.bf16.mxu0 0
    %731 = vmatpush1.bf16.msra.mxu0 0
    %732 = vmatprep.subr.bf16.mxu0 0
    %733 = vmatpush1.bf16.msra.mxu0 0
    %734 = vmatprep.subr.bf16.mxu0 0
    %735 = vmatpush1.bf16.msra.mxu0 0
    %736 = vmatprep.subr.bf16.mxu0 0
    %737 = vmatpush1.bf16.msra.mxu0 0
    %738 = vmatprep.subr.bf16.mxu0 0
    %739 = vmatpush1.bf16.msra.mxu0 0
    %740 = vmatprep.subr.bf16.mxu0 0
    %741 = vmatpush1.bf16.msra.mxu0 0
    %742 = vmatprep.subr.bf16.mxu0 0
    %743 = vmatpush1.bf16.msra.mxu0 0
    %744 = vmatprep.subr.bf16.mxu0 0
    %745 = vmatpush1.bf16.msra.mxu0 0
    %746 = vmatprep.mubr.bf16.mxu0 0
    %747 = vmatmul.mubr.bf16.gmra.mrb[0].mxu0 %v709
    %v748 = vpop.f32.mrb[0].mxu0
    %v749 = vadd.f32 0.0, %v748
    %v750 = vpop.f32.mrb[0].mxu0
    %v751 = vpop.f32.mrb[0].mxu0
    %v752 = vpop.f32.mrb[0].mxu0
    %753 = vdwg.mxu0
    %754 = vrot.lane.b32.xlu0 %v645, 120
    %v755 = vpop.permute.xlu0 %754
    %756 = vrot.lane.b32.xlu0 %v645, 88
    %v757 = vpop.permute.xlu0 %756
    %v759 = vsel %vm186, %v755, 0
    %v762 = vsel %vm186, %v757, 0
    %764 = vmatprep.subr.bf16.mxu0 0
    %765 = vmatpush1.bf16.xpose.msra.mxu0 %v762
    %766 = vmatprep.subr.bf16.mxu0 0
    %767 = vmatpush1.bf16.xpose.msra.mxu0 0
    %768 = vmatprep.subr.bf16.mxu0 0
    %769 = vmatpush1.bf16.xpose.msra.mxu0 0
    %770 = vmatprep.subr.bf16.mxu0 0
    %771 = vmatpush1.bf16.xpose.msra.mxu0 0
    %772 = vmatprep.subr.bf16.mxu0 0
    %773 = vmatpush1.bf16.xpose.msra.mxu0 0
    %774 = vmatprep.subr.bf16.mxu0 0
    %775 = vmatpush1.bf16.xpose.msra.mxu0 0
    %776 = vmatprep.subr.bf16.mxu0 0
    %777 = vmatpush1.bf16.xpose.msra.mxu0 0
    %778 = vmatprep.subr.bf16.mxu0 0
    %779 = vmatpush1.bf16.xpose.msra.mxu0 0
    %780 = vmatprep.subr.bf16.mxu0 0
    %781 = vmatpush1.bf16.xpose.msra.mxu0 0
    %782 = vmatprep.subr.bf16.mxu0 0
    %783 = vmatpush1.bf16.xpose.msra.mxu0 0
    %784 = vmatprep.subr.bf16.mxu0 0
    %785 = vmatpush1.bf16.xpose.msra.mxu0 0
    %786 = vmatprep.subr.bf16.mxu0 0
    %787 = vmatpush1.bf16.xpose.msra.mxu0 0
    %788 = vmatprep.subr.bf16.mxu0 0
    %789 = vmatpush1.bf16.xpose.msra.mxu0 0
    %790 = vmatprep.subr.bf16.mxu0 0
    %791 = vmatpush1.bf16.xpose.msra.mxu0 0
    %792 = vmatprep.subr.bf16.mxu0 0
    %793 = vmatpush1.bf16.xpose.msra.mxu0 0
    %794 = vmatprep.subr.bf16.mxu0 0
    %795 = vmatpush1.bf16.xpose.msra.mxu0 0
    %796 = vmatprep.mubr.bf16.mxu0 0
    %797 = vmatmul.mubr.bf16.gmra.mrb[0].mxu0 %v759
    %v798 = vpop.f32.mrb[0].mxu0
    %v799 = vadd.f32 %v644, %v798
    %v800 = vpop.f32.mrb[0].mxu0
    %v801 = vpop.f32.mrb[0].mxu0
    %v802 = vpop.f32.mrb[0].mxu0
    %803 = vdwg.mxu0
    %v804 = vsel %vm186, %v799, -inf
    %805 = vmax.xlane.f32.xlu0 %v804
    %v806 = vpop.xlane.xlu0 %805
    %v807 = vsub.f32 %v799, %v806
    %v808 = vmul.f32 %v807, 1.442695
    %v809 = vpow.pop %v808
    %v810 = vsel %vm186, %v809, 0.0
    %811 = vadd.xlane.f32.xlu0 %v810
    %v812 = vpop.xlane.xlu0 %811
    %v813 = vrcp.pop %v812
    %v814 = vmul.f32 %v809, %v813
    %v815 = vpack.c.bf16 %v814, %v814
    %816 = vrot.lane.b32.xlu0 %v645, 56
    %v817 = vpop.permute.xlu0 %816
    %v819 = vsel %vm186, %v815, 0
    %v822 = vsel %vm250, %v817, 0
    %824 = vmatprep.subr.bf16.mxu0 0
    %825 = vmatpush1.bf16.msra.mxu0 %v822
    %826 = vmatprep.subr.bf16.mxu0 0
    %827 = vmatpush1.bf16.msra.mxu0 0
    %828 = vmatprep.subr.bf16.mxu0 0
    %829 = vmatpush1.bf16.msra.mxu0 0
    %830 = vmatprep.subr.bf16.mxu0 0
    %831 = vmatpush1.bf16.msra.mxu0 0
    %832 = vmatprep.subr.bf16.mxu0 0
    %833 = vmatpush1.bf16.msra.mxu0 0
    %834 = vmatprep.subr.bf16.mxu0 0
    %835 = vmatpush1.bf16.msra.mxu0 0
    %836 = vmatprep.subr.bf16.mxu0 0
    %837 = vmatpush1.bf16.msra.mxu0 0
    %838 = vmatprep.subr.bf16.mxu0 0
    %839 = vmatpush1.bf16.msra.mxu0 0
    %840 = vmatprep.subr.bf16.mxu0 0
    %841 = vmatpush1.bf16.msra.mxu0 0
    %842 = vmatprep.subr.bf16.mxu0 0
    %843 = vmatpush1.bf16.msra.mxu0 0
    %844 = vmatprep.subr.bf16.mxu0 0
    %845 = vmatpush1.bf16.msra.mxu0 0
    %846 = vmatprep.subr.bf16.mxu0 0
    %847 = vmatpush1.bf16.msra.mxu0 0
    %848 = vmatprep.subr.bf16.mxu0 0
    %849 = vmatpush1.bf16.msra.mxu0 0
    %850 = vmatprep.subr.bf16.mxu0 0
    %851 = vmatpush1.bf16.msra.mxu0 0
    %852 = vmatprep.subr.bf16.mxu0 0
    %853 = vmatpush1.bf16.msra.mxu0 0
    %854 = vmatprep.subr.bf16.mxu0 0
    %855 = vmatpush1.bf16.msra.mxu0 0
    %856 = vmatprep.mubr.bf16.mxu0 0
    %857 = vmatmul.mubr.bf16.gmra.mrb[0].mxu0 %v819
    %v858 = vpop.f32.mrb[0].mxu0
    %v859 = vadd.f32 0.0, %v858
    %v860 = vpop.f32.mrb[0].mxu0
    %v861 = vpop.f32.mrb[0].mxu0
    %v862 = vpop.f32.mrb[0].mxu0
    %863 = vdwg.mxu0
    %864 = vrot.lane.b32.xlu0 %v645, 112
    %v865 = vpop.permute.xlu0 %864
    %866 = vrot.lane.b32.xlu0 %v645, 80
    %v867 = vpop.permute.xlu0 %866
    %v869 = vsel %vm186, %v865, 0
    %v872 = vsel %vm186, %v867, 0
    %874 = vmatprep.subr.bf16.mxu0 0
    %875 = vmatpush1.bf16.xpose.msra.mxu0 %v872
    %876 = vmatprep.subr.bf16.mxu0 0
    %877 = vmatpush1.bf16.xpose.msra.mxu0 0
    %878 = vmatprep.subr.bf16.mxu0 0
    %879 = vmatpush1.bf16.xpose.msra.mxu0 0
    %880 = vmatprep.subr.bf16.mxu0 0
    %881 = vmatpush1.bf16.xpose.msra.mxu0 0
    %882 = vmatprep.subr.bf16.mxu0 0
    %883 = vmatpush1.bf16.xpose.msra.mxu0 0
    %884 = vmatprep.subr.bf16.mxu0 0
    %885 = vmatpush1.bf16.xpose.msra.mxu0 0
    %886 = vmatprep.subr.bf16.mxu0 0
    %887 = vmatpush1.bf16.xpose.msra.mxu0 0
    %888 = vmatprep.subr.bf16.mxu0 0
    %889 = vmatpush1.bf16.xpose.msra.mxu0 0
    %890 = vmatprep.subr.bf16.mxu0 0
    %891 = vmatpush1.bf16.xpose.msra.mxu0 0
    %892 = vmatprep.subr.bf16.mxu0 0
    %893 = vmatpush1.bf16.xpose.msra.mxu0 0
    %894 = vmatprep.subr.bf16.mxu0 0
    %895 = vmatpush1.bf16.xpose.msra.mxu0 0
    %896 = vmatprep.subr.bf16.mxu0 0
    %897 = vmatpush1.bf16.xpose.msra.mxu0 0
    %898 = vmatprep.subr.bf16.mxu0 0
    %899 = vmatpush1.bf16.xpose.msra.mxu0 0
    %900 = vmatprep.subr.bf16.mxu0 0
    %901 = vmatpush1.bf16.xpose.msra.mxu0 0
    %902 = vmatprep.subr.bf16.mxu0 0
    %903 = vmatpush1.bf16.xpose.msra.mxu0 0
    %904 = vmatprep.subr.bf16.mxu0 0
    %905 = vmatpush1.bf16.xpose.msra.mxu0 0
    %906 = vmatprep.mubr.bf16.mxu0 0
    %907 = vmatmul.mubr.bf16.gmra.mrb[0].mxu0 %v869
    %v908 = vpop.f32.mrb[0].mxu0
    %v909 = vadd.f32 %v644, %v908
    %v910 = vpop.f32.mrb[0].mxu0
    %v911 = vpop.f32.mrb[0].mxu0
    %v912 = vpop.f32.mrb[0].mxu0
    %913 = vdwg.mxu0
    %v914 = vsel %vm186, %v909, -inf
    %915 = vmax.xlane.f32.xlu0 %v914
    %v916 = vpop.xlane.xlu0 %915
    %v917 = vsub.f32 %v909, %v916
    %v918 = vmul.f32 %v917, 1.442695
    %v919 = vpow.pop %v918
    %v920 = vsel %vm186, %v919, 0.0
    %921 = vadd.xlane.f32.xlu0 %v920
    %v922 = vpop.xlane.xlu0 %921
    %v923 = vrcp.pop %v922
    %v924 = vmul.f32 %v919, %v923
    %v925 = vpack.c.bf16 %v924, %v924
    %926 = vrot.lane.b32.xlu0 %v645, 48
    %v927 = vpop.permute.xlu0 %926
    %v929 = vsel %vm186, %v925, 0
    %v932 = vsel %vm250, %v927, 0
    %934 = vmatprep.subr.bf16.mxu0 0
    %935 = vmatpush1.bf16.msra.mxu0 %v932
    %936 = vmatprep.subr.bf16.mxu0 0
    %937 = vmatpush1.bf16.msra.mxu0 0
    %938 = vmatprep.subr.bf16.mxu0 0
    %939 = vmatpush1.bf16.msra.mxu0 0
    %940 = vmatprep.subr.bf16.mxu0 0
    %941 = vmatpush1.bf16.msra.mxu0 0
    %942 = vmatprep.subr.bf16.mxu0 0
    %943 = vmatpush1.bf16.msra.mxu0 0
    %944 = vmatprep.subr.bf16.mxu0 0
    %945 = vmatpush1.bf16.msra.mxu0 0
    %946 = vmatprep.subr.bf16.mxu0 0
    %947 = vmatpush1.bf16.msra.mxu0 0
    %948 = vmatprep.subr.bf16.mxu0 0
    %949 = vmatpush1.bf16.msra.mxu0 0
    %950 = vmatprep.subr.bf16.mxu0 0
    %951 = vmatpush1.bf16.msra.mxu0 0
    %952 = vmatprep.subr.bf16.mxu0 0
    %953 = vmatpush1.bf16.msra.mxu0 0
    %954 = vmatprep.subr.bf16.mxu0 0
    %955 = vmatpush1.bf16.msra.mxu0 0
    %956 = vmatprep.subr.bf16.mxu0 0
    %957 = vmatpush1.bf16.msra.mxu0 0
    %958 = vmatprep.subr.bf16.mxu0 0
    %959 = vmatpush1.bf16.msra.mxu0 0
    %960 = vmatprep.subr.bf16.mxu0 0
    %961 = vmatpush1.bf16.msra.mxu0 0
    %962 = vmatprep.subr.bf16.mxu0 0
    %963 = vmatpush1.bf16.msra.mxu0 0
    %964 = vmatprep.subr.bf16.mxu0 0
    %965 = vmatpush1.bf16.msra.mxu0 0
    %966 = vmatprep.mubr.bf16.mxu0 0
    %967 = vmatmul.mubr.bf16.gmra.mrb[0].mxu0 %v929
    %v968 = vpop.f32.mrb[0].mxu0
    %v969 = vadd.f32 0.0, %v968
    %v970 = vpop.f32.mrb[0].mxu0
    %v971 = vpop.f32.mrb[0].mxu0
    %v972 = vpop.f32.mrb[0].mxu0
    %973 = vdwg.mxu0
    %974 = vrot.lane.b32.xlu0 %v645, 104
    %v975 = vpop.permute.xlu0 %974
    %976 = vrot.lane.b32.xlu0 %v645, 72
    %v977 = vpop.permute.xlu0 %976
    %v979 = vsel %vm186, %v975, 0
    %v982 = vsel %vm186, %v977, 0
    %984 = vmatprep.subr.bf16.mxu0 0
    %985 = vmatpush1.bf16.xpose.msra.mxu0 %v982
    %986 = vmatprep.subr.bf16.mxu0 0
    %987 = vmatpush1.bf16.xpose.msra.mxu0 0
    %988 = vmatprep.subr.bf16.mxu0 0
    %989 = vmatpush1.bf16.xpose.msra.mxu0 0
    %990 = vmatprep.subr.bf16.mxu0 0
    %991 = vmatpush1.bf16.xpose.msra.mxu0 0
    %992 = vmatprep.subr.bf16.mxu0 0
    %993 = vmatpush1.bf16.xpose.msra.mxu0 0
    %994 = vmatprep.subr.bf16.mxu0 0
    %995 = vmatpush1.bf16.xpose.msra.mxu0 0
    %996 = vmatprep.subr.bf16.mxu0 0
    %997 = vmatpush1.bf16.xpose.msra.mxu0 0
    %998 = vmatprep.subr.bf16.mxu0 0
    %999 = vmatpush1.bf16.xpose.msra.mxu0 0
    %1000 = vmatprep.subr.bf16.mxu0 0
    %1001 = vmatpush1.bf16.xpose.msra.mxu0 0
    %1002 = vmatprep.subr.bf16.mxu0 0
    %1003 = vmatpush1.bf16.xpose.msra.mxu0 0
    %1004 = vmatprep.subr.bf16.mxu0 0
    %1005 = vmatpush1.bf16.xpose.msra.mxu0 0
    %1006 = vmatprep.subr.bf16.mxu0 0
    %1007 = vmatpush1.bf16.xpose.msra.mxu0 0
    %1008 = vmatprep.subr.bf16.mxu0 0
    %1009 = vmatpush1.bf16.xpose.msra.mxu0 0
    %1010 = vmatprep.subr.bf16.mxu0 0
    %1011 = vmatpush1.bf16.xpose.msra.mxu0 0
    %1012 = vmatprep.subr.bf16.mxu0 0
    %1013 = vmatpush1.bf16.xpose.msra.mxu0 0
    %1014 = vmatprep.subr.bf16.mxu0 0
    %1015 = vmatpush1.bf16.xpose.msra.mxu0 0
    %1016 = vmatprep.mubr.bf16.mxu0 0
    %1017 = vmatmul.mubr.bf16.gmra.mrb[0].mxu0 %v979
    %v1018 = vpop.f32.mrb[0].mxu0
    %v1019 = vadd.f32 %v644, %v1018
    %v1020 = vpop.f32.mrb[0].mxu0
    %v1021 = vpop.f32.mrb[0].mxu0
    %v1022 = vpop.f32.mrb[0].mxu0
    %1023 = vdwg.mxu0
    %v1024 = vsel %vm186, %v1019, -inf
    %1025 = vmax.xlane.f32.xlu0 %v1024
    %v1026 = vpop.xlane.xlu0 %1025
    %v1027 = vsub.f32 %v1019, %v1026
    %v1028 = vmul.f32 %v1027, 1.442695
    %v1029 = vpow.pop %v1028
    %v1030 = vsel %vm186, %v1029, 0.0
    %1031 = vadd.xlane.f32.xlu0 %v1030
    %v1032 = vpop.xlane.xlu0 %1031
    %v1033 = vrcp.pop %v1032
    %v1034 = vmul.f32 %v1029, %v1033
    %v1035 = vpack.c.bf16 %v1034, %v1034
    %1036 = vrot.lane.b32.xlu0 %v645, 40
    %v1037 = vpop.permute.xlu0 %1036
    %v1039 = vsel %vm186, %v1035, 0
    %v1042 = vsel %vm250, %v1037, 0
    %1044 = vmatprep.subr.bf16.mxu0 0
    %1045 = vmatpush1.bf16.msra.mxu0 %v1042
    %1046 = vmatprep.subr.bf16.mxu0 0
    %1047 = vmatpush1.bf16.msra.mxu0 0
    %1048 = vmatprep.subr.bf16.mxu0 0
    %1049 = vmatpush1.bf16.msra.mxu0 0
    %1050 = vmatprep.subr.bf16.mxu0 0
    %1051 = vmatpush1.bf16.msra.mxu0 0
    %1052 = vmatprep.subr.bf16.mxu0 0
    %1053 = vmatpush1.bf16.msra.mxu0 0
    %1054 = vmatprep.subr.bf16.mxu0 0
    %1055 = vmatpush1.bf16.msra.mxu0 0
    %1056 = vmatprep.subr.bf16.mxu0 0
    %1057 = vmatpush1.bf16.msra.mxu0 0
    %1058 = vmatprep.subr.bf16.mxu0 0
    %1059 = vmatpush1.bf16.msra.mxu0 0
    %1060 = vmatprep.subr.bf16.mxu0 0
    %1061 = vmatpush1.bf16.msra.mxu0 0
    %1062 = vmatprep.subr.bf16.mxu0 0
    %1063 = vmatpush1.bf16.msra.mxu0 0
    %1064 = vmatprep.subr.bf16.mxu0 0
    %1065 = vmatpush1.bf16.msra.mxu0 0
    %1066 = vmatprep.subr.bf16.mxu0 0
    %1067 = vmatpush1.bf16.msra.mxu0 0
    %1068 = vmatprep.subr.bf16.mxu0 0
    %1069 = vmatpush1.bf16.msra.mxu0 0
    %1070 = vmatprep.subr.bf16.mxu0 0
    %1071 = vmatpush1.bf16.msra.mxu0 0
    %1072 = vmatprep.subr.bf16.mxu0 0
    %1073 = vmatpush1.bf16.msra.mxu0 0
    %1074 = vmatprep.subr.bf16.mxu0 0
    %1075 = vmatpush1.bf16.msra.mxu0 0
    %1076 = vmatprep.mubr.bf16.mxu0 0
    %1077 = vmatmul.mubr.bf16.gmra.mrb[0].mxu0 %v1039
    %v1078 = vpop.f32.mrb[0].mxu0
    %v1079 = vadd.f32 0.0, %v1078
    %v1080 = vpop.f32.mrb[0].mxu0
    %v1081 = vpop.f32.mrb[0].mxu0
    %v1082 = vpop.f32.mrb[0].mxu0
    %1083 = vdwg.mxu0
    %1085 = vrot.lane.b32.xlu0 %v859, 8
    %v1086 = vpop.permute.xlu0 %1085
    %1089 = vrot.lane.b32.xlu0 %v969, 16
    %v1090 = vpop.permute.xlu0 %1089
    %1093 = vrot.lane.b32.xlu0 %v1079, 24
    %v1094 = vpop.permute.xlu0 %1093
    %v1096 = vsel %vm186, %v749, %v1086
    %v1097 = vsel %vm637, %v1096, %v1090
    %v1098 = vsel %vm639, %v1097, %v1094
    %v1099 = vld [vmem:[%s6] sm:$0xf]
    %v1100 = vld [vmem:[%s6 + $0x4] sm:$0xf]
    %v1101 = vld [vmem:[%s6 + $0x8] sm:$0xf]
    %v1102 = vld [vmem:[%s6 + $0xc] sm:$0xf]
    %v1103 = vpack.c.bf16 %v1098, %v640
    %v1104 = vld [vmem:[%s7] sm:$0x1]
    %v1106 = vlaneseq
    %v1107 = vshrl.u32 %v1106, 7
    %v1108 = vsub.s32 0, %v1107
    %v1109 = vrot.slane %v1104, %v1108
    %v1115 = vunpack.c.l.b16 %v1099
    %v1116 = vunpack.c.l.b16 %v1100
    %v1117 = vunpack.c.l.b16 %v1101
    %v1118 = vunpack.c.l.b16 %v1102
    %v1119 = vpack.c.b16 %v1116, %v1115
    %v1120 = vpack.c.b16 %v1118, %v1117
    %v1124 = vsel %vm65, %v1103, 0
    %1126 = vmatprep.subr.bf16.mxu0 0
    %1127 = vmatpush1.bf16.msra.mxu0 %v1119
    %1128 = vmatprep.subr.bf16.mxu0 0
    %1129 = vmatpush1.bf16.msra.mxu0 %v1120
    %1130 = vmatprep.subr.bf16.mxu0 0
    %1131 = vmatpush1.bf16.msra.mxu0 0
    %1132 = vmatprep.subr.bf16.mxu0 0
    %1133 = vmatpush1.bf16.msra.mxu0 0
    %1134 = vmatprep.subr.bf16.mxu0 0
    %1135 = vmatpush1.bf16.msra.mxu0 0
    %1136 = vmatprep.subr.bf16.mxu0 0
    %1137 = vmatpush1.bf16.msra.mxu0 0
    %1138 = vmatprep.subr.bf16.mxu0 0
    %1139 = vmatpush1.bf16.msra.mxu0 0
    %1140 = vmatprep.subr.bf16.mxu0 0
    %1141 = vmatpush1.bf16.msra.mxu0 0
    %1142 = vmatprep.subr.bf16.mxu0 0
    %1143 = vmatpush1.bf16.msra.mxu0 0
    %1144 = vmatprep.subr.bf16.mxu0 0
    %1145 = vmatpush1.bf16.msra.mxu0 0
    %1146 = vmatprep.subr.bf16.mxu0 0
    %1147 = vmatpush1.bf16.msra.mxu0 0
    %1148 = vmatprep.subr.bf16.mxu0 0
    %1149 = vmatpush1.bf16.msra.mxu0 0
    %1150 = vmatprep.subr.bf16.mxu0 0
    %1151 = vmatpush1.bf16.msra.mxu0 0
    %1152 = vmatprep.subr.bf16.mxu0 0
    %1153 = vmatpush1.bf16.msra.mxu0 0
    %1154 = vmatprep.subr.bf16.mxu0 0
    %1155 = vmatpush1.bf16.msra.mxu0 0
    %1156 = vmatprep.subr.bf16.mxu0 0
    %1157 = vmatpush1.bf16.msra.mxu0 0
    %1158 = vmatprep.mubr.bf16.mxu0 0
    %1159 = vmatmul.mubr.bf16.gmra.mrb[0].mxu0 %v1124
    %v1160 = vpop.f32.mrb[0].mxu0
    %v1161 = vadd.f32 %v1109, %v1160
    %v1162 = vpop.f32.mrb[0].mxu0
    %v1163 = vpop.f32.mrb[0].mxu0
    %v1164 = vadd.f32 %v1109, %v1163
    %v1165 = vpop.f32.mrb[0].mxu0
    %1166 = vdwg.mxu0
    %v1167 = vadd.f32 %v107, %v1161
    %v1168 = vadd.f32 %v108, %v1164
    %v1169 = vld [vmem:[%s8] sm:$0x1]
    %v1170 = vld [vmem:[%s9] sm:$0x1]
    %v1171 = vsel %vm65, %v1167, 0.0
    %1172 = vadd.xlane.f32.xlu0 %v1171
    %v1173 = vpop.xlane.xlu0 %1172
    %v1174 = vsel %vm65, %v1168, 0.0
    %1175 = vadd.xlane.f32.xlu0 %v1174
    %v1176 = vpop.xlane.xlu0 %1175
    %v1177 = vmul.f32 %v1173, %v72
    %v1178 = vmul.f32 %v1176, %v72
    %v1179 = vsub.f32 %v1167, %v1177
    %v1180 = vsub.f32 %v1168, %v1178
    %v1181 = vmul.f32 %v1179, %v1179
    %v1182 = vmul.f32 %v1180, %v1180
    %v1183 = vsel %vm65, %v1181, 0.0
    %1184 = vadd.xlane.f32.xlu0 %v1183
    %v1185 = vpop.xlane.xlu0 %1184
    %v1186 = vsel %vm65, %v1182, 0.0
    %1187 = vadd.xlane.f32.xlu0 %v1186
    %v1188 = vpop.xlane.xlu0 %1187
    %v1189 = vmul.f32 %v1185, %v72
    %v1190 = vmul.f32 %v1188, %v72
    %v1191 = vadd.f32 %v1189, 1e-12
    %v1192 = vadd.f32 %v1190, 1e-12
    %v1193 = vrsqrt.pop %v1191
    %v1194 = vrsqrt.pop %v1192
    %v1195 = vmul.f32 %v1179, %v1193
    %v1196 = vmul.f32 %v1180, %v1194
    %v1198 = vlaneseq
    %v1199 = vshrl.u32 %v1198, 7
    %v1200 = vsub.s32 0, %v1199
    %v1201 = vrot.slane %v1169, %v1200
    %v1203 = vmul.f32 %v1195, %v1201
    %v1204 = vmul.f32 %v1196, %v1201
    %v1206 = vlaneseq
    %v1207 = vshrl.u32 %v1206, 7
    %v1208 = vsub.s32 0, %v1207
    %v1209 = vrot.slane %v1170, %v1208
    %v1211 = vadd.f32 %v1203, %v1209
    %v1212 = vadd.f32 %v1204, %v1209
    %v1213 = vld [vmem:[%s10] sm:$0xf]
    %v1214 = vld [vmem:[%s10 + $0x4] sm:$0xf]
    %v1215 = vld [vmem:[%s10 + $0x8] sm:$0xf]
    %v1216 = vld [vmem:[%s10 + $0xc] sm:$0xf]
    %v1217 = vpack.c.bf16 %v1212, %v1211
    %v1218 = vld [vmem:[%s11] sm:$0x1]
    %v1220 = vlaneseq
    %v1221 = vshrl.u32 %v1220, 7
    %v1222 = vsub.s32 0, %v1221
    %v1223 = vrot.slane %v1218, %v1222
    %v1229 = vunpack.c.l.b16 %v1213
    %v1230 = vunpack.c.l.b16 %v1214
    %v1231 = vunpack.c.l.b16 %v1215
    %v1232 = vunpack.c.l.b16 %v1216
    %v1233 = vpack.c.b16 %v1230, %v1229
    %v1234 = vpack.c.b16 %v1232, %v1231
    %v1238 = vsel %vm65, %v1217, 0
    %1240 = vmatprep.subr.bf16.mxu0 0
    %1241 = vmatpush1.bf16.msra.mxu0 %v1233
    %1242 = vmatprep.subr.bf16.mxu0 0
    %1243 = vmatpush1.bf16.msra.mxu0 %v1234
    %1244 = vmatprep.subr.bf16.mxu0 0
    %1245 = vmatpush1.bf16.msra.mxu0 0
    %1246 = vmatprep.subr.bf16.mxu0 0
    %1247 = vmatpush1.bf16.msra.mxu0 0
    %1248 = vmatprep.subr.bf16.mxu0 0
    %1249 = vmatpush1.bf16.msra.mxu0 0
    %1250 = vmatprep.subr.bf16.mxu0 0
    %1251 = vmatpush1.bf16.msra.mxu0 0
    %1252 = vmatprep.subr.bf16.mxu0 0
    %1253 = vmatpush1.bf16.msra.mxu0 0
    %1254 = vmatprep.subr.bf16.mxu0 0
    %1255 = vmatpush1.bf16.msra.mxu0 0
    %1256 = vmatprep.subr.bf16.mxu0 0
    %1257 = vmatpush1.bf16.msra.mxu0 0
    %1258 = vmatprep.subr.bf16.mxu0 0
    %1259 = vmatpush1.bf16.msra.mxu0 0
    %1260 = vmatprep.subr.bf16.mxu0 0
    %1261 = vmatpush1.bf16.msra.mxu0 0
    %1262 = vmatprep.subr.bf16.mxu0 0
    %1263 = vmatpush1.bf16.msra.mxu0 0
    %1264 = vmatprep.subr.bf16.mxu0 0
    %1265 = vmatpush1.bf16.msra.mxu0 0
    %1266 = vmatprep.subr.bf16.mxu0 0
    %1267 = vmatpush1.bf16.msra.mxu0 0
    %1268 = vmatprep.subr.bf16.mxu0 0
    %1269 = vmatpush1.bf16.msra.mxu0 0
    %1270 = vmatprep.subr.bf16.mxu0 0
    %1271 = vmatpush1.bf16.msra.mxu0 0
    %1272 = vmatprep.mubr.bf16.mxu0 0
    %1273 = vmatmul.mubr.bf16.gmra.mrb[0].mxu0 %v1238
    %v1274 = vpop.f32.mrb[0].mxu0
    %v1275 = vadd.f32 %v1223, %v1274
    %v1276 = vpop.f32.mrb[0].mxu0
    %v1277 = vpop.f32.mrb[0].mxu0
    %v1278 = vadd.f32 %v1223, %v1277
    %v1279 = vpop.f32.mrb[0].mxu0
    %1280 = vdwg.mxu0
    %v1281 = vmul.f32 %v1275, 0.5
    %v1282 = vmul.f32 %v1278, 0.5
    %v1283 = vmul.f32 %v1275, 0.044715
    %v1284 = vmul.f32 %v1278, 0.044715
    %v1285 = vmul.f32 %v1283, %v1275
    %v1286 = vmul.f32 %v1284, %v1278
    %v1287 = vmul.f32 %v1285, %v1275
    %v1288 = vmul.f32 %v1286, %v1278
    %v1289 = vadd.f32 %v1275, %v1287
    %v1290 = vadd.f32 %v1278, %v1288
    %v1291 = vmul.f32 %v1289, 0.7978846
    %v1292 = vmul.f32 %v1290, 0.7978846
    %v1293 = vtanh.pop %v1291
    %v1294 = vtanh.pop %v1292
    %v1295 = vadd.f32 %v1293, 1.0
    %v1296 = vadd.f32 %v1294, 1.0
    %v1297 = vmul.f32 %v1281, %v1295
    %v1298 = vmul.f32 %v1282, %v1296
    %v1299 = vld [vmem:[%s12] sm:$0xf]
    %v1300 = vld [vmem:[%s12 + $0x4] sm:$0xf]
    %v1301 = vld [vmem:[%s12 + $0x8] sm:$0xf]
    %v1302 = vld [vmem:[%s12 + $0xc] sm:$0xf]
    %v1303 = vld [vmem:[%s12 + $0x10] sm:$0xf]
    %v1304 = vld [vmem:[%s12 + $0x14] sm:$0xf]
    %v1305 = vld [vmem:[%s12 + $0x18] sm:$0xf]
    %v1306 = vld [vmem:[%s12 + $0x1c] sm:$0xf]
    %v1307 = vld [vmem:[%s12 + $0x20] sm:$0xf]
    %v1308 = vld [vmem:[%s12 + $0x24] sm:$0xf]
    %v1309 = vld [vmem:[%s12 + $0x28] sm:$0xf]
    %v1310 = vld [vmem:[%s12 + $0x2c] sm:$0xf]
    %v1311 = vld [vmem:[%s12 + $0x30] sm:$0xf]
    %v1312 = vld [vmem:[%s12 + $0x34] sm:$0xf]
    %v1313 = vld [vmem:[%s12 + $0x38] sm:$0xf]
    %v1314 = vld [vmem:[%s12 + $0x3c] sm:$0xf]
    %v1315 = vpack.c.bf16 %v1298, %v1297
    %v1316 = vld [vmem:[%s13] sm:$0x1]
    %v1318 = vlaneseq
    %v1319 = vshrl.u32 %v1318, 7
    %v1320 = vsub.s32 0, %v1319
    %v1321 = vrot.slane %v1316, %v1320
    %v1339 = vunpack.c.l.b16 %v1299
    %v1340 = vunpack.c.l.b16 %v1300
    %v1341 = vunpack.c.l.b16 %v1301
    %v1342 = vunpack.c.l.b16 %v1302
    %v1343 = vunpack.c.l.b16 %v1303
    %v1344 = vunpack.c.l.b16 %v1304
    %v1345 = vunpack.c.l.b16 %v1305
    %v1346 = vunpack.c.l.b16 %v1306
    %v1347 = vunpack.c.l.b16 %v1307
    %v1348 = vunpack.c.l.b16 %v1308
    %v1349 = vunpack.c.l.b16 %v1309
    %v1350 = vunpack.c.l.b16 %v1310
    %v1351 = vunpack.c.l.b16 %v1311
    %v1352 = vunpack.c.l.b16 %v1312
    %v1353 = vunpack.c.l.b16 %v1313
    %v1354 = vunpack.c.l.b16 %v1314
    %v1355 = vpack.c.b16 %v1340, %v1339
    %v1356 = vpack.c.b16 %v1342, %v1341
    %v1357 = vpack.c.b16 %v1344, %v1343
    %v1358 = vpack.c.b16 %v1346, %v1345
    %v1359 = vpack.c.b16 %v1348, %v1347
    %v1360 = vpack.c.b16 %v1350, %v1349
    %v1361 = vpack.c.b16 %v1352, %v1351
    %v1362 = vpack.c.b16 %v1354, %v1353
    %1371 = vmatprep.subr.bf16.mxu0 0
    %1372 = vmatpush1.bf16.msra.mxu0 %v1355
    %1373 = vmatprep.subr.bf16.mxu0 0
    %1374 = vmatpush1.bf16.msra.mxu0 %v1356
    %1375 = vmatprep.subr.bf16.mxu0 0
    %1376 = vmatpush1.bf16.msra.mxu0 %v1357
    %1377 = vmatprep.subr.bf16.mxu0 0
    %1378 = vmatpush1.bf16.msra.mxu0 %v1358
    %1379 = vmatprep.subr.bf16.mxu0 0
    %1380 = vmatpush1.bf16.msra.mxu0 %v1359
    %1381 = vmatprep.subr.bf16.mxu0 0
    %1382 = vmatpush1.bf16.msra.mxu0 %v1360
    %1383 = vmatprep.subr.bf16.mxu0 0
    %1384 = vmatpush1.bf16.msra.mxu0 %v1361
    %1385 = vmatprep.subr.bf16.mxu0 0
    %1386 = vmatpush1.bf16.msra.mxu0 %v1362
    %1387 = vmatprep.subr.bf16.mxu0 0
    %1388 = vmatpush1.bf16.msra.mxu0 0
    %1389 = vmatprep.subr.bf16.mxu0 0
    %1390 = vmatpush1.bf16.msra.mxu0 0
    %1391 = vmatprep.subr.bf16.mxu0 0
    %1392 = vmatpush1.bf16.msra.mxu0 0
    %1393 = vmatprep.subr.bf16.mxu0 0
    %1394 = vmatpush1.bf16.msra.mxu0 0
    %1395 = vmatprep.subr.bf16.mxu0 0
    %1396 = vmatpush1.bf16.msra.mxu0 0
    %1397 = vmatprep.subr.bf16.mxu0 0
    %1398 = vmatpush1.bf16.msra.mxu0 0
    %1399 = vmatprep.subr.bf16.mxu0 0
    %1400 = vmatpush1.bf16.msra.mxu0 0
    %1401 = vmatprep.subr.bf16.mxu0 0
    %1402 = vmatpush1.bf16.msra.mxu0 0
    %1403 = vmatprep.mubr.bf16.mxu0 0
    %1404 = vmatmul.mubr.bf16.gmra.mrb[0].mxu0 %v1315
    %v1405 = vpop.f32.mrb[0].mxu0
    %v1406 = vadd.f32 %v1321, %v1405
    %v1407 = vpop.f32.mrb[0].mxu0
    %v1408 = vpop.f32.mrb[0].mxu0
    %v1409 = vadd.f32 %v1321, %v1408
    %v1410 = vpop.f32.mrb[0].mxu0
    %1411 = vdwg.mxu0
    %v1412 = vadd.f32 %v1211, %v1406
    %v1413 = vadd.f32 %v1212, %v1409
    %v1414 = vld [vmem:[%s14] sm:$0x1]
    %v1415 = vld [vmem:[%s15] sm:$0x1]
    %v1416 = vsel %vm65, %v1412, 0.0
    %1417 = vadd.xlane.f32.xlu0 %v1416
    %v1418 = vpop.xlane.xlu0 %1417
    %v1419 = vsel %vm65, %v1413, 0.0
    %1420 = vadd.xlane.f32.xlu0 %v1419
    %v1421 = vpop.xlane.xlu0 %1420
    %v1422 = vmul.f32 %v1418, %v72
    %v1423 = vmul.f32 %v1421, %v72
    %v1424 = vsub.f32 %v1412, %v1422
    %v1425 = vsub.f32 %v1413, %v1423
    %v1426 = vmul.f32 %v1424, %v1424
    %v1427 = vmul.f32 %v1425, %v1425
    %v1428 = vsel %vm65, %v1426, 0.0
    %1429 = vadd.xlane.f32.xlu0 %v1428
    %v1430 = vpop.xlane.xlu0 %1429
    %v1431 = vsel %vm65, %v1427, 0.0
    %1432 = vadd.xlane.f32.xlu0 %v1431
    %v1433 = vpop.xlane.xlu0 %1432
    %v1434 = vmul.f32 %v1430, %v72
    %v1435 = vmul.f32 %v1433, %v72
    %v1436 = vadd.f32 %v1434, 1e-12
    %v1437 = vadd.f32 %v1435, 1e-12
    %v1438 = vrsqrt.pop %v1436
    %v1439 = vrsqrt.pop %v1437
    %v1440 = vmul.f32 %v1424, %v1438
    %v1441 = vmul.f32 %v1425, %v1439
    %v1443 = vlaneseq
    %v1444 = vshrl.u32 %v1443, 7
    %v1445 = vsub.s32 0, %v1444
    %v1446 = vrot.slane %v1414, %v1445
    %v1448 = vmul.f32 %v1440, %v1446
    %v1449 = vmul.f32 %v1441, %v1446
    %v1451 = vlaneseq
    %v1452 = vshrl.u32 %v1451, 7
    %v1453 = vsub.s32 0, %v1452
    %v1454 = vrot.slane %v1415, %v1453
    %v1456 = vadd.f32 %v1448, %v1454
    %v1457 = vadd.f32 %v1449, %v1454
    %s1458 = scalar_lea.vmem %s4, 16
    %v1459 = vld [vmem:[%s1458] sm:$0xf]
    %v1460 = vld [vmem:[%s1458 + $0x4] sm:$0xf]
    %v1461 = vld [vmem:[%s1458 + $0x8] sm:$0xf]
    %v1462 = vld [vmem:[%s1458 + $0xc] sm:$0xf]
    %v1463 = vpack.c.bf16 %v1457, %v1456
    %s1464 = scalar_lea.vmem %s5, 1
    %v1465 = vld [vmem:[%s1464] sm:$0x1]
    %v1467 = vlaneseq
    %v1468 = vshrl.u32 %v1467, 7
    %v1469 = vsub.s32 0, %v1468
    %v1470 = vrot.slane %v1465, %v1469
    %v1476 = vunpack.c.l.b16 %v1459
    %v1477 = vunpack.c.l.b16 %v1460
    %v1478 = vunpack.c.l.b16 %v1461
    %v1479 = vunpack.c.l.b16 %v1462
    %v1480 = vpack.c.b16 %v1477, %v1476
    %v1481 = vpack.c.b16 %v1479, %v1478
    %v1485 = vsel %vm65, %v1463, 0
    %1487 = vmatprep.subr.bf16.mxu0 0
    %1488 = vmatpush1.bf16.msra.mxu0 %v1480
    %1489 = vmatprep.subr.bf16.mxu0 0
    %1490 = vmatpush1.bf16.msra.mxu0 %v1481
    %1491 = vmatprep.subr.bf16.mxu0 0
    %1492 = vmatpush1.bf16.msra.mxu0 0
    %1493 = vmatprep.subr.bf16.mxu0 0
    %1494 = vmatpush1.bf16.msra.mxu0 0
    %1495 = vmatprep.subr.bf16.mxu0 0
    %1496 = vmatpush1.bf16.msra.mxu0 0
    %1497 = vmatprep.subr.bf16.mxu0 0
    %1498 = vmatpush1.bf16.msra.mxu0 0
    %1499 = vmatprep.subr.bf16.mxu0 0
    %1500 = vmatpush1.bf16.msra.mxu0 0
    %1501 = vmatprep.subr.bf16.mxu0 0
    %1502 = vmatpush1.bf16.msra.mxu0 0
    %1503 = vmatprep.subr.bf16.mxu0 0
    %1504 = vmatpush1.bf16.msra.mxu0 0
    %1505 = vmatprep.subr.bf16.mxu0 0
    %1506 = vmatpush1.bf16.msra.mxu0 0
    %1507 = vmatprep.subr.bf16.mxu0 0
    %1508 = vmatpush1.bf16.msra.mxu0 0
    %1509 = vmatprep.subr.bf16.mxu0 0
    %1510 = vmatpush1.bf16.msra.mxu0 0
    %1511 = vmatprep.subr.bf16.mxu0 0
    %1512 = vmatpush1.bf16.msra.mxu0 0
    %1513 = vmatprep.subr.bf16.mxu0 0
    %1514 = vmatpush1.bf16.msra.mxu0 0
    %1515 = vmatprep.subr.bf16.mxu0 0
    %1516 = vmatpush1.bf16.msra.mxu0 0
    %1517 = vmatprep.subr.bf16.mxu0 0
    %1518 = vmatpush1.bf16.msra.mxu0 0
    %1519 = vmatprep.mubr.bf16.mxu0 0
    %1520 = vmatmul.mubr.bf16.gmra.mrb[0].mxu0 %v1485
    %v1521 = vpop.f32.mrb[0].mxu0
    %v1522 = vadd.f32 %v1470, %v1521
    %v1523 = vpop.f32.mrb[0].mxu0
    %v1524 = vpop.f32.mrb[0].mxu0
    %v1525 = vadd.f32 %v1470, %v1524
    %v1526 = vpop.f32.mrb[0].mxu0
    %1527 = vdwg.mxu0
    %v1528 = vpack.c.bf16 %v1525, %v1522
    %1530 = vrot.lane.b32.xlu0 %v1528, 96
    %v1531 = vpop.permute.xlu0 %1530
    %v1533 = vsel %vm186, %v1528, 0
    %v1536 = vsel %vm186, %v1531, 0
    %1538 = vmatprep.subr.bf16.mxu0 0
    %1539 = vmatpush1.bf16.xpose.msra.mxu0 %v1536
    %1540 = vmatprep.subr.bf16.mxu0 0
    %1541 = vmatpush1.bf16.xpose.msra.mxu0 0
    %1542 = vmatprep.subr.bf16.mxu0 0
    %1543 = vmatpush1.bf16.xpose.msra.mxu0 0
    %1544 = vmatprep.subr.bf16.mxu0 0
    %1545 = vmatpush1.bf16.xpose.msra.mxu0 0
    %1546 = vmatprep.subr.bf16.mxu0 0
    %1547 = vmatpush1.bf16.xpose.msra.mxu0 0
    %1548 = vmatprep.subr.bf16.mxu0 0
    %1549 = vmatpush1.bf16.xpose.msra.mxu0 0
    %1550 = vmatprep.subr.bf16.mxu0 0
    %1551 = vmatpush1.bf16.xpose.msra.mxu0 0
    %1552 = vmatprep.subr.bf16.mxu0 0
    %1553 = vmatpush1.bf16.xpose.msra.mxu0 0
    %1554 = vmatprep.subr.bf16.mxu0 0
    %1555 = vmatpush1.bf16.xpose.msra.mxu0 0
    %1556 = vmatprep.subr.bf16.mxu0 0
    %1557 = vmatpush1.bf16.xpose.msra.mxu0 0
    %1558 = vmatprep.subr.bf16.mxu0 0
    %1559 = vmatpush1.bf16.xpose.msra.mxu0 0
    %1560 = vmatprep.subr.bf16.mxu0 0
    %1561 = vmatpush1.bf16.xpose.msra.mxu0 0
    %1562 = vmatprep.subr.bf16.mxu0 0
    %1563 = vmatpush1.bf16.xpose.msra.mxu0 0
    %1564 = vmatprep.subr.bf16.mxu0 0
    %1565 = vmatpush1.bf16.xpose.msra.mxu0 0
    %1566 = vmatprep.subr.bf16.mxu0 0
    %1567 = vmatpush1.bf16.xpose.msra.mxu0 0
    %1568 = vmatprep.subr.bf16.mxu0 0
    %1569 = vmatpush1.bf16.xpose.msra.mxu0 0
    %1570 = vmatprep.mubr.bf16.mxu0 0
    %1571 = vmatmul.mubr.bf16.gmra.mrb[0].mxu0 %v1533
    %v1572 = vpop.f32.mrb[0].mxu0
    %v1573 = vadd.f32 %v182, %v1572
    %v1574 = vpop.f32.mrb[0].mxu0
    %v1575 = vpop.f32.mrb[0].mxu0
    %v1576 = vpop.f32.mrb[0].mxu0
    %1577 = vdwg.mxu0
    %v1578 = vsel %vm186, %v1573, -inf
    %1579 = vmax.xlane.f32.xlu0 %v1578
    %v1580 = vpop.xlane.xlu0 %1579
    %v1581 = vsub.f32 %v1573, %v1580
    %v1582 = vmul.f32 %v1581, 1.442695
    %v1583 = vpow.pop %v1582
    %v1584 = vsel %vm186, %v1583, 0.0
    %1585 = vadd.xlane.f32.xlu0 %v1584
    %v1586 = vpop.xlane.xlu0 %1585
    %v1587 = vrcp.pop %v1586
    %v1588 = vmul.f32 %v1583, %v1587
    %v1589 = vpack.c.bf16 %v1588, %v1588
    %1590 = vrot.lane.b32.xlu0 %v1528, 64
    %v1591 = vpop.permute.xlu0 %1590
    %v1593 = vsel %vm186, %v1589, 0
    %v1596 = vsel %vm250, %v1591, 0
    %1598 = vmatprep.subr.bf16.mxu0 0
    %1599 = vmatpush1.bf16.msra.mxu0 %v1596
    %1600 = vmatprep.subr.bf16.mxu0 0
    %1601 = vmatpush1.bf16.msra.mxu0 0
    %1602 = vmatprep.subr.bf16.mxu0 0
    %1603 = vmatpush1.bf16.msra.mxu0 0
    %1604 = vmatprep.subr.bf16.mxu0 0
    %1605 = vmatpush1.bf16.msra.mxu0 0
    %1606 = vmatprep.subr.bf16.mxu0 0
    %1607 = vmatpush1.bf16.msra.mxu0 0
    %1608 = vmatprep.subr.bf16.mxu0 0
    %1609 = vmatpush1.bf16.msra.mxu0 0
    %1610 = vmatprep.subr.bf16.mxu0 0
    %1611 = vmatpush1.bf16.msra.mxu0 0
    %1612 = vmatprep.subr.bf16.mxu0 0
    %1613 = vmatpush1.bf16.msra.mxu0 0
    %1614 = vmatprep.subr.bf16.mxu0 0
    %1615 = vmatpush1.bf16.msra.mxu0 0
    %1616 = vmatprep.subr.bf16.mxu0 0
    %1617 = vmatpush1.bf16.msra.mxu0 0
    %1618 = vmatprep.subr.bf16.mxu0 0
    %1619 = vmatpush1.bf16.msra.mxu0 0
    %1620 = vmatprep.subr.bf16.mxu0 0
    %1621 = vmatpush1.bf16.msra.mxu0 0
    %1622 = vmatprep.subr.bf16.mxu0 0
    %1623 = vmatpush1.bf16.msra.mxu0 0
    %1624 = vmatprep.subr.bf16.mxu0 0
    %1625 = vmatpush1.bf16.msra.mxu0 0
    %1626 = vmatprep.subr.bf16.mxu0 0
    %1627 = vmatpush1.bf16.msra.mxu0 0
    %1628 = vmatprep.subr.bf16.mxu0 0
    %1629 = vmatpush1.bf16.msra.mxu0 0
    %1630 = vmatprep.mubr.bf16.mxu0 0
    %1631 = vmatmul.mubr.bf16.gmra.mrb[0].mxu0 %v1593
    %v1632 = vpop.f32.mrb[0].mxu0
    %v1633 = vadd.f32 0.0, %v1632
    %v1634 = vpop.f32.mrb[0].mxu0
    %v1635 = vpop.f32.mrb[0].mxu0
    %v1636 = vpop.f32.mrb[0].mxu0
    %1637 = vdwg.mxu0
    %1638 = vrot.lane.b32.xlu0 %v1528, 120
    %v1639 = vpop.permute.xlu0 %1638
    %1640 = vrot.lane.b32.xlu0 %v1528, 88
    %v1641 = vpop.permute.xlu0 %1640
    %v1643 = vsel %vm186, %v1639, 0
    %v1646 = vsel %vm186, %v1641, 0
    %1648 = vmatprep.subr.bf16.mxu0 0
    %1649 = vmatpush1.bf16.xpose.msra.mxu0 %v1646
    %1650 = vmatprep.subr.bf16.mxu0 0
    %1651 = vmatpush1.bf16.xpose.msra.mxu0 0
    %1652 = vmatprep.subr.bf16.mxu0 0
    %1653 = vmatpush1.bf16.xpose.msra.mxu0 0
    %1654 = vmatprep.subr.bf16.mxu0 0
    %1655 = vmatpush1.bf16.xpose.msra.mxu0 0
    %1656 = vmatprep.subr.bf16.mxu0 0
    %1657 = vmatpush1.bf16.xpose.msra.mxu0 0
    %1658 = vmatprep.subr.bf16.mxu0 0
    %1659 = vmatpush1.bf16.xpose.msra.mxu0 0
    %1660 = vmatprep.subr.bf16.mxu0 0
    %1661 = vmatpush1.bf16.xpose.msra.mxu0 0
    %1662 = vmatprep.subr.bf16.mxu0 0
    %1663 = vmatpush1.bf16.xpose.msra.mxu0 0
    %1664 = vmatprep.subr.bf16.mxu0 0
    %1665 = vmatpush1.bf16.xpose.msra.mxu0 0
    %1666 = vmatprep.subr.bf16.mxu0 0
    %1667 = vmatpush1.bf16.xpose.msra.mxu0 0
    %1668 = vmatprep.subr.bf16.mxu0 0
    %1669 = vmatpush1.bf16.xpose.msra.mxu0 0
    %1670 = vmatprep.subr.bf16.mxu0 0
    %1671 = vmatpush1.bf16.xpose.msra.mxu0 0
    %1672 = vmatprep.subr.bf16.mxu0 0
    %1673 = vmatpush1.bf16.xpose.msra.mxu0 0
    %1674 = vmatprep.subr.bf16.mxu0 0
    %1675 = vmatpush1.bf16.xpose.msra.mxu0 0
    %1676 = vmatprep.subr.bf16.mxu0 0
    %1677 = vmatpush1.bf16.xpose.msra.mxu0 0
    %1678 = vmatprep.subr.bf16.mxu0 0
    %1679 = vmatpush1.bf16.xpose.msra.mxu0 0
    %1680 = vmatprep.mubr.bf16.mxu0 0
    %1681 = vmatmul.mubr.bf16.gmra.mrb[0].mxu0 %v1643
    %v1682 = vpop.f32.mrb[0].mxu0
    %v1683 = vadd.f32 %v182, %v1682
    %v1684 = vpop.f32.mrb[0].mxu0
    %v1685 = vpop.f32.mrb[0].mxu0
    %v1686 = vpop.f32.mrb[0].mxu0
    %1687 = vdwg.mxu0
    %v1688 = vsel %vm186, %v1683, -inf
    %1689 = vmax.xlane.f32.xlu0 %v1688
    %v1690 = vpop.xlane.xlu0 %1689
    %v1691 = vsub.f32 %v1683, %v1690
    %v1692 = vmul.f32 %v1691, 1.442695
    %v1693 = vpow.pop %v1692
    %v1694 = vsel %vm186, %v1693, 0.0
    %1695 = vadd.xlane.f32.xlu0 %v1694
    %v1696 = vpop.xlane.xlu0 %1695
    %v1697 = vrcp.pop %v1696
    %v1698 = vmul.f32 %v1693, %v1697
    %v1699 = vpack.c.bf16 %v1698, %v1698
    %1700 = vrot.lane.b32.xlu0 %v1528, 56
    %v1701 = vpop.permute.xlu0 %1700
    %v1703 = vsel %vm186, %v1699, 0
    %v1706 = vsel %vm250, %v1701, 0
    %1708 = vmatprep.subr.bf16.mxu0 0
    %1709 = vmatpush1.bf16.msra.mxu0 %v1706
    %1710 = vmatprep.subr.bf16.mxu0 0
    %1711 = vmatpush1.bf16.msra.mxu0 0
    %1712 = vmatprep.subr.bf16.mxu0 0
    %1713 = vmatpush1.bf16.msra.mxu0 0
    %1714 = vmatprep.subr.bf16.mxu0 0
    %1715 = vmatpush1.bf16.msra.mxu0 0
    %1716 = vmatprep.subr.bf16.mxu0 0
    %1717 = vmatpush1.bf16.msra.mxu0 0
    %1718 = vmatprep.subr.bf16.mxu0 0
    %1719 = vmatpush1.bf16.msra.mxu0 0
    %1720 = vmatprep.subr.bf16.mxu0 0
    %1721 = vmatpush1.bf16.msra.mxu0 0
    %1722 = vmatprep.subr.bf16.mxu0 0
    %1723 = vmatpush1.bf16.msra.mxu0 0
    %1724 = vmatprep.subr.bf16.mxu0 0
    %1725 = vmatpush1.bf16.msra.mxu0 0
    %1726 = vmatprep.subr.bf16.mxu0 0
    %1727 = vmatpush1.bf16.msra.mxu0 0
    %1728 = vmatprep.subr.bf16.mxu0 0
    %1729 = vmatpush1.bf16.msra.mxu0 0
    %1730 = vmatprep.subr.bf16.mxu0 0
    %1731 = vmatpush1.bf16.msra.mxu0 0
    %1732 = vmatprep.subr.bf16.mxu0 0
    %1733 = vmatpush1.bf16.msra.mxu0 0
    %1734 = vmatprep.subr.bf16.mxu0 0
    %1735 = vmatpush1.bf16.msra.mxu0 0
    %1736 = vmatprep.subr.bf16.mxu0 0
    %1737 = vmatpush1.bf16.msra.mxu0 0
    %1738 = vmatprep.subr.bf16.mxu0 0
    %1739 = vmatpush1.bf16.msra.mxu0 0
    %1740 = vmatprep.mubr.bf16.mxu0 0
    %1741 = vmatmul.mubr.bf16.gmra.mrb[0].mxu0 %v1703
    %v1742 = vpop.f32.mrb[0].mxu0
    %v1743 = vadd.f32 0.0, %v1742
    %v1744 = vpop.f32.mrb[0].mxu0
    %v1745 = vpop.f32.mrb[0].mxu0
    %v1746 = vpop.f32.mrb[0].mxu0
    %1747 = vdwg.mxu0
    %1748 = vrot.lane.b32.xlu0 %v1528, 112
    %v1749 = vpop.permute.xlu0 %1748
    %1750 = vrot.lane.b32.xlu0 %v1528, 80
    %v1751 = vpop.permute.xlu0 %1750
    %v1753 = vsel %vm186, %v1749, 0
    %v1756 = vsel %vm186, %v1751, 0
    %1758 = vmatprep.subr.bf16.mxu0 0
    %1759 = vmatpush1.bf16.xpose.msra.mxu0 %v1756
    %1760 = vmatprep.subr.bf16.mxu0 0
    %1761 = vmatpush1.bf16.xpose.msra.mxu0 0
    %1762 = vmatprep.subr.bf16.mxu0 0
    %1763 = vmatpush1.bf16.xpose.msra.mxu0 0
    %1764 = vmatprep.subr.bf16.mxu0 0
    %1765 = vmatpush1.bf16.xpose.msra.mxu0 0
    %1766 = vmatprep.subr.bf16.mxu0 0
    %1767 = vmatpush1.bf16.xpose.msra.mxu0 0
    %1768 = vmatprep.subr.bf16.mxu0 0
    %1769 = vmatpush1.bf16.xpose.msra.mxu0 0
    %1770 = vmatprep.subr.bf16.mxu0 0
    %1771 = vmatpush1.bf16.xpose.msra.mxu0 0
    %1772 = vmatprep.subr.bf16.mxu0 0
    %1773 = vmatpush1.bf16.xpose.msra.mxu0 0
    %1774 = vmatprep.subr.bf16.mxu0 0
    %1775 = vmatpush1.bf16.xpose.msra.mxu0 0
    %1776 = vmatprep.subr.bf16.mxu0 0
    %1777 = vmatpush1.bf16.xpose.msra.mxu0 0
    %1778 = vmatprep.subr.bf16.mxu0 0
    %1779 = vmatpush1.bf16.xpose.msra.mxu0 0
    %1780 = vmatprep.subr.bf16.mxu0 0
    %1781 = vmatpush1.bf16.xpose.msra.mxu0 0
    %1782 = vmatprep.subr.bf16.mxu0 0
    %1783 = vmatpush1.bf16.xpose.msra.mxu0 0
    %1784 = vmatprep.subr.bf16.mxu0 0
    %1785 = vmatpush1.bf16.xpose.msra.mxu0 0
    %1786 = vmatprep.subr.bf16.mxu0 0
    %1787 = vmatpush1.bf16.xpose.msra.mxu0 0
    %1788 = vmatprep.subr.bf16.mxu0 0
    %1789 = vmatpush1.bf16.xpose.msra.mxu0 0
    %1790 = vmatprep.mubr.bf16.mxu0 0
    %1791 = vmatmul.mubr.bf16.gmra.mrb[0].mxu0 %v1753
    %v1792 = vpop.f32.mrb[0].mxu0
    %v1793 = vadd.f32 %v182, %v1792
    %v1794 = vpop.f32.mrb[0].mxu0
    %v1795 = vpop.f32.mrb[0].mxu0
    %v1796 = vpop.f32.mrb[0].mxu0
    %1797 = vdwg.mxu0
    %v1798 = vsel %vm186, %v1793, -inf
    %1799 = vmax.xlane.f32.xlu0 %v1798
    %v1800 = vpop.xlane.xlu0 %1799
    %v1801 = vsub.f32 %v1793, %v1800
    %v1802 = vmul.f32 %v1801, 1.442695
    %v1803 = vpow.pop %v1802
    %v1804 = vsel %vm186, %v1803, 0.0
    %1805 = vadd.xlane.f32.xlu0 %v1804
    %v1806 = vpop.xlane.xlu0 %1805
    %v1807 = vrcp.pop %v1806
    %v1808 = vmul.f32 %v1803, %v1807
    %v1809 = vpack.c.bf16 %v1808, %v1808
    %1810 = vrot.lane.b32.xlu0 %v1528, 48
    %v1811 = vpop.permute.xlu0 %1810
    %v1813 = vsel %vm186, %v1809, 0
    %v1816 = vsel %vm250, %v1811, 0
    %1818 = vmatprep.subr.bf16.mxu0 0
    %1819 = vmatpush1.bf16.msra.mxu0 %v1816
    %1820 = vmatprep.subr.bf16.mxu0 0
    %1821 = vmatpush1.bf16.msra.mxu0 0
    %1822 = vmatprep.subr.bf16.mxu0 0
    %1823 = vmatpush1.bf16.msra.mxu0 0
    %1824 = vmatprep.subr.bf16.mxu0 0
    %1825 = vmatpush1.bf16.msra.mxu0 0
    %1826 = vmatprep.subr.bf16.mxu0 0
    %1827 = vmatpush1.bf16.msra.mxu0 0
    %1828 = vmatprep.subr.bf16.mxu0 0
    %1829 = vmatpush1.bf16.msra.mxu0 0
    %1830 = vmatprep.subr.bf16.mxu0 0
    %1831 = vmatpush1.bf16.msra.mxu0 0
    %1832 = vmatprep.subr.bf16.mxu0 0
    %1833 = vmatpush1.bf16.msra.mxu0 0
    %1834 = vmatprep.subr.bf16.mxu0 0
    %1835 = vmatpush1.bf16.msra.mxu0 0
    %1836 = vmatprep.subr.bf16.mxu0 0
    %1837 = vmatpush1.bf16.msra.mxu0 0
    %1838 = vmatprep.subr.bf16.mxu0 0
    %1839 = vmatpush1.bf16.msra.mxu0 0
    %1840 = vmatprep.subr.bf16.mxu0 0
    %1841 = vmatpush1.bf16.msra.mxu0 0
    %1842 = vmatprep.subr.bf16.mxu0 0
    %1843 = vmatpush1.bf16.msra.mxu0 0
    %1844 = vmatprep.subr.bf16.mxu0 0
    %1845 = vmatpush1.bf16.msra.mxu0 0
    %1846 = vmatprep.subr.bf16.mxu0 0
    %1847 = vmatpush1.bf16.msra.mxu0 0
    %1848 = vmatprep.subr.bf16.mxu0 0
    %1849 = vmatpush1.bf16.msra.mxu0 0
    %1850 = vmatprep.mubr.bf16.mxu0 0
    %1851 = vmatmul.mubr.bf16.gmra.mrb[0].mxu0 %v1813
    %v1852 = vpop.f32.mrb[0].mxu0
    %v1853 = vadd.f32 0.0, %v1852
    %v1854 = vpop.f32.mrb[0].mxu0
    %v1855 = vpop.f32.mrb[0].mxu0
    %v1856 = vpop.f32.mrb[0].mxu0
    %1857 = vdwg.mxu0
    %1858 = vrot.lane.b32.xlu0 %v1528, 104
    %v1859 = vpop.permute.xlu0 %1858
    %1860 = vrot.lane.b32.xlu0 %v1528, 72
    %v1861 = vpop.permute.xlu0 %1860
    %v1863 = vsel %vm186, %v1859, 0
    %v1866 = vsel %vm186, %v1861, 0
    %1868 = vmatprep.subr.bf16.mxu0 0
    %1869 = vmatpush1.bf16.xpose.msra.mxu0 %v1866
    %1870 = vmatprep.subr.bf16.mxu0 0
    %1871 = vmatpush1.bf16.xpose.msra.mxu0 0
    %1872 = vmatprep.subr.bf16.mxu0 0
    %1873 = vmatpush1.bf16.xpose.msra.mxu0 0
    %1874 = vmatprep.subr.bf16.mxu0 0
    %1875 = vmatpush1.bf16.xpose.msra.mxu0 0
    %1876 = vmatprep.subr.bf16.mxu0 0
    %1877 = vmatpush1.bf16.xpose.msra.mxu0 0
    %1878 = vmatprep.subr.bf16.mxu0 0
    %1879 = vmatpush1.bf16.xpose.msra.mxu0 0
    %1880 = vmatprep.subr.bf16.mxu0 0
    %1881 = vmatpush1.bf16.xpose.msra.mxu0 0
    %1882 = vmatprep.subr.bf16.mxu0 0
    %1883 = vmatpush1.bf16.xpose.msra.mxu0 0
    %1884 = vmatprep.subr.bf16.mxu0 0
    %1885 = vmatpush1.bf16.xpose.msra.mxu0 0
    %1886 = vmatprep.subr.bf16.mxu0 0
    %1887 = vmatpush1.bf16.xpose.msra.mxu0 0
    %1888 = vmatprep.subr.bf16.mxu0 0
    %1889 = vmatpush1.bf16.xpose.msra.mxu0 0
    %1890 = vmatprep.subr.bf16.mxu0 0
    %1891 = vmatpush1.bf16.xpose.msra.mxu0 0
    %1892 = vmatprep.subr.bf16.mxu0 0
    %1893 = vmatpush1.bf16.xpose.msra.mxu0 0
    %1894 = vmatprep.subr.bf16.mxu0 0
    %1895 = vmatpush1.bf16.xpose.msra.mxu0 0
    %1896 = vmatprep.subr.bf16.mxu0 0
    %1897 = vmatpush1.bf16.xpose.msra.mxu0 0
    %1898 = vmatprep.subr.bf16.mxu0 0
    %1899 = vmatpush1.bf16.xpose.msra.mxu0 0
    %1900 = vmatprep.mubr.bf16.mxu0 0
    %1901 = vmatmul.mubr.bf16.gmra.mrb[0].mxu0 %v1863
    %v1902 = vpop.f32.mrb[0].mxu0
    %v1903 = vadd.f32 %v182, %v1902
    %v1904 = vpop.f32.mrb[0].mxu0
    %v1905 = vpop.f32.mrb[0].mxu0
    %v1906 = vpop.f32.mrb[0].mxu0
    %1907 = vdwg.mxu0
    %v1908 = vsel %vm186, %v1903, -inf
    %1909 = vmax.xlane.f32.xlu0 %v1908
    %v1910 = vpop.xlane.xlu0 %1909
    %v1911 = vsub.f32 %v1903, %v1910
    %v1912 = vmul.f32 %v1911, 1.442695
    %v1913 = vpow.pop %v1912
    %v1914 = vsel %vm186, %v1913, 0.0
    %1915 = vadd.xlane.f32.xlu0 %v1914
    %v1916 = vpop.xlane.xlu0 %1915
    %v1917 = vrcp.pop %v1916
    %v1918 = vmul.f32 %v1913, %v1917
    %v1919 = vpack.c.bf16 %v1918, %v1918
    %1920 = vrot.lane.b32.xlu0 %v1528, 40
    %v1921 = vpop.permute.xlu0 %1920
    %v1923 = vsel %vm186, %v1919, 0
    %v1926 = vsel %vm250, %v1921, 0
    %1928 = vmatprep.subr.bf16.mxu0 0
    %1929 = vmatpush1.bf16.msra.mxu0 %v1926
    %1930 = vmatprep.subr.bf16.mxu0 0
    %1931 = vmatpush1.bf16.msra.mxu0 0
    %1932 = vmatprep.subr.bf16.mxu0 0
    %1933 = vmatpush1.bf16.msra.mxu0 0
    %1934 = vmatprep.subr.bf16.mxu0 0
    %1935 = vmatpush1.bf16.msra.mxu0 0
    %1936 = vmatprep.subr.bf16.mxu0 0
    %1937 = vmatpush1.bf16.msra.mxu0 0
    %1938 = vmatprep.subr.bf16.mxu0 0
    %1939 = vmatpush1.bf16.msra.mxu0 0
    %1940 = vmatprep.subr.bf16.mxu0 0
    %1941 = vmatpush1.bf16.msra.mxu0 0
    %1942 = vmatprep.subr.bf16.mxu0 0
    %1943 = vmatpush1.bf16.msra.mxu0 0
    %1944 = vmatprep.subr.bf16.mxu0 0
    %1945 = vmatpush1.bf16.msra.mxu0 0
    %1946 = vmatprep.subr.bf16.mxu0 0
    %1947 = vmatpush1.bf16.msra.mxu0 0
    %1948 = vmatprep.subr.bf16.mxu0 0
    %1949 = vmatpush1.bf16.msra.mxu0 0
    %1950 = vmatprep.subr.bf16.mxu0 0
    %1951 = vmatpush1.bf16.msra.mxu0 0
    %1952 = vmatprep.subr.bf16.mxu0 0
    %1953 = vmatpush1.bf16.msra.mxu0 0
    %1954 = vmatprep.subr.bf16.mxu0 0
    %1955 = vmatpush1.bf16.msra.mxu0 0
    %1956 = vmatprep.subr.bf16.mxu0 0
    %1957 = vmatpush1.bf16.msra.mxu0 0
    %1958 = vmatprep.subr.bf16.mxu0 0
    %1959 = vmatpush1.bf16.msra.mxu0 0
    %1960 = vmatprep.mubr.bf16.mxu0 0
    %1961 = vmatmul.mubr.bf16.gmra.mrb[0].mxu0 %v1923
    %v1962 = vpop.f32.mrb[0].mxu0
    %v1963 = vadd.f32 0.0, %v1962
    %v1964 = vpop.f32.mrb[0].mxu0
    %v1965 = vpop.f32.mrb[0].mxu0
    %v1966 = vpop.f32.mrb[0].mxu0
    %1967 = vdwg.mxu0
    %1969 = vrot.lane.b32.xlu0 %v1743, 8
    %v1970 = vpop.permute.xlu0 %1969
    %1973 = vrot.lane.b32.xlu0 %v1853, 16
    %v1974 = vpop.permute.xlu0 %1973
    %1977 = vrot.lane.b32.xlu0 %v1963, 24
    %v1978 = vpop.permute.xlu0 %1977
    %v1980 = vsel %vm186, %v1633, %v1970
    %v1981 = vsel %vm637, %v1980, %v1974
    %v1982 = vsel %vm639, %v1981, %v1978
    %v1983 = vrot.slane %v1528, 4
    %1984 = vrot.lane.b32.xlu0 %v1983, 96
    %v1985 = vpop.permute.xlu0 %1984
    %v1987 = vsel %vm186, %v1983, 0
    %v1990 = vsel %vm186, %v1985, 0
    %1992 = vmatprep.subr.bf16.mxu0 0
    %1993 = vmatpush1.bf16.xpose.msra.mxu0 %v1990
    %1994 = vmatprep.subr.bf16.mxu0 0
    %1995 = vmatpush1.bf16.xpose.msra.mxu0 0
    %1996 = vmatprep.subr.bf16.mxu0 0
    %1997 = vmatpush1.bf16.xpose.msra.mxu0 0
    %1998 = vmatprep.subr.bf16.mxu0 0
    %1999 = vmatpush1.bf16.xpose.msra.mxu0 0
    %2000 = vmatprep.subr.bf16.mxu0 0
    %2001 = vmatpush1.bf16.xpose.msra.mxu0 0
    %2002 = vmatprep.subr.bf16.mxu0 0
    %2003 = vmatpush1.bf16.xpose.msra.mxu0 0
    %2004 = vmatprep.subr.bf16.mxu0 0
    %2005 = vmatpush1.bf16.xpose.msra.mxu0 0
    %2006 = vmatprep.subr.bf16.mxu0 0
    %2007 = vmatpush1.bf16.xpose.msra.mxu0 0
    %2008 = vmatprep.subr.bf16.mxu0 0
    %2009 = vmatpush1.bf16.xpose.msra.mxu0 0
    %2010 = vmatprep.subr.bf16.mxu0 0
    %2011 = vmatpush1.bf16.xpose.msra.mxu0 0
    %2012 = vmatprep.subr.bf16.mxu0 0
    %2013 = vmatpush1.bf16.xpose.msra.mxu0 0
    %2014 = vmatprep.subr.bf16.mxu0 0
    %2015 = vmatpush1.bf16.xpose.msra.mxu0 0
    %2016 = vmatprep.subr.bf16.mxu0 0
    %2017 = vmatpush1.bf16.xpose.msra.mxu0 0
    %2018 = vmatprep.subr.bf16.mxu0 0
    %2019 = vmatpush1.bf16.xpose.msra.mxu0 0
    %2020 = vmatprep.subr.bf16.mxu0 0
    %2021 = vmatpush1.bf16.xpose.msra.mxu0 0
    %2022 = vmatprep.subr.bf16.mxu0 0
    %2023 = vmatpush1.bf16.xpose.msra.mxu0 0
    %2024 = vmatprep.mubr.bf16.mxu0 0
    %2025 = vmatmul.mubr.bf16.gmra.mrb[0].mxu0 %v1987
    %v2026 = vpop.f32.mrb[0].mxu0
    %v2027 = vadd.f32 %v644, %v2026
    %v2028 = vpop.f32.mrb[0].mxu0
    %v2029 = vpop.f32.mrb[0].mxu0
    %v2030 = vpop.f32.mrb[0].mxu0
    %2031 = vdwg.mxu0
    %v2032 = vsel %vm186, %v2027, -inf
    %2033 = vmax.xlane.f32.xlu0 %v2032
    %v2034 = vpop.xlane.xlu0 %2033
    %v2035 = vsub.f32 %v2027, %v2034
    %v2036 = vmul.f32 %v2035, 1.442695
    %v2037 = vpow.pop %v2036
    %v2038 = vsel %vm186, %v2037, 0.0
    %2039 = vadd.xlane.f32.xlu0 %v2038
    %v2040 = vpop.xlane.xlu0 %2039
    %v2041 = vrcp.pop %v2040
    %v2042 = vmul.f32 %v2037, %v2041
    %v2043 = vpack.c.bf16 %v2042, %v2042
    %2044 = vrot.lane.b32.xlu0 %v1983, 64
    %v2045 = vpop.permute.xlu0 %2044
    %v2047 = vsel %vm186, %v2043, 0
    %v2050 = vsel %vm250, %v2045, 0
    %2052 = vmatprep.subr.bf16.mxu0 0
    %2053 = vmatpush1.bf16.msra.mxu0 %v2050
    %2054 = vmatprep.subr.bf16.mxu0 0
    %2055 = vmatpush1.bf16.msra.mxu0 0
    %2056 = vmatprep.subr.bf16.mxu0 0
    %2057 = vmatpush1.bf16.msra.mxu0 0
    %2058 = vmatprep.subr.bf16.mxu0 0
    %2059 = vmatpush1.bf16.msra.mxu0 0
    %2060 = vmatprep.subr.bf16.mxu0 0
    %2061 = vmatpush1.bf16.msra.mxu0 0
    %2062 = vmatprep.subr.bf16.mxu0 0
    %2063 = vmatpush1.bf16.msra.mxu0 0
    %2064 = vmatprep.subr.bf16.mxu0 0
    %2065 = vmatpush1.bf16.msra.mxu0 0
    %2066 = vmatprep.subr.bf16.mxu0 0
    %2067 = vmatpush1.bf16.msra.mxu0 0
    %2068 = vmatprep.subr.bf16.mxu0 0
    %2069 = vmatpush1.bf16.msra.mxu0 0
    %2070 = vmatprep.subr.bf16.mxu0 0
    %2071 = vmatpush1.bf16.msra.mxu0 0
    %2072 = vmatprep.subr.bf16.mxu0 0
    %2073 = vmatpush1.bf16.msra.mxu0 0
    %2074 = vmatprep.subr.bf16.mxu0 0
    %2075 = vmatpush1.bf16.msra.mxu0 0
    %2076 = vmatprep.subr.bf16.mxu0 0
    %2077 = vmatpush1.bf16.msra.mxu0 0
    %2078 = vmatprep.subr.bf16.mxu0 0
    %2079 = vmatpush1.bf16.msra.mxu0 0
    %2080 = vmatprep.subr.bf16.mxu0 0
    %2081 = vmatpush1.bf16.msra.mxu0 0
    %2082 = vmatprep.subr.bf16.mxu0 0
    %2083 = vmatpush1.bf16.msra.mxu0 0
    %2084 = vmatprep.mubr.bf16.mxu0 0
    %2085 = vmatmul.mubr.bf16.gmra.mrb[0].mxu0 %v2047
    %v2086 = vpop.f32.mrb[0].mxu0
    %v2087 = vadd.f32 0.0, %v2086
    %v2088 = vpop.f32.mrb[0].mxu0
    %v2089 = vpop.f32.mrb[0].mxu0
    %v2090 = vpop.f32.mrb[0].mxu0
    %2091 = vdwg.mxu0
    %2092 = vrot.lane.b32.xlu0 %v1983, 120
    %v2093 = vpop.permute.xlu0 %2092
    %2094 = vrot.lane.b32.xlu0 %v1983, 88
    %v2095 = vpop.permute.xlu0 %2094
    %v2097 = vsel %vm186, %v2093, 0
    %v2100 = vsel %vm186, %v2095, 0
    %2102 = vmatprep.subr.bf16.mxu0 0
    %2103 = vmatpush1.bf16.xpose.msra.mxu0 %v2100
    %2104 = vmatprep.subr.bf16.mxu0 0
    %2105 = vmatpush1.bf16.xpose.msra.mxu0 0
    %2106 = vmatprep.subr.bf16.mxu0 0
    %2107 = vmatpush1.bf16.xpose.msra.mxu0 0
    %2108 = vmatprep.subr.bf16.mxu0 0
    %2109 = vmatpush1.bf16.xpose.msra.mxu0 0
    %2110 = vmatprep.subr.bf16.mxu0 0
    %2111 = vmatpush1.bf16.xpose.msra.mxu0 0
    %2112 = vmatprep.subr.bf16.mxu0 0
    %2113 = vmatpush1.bf16.xpose.msra.mxu0 0
    %2114 = vmatprep.subr.bf16.mxu0 0
    %2115 = vmatpush1.bf16.xpose.msra.mxu0 0
    %2116 = vmatprep.subr.bf16.mxu0 0
    %2117 = vmatpush1.bf16.xpose.msra.mxu0 0
    %2118 = vmatprep.subr.bf16.mxu0 0
    %2119 = vmatpush1.bf16.xpose.msra.mxu0 0
    %2120 = vmatprep.subr.bf16.mxu0 0
    %2121 = vmatpush1.bf16.xpose.msra.mxu0 0
    %2122 = vmatprep.subr.bf16.mxu0 0
    %2123 = vmatpush1.bf16.xpose.msra.mxu0 0
    %2124 = vmatprep.subr.bf16.mxu0 0
    %2125 = vmatpush1.bf16.xpose.msra.mxu0 0
    %2126 = vmatprep.subr.bf16.mxu0 0
    %2127 = vmatpush1.bf16.xpose.msra.mxu0 0
    %2128 = vmatprep.subr.bf16.mxu0 0
    %2129 = vmatpush1.bf16.xpose.msra.mxu0 0
    %2130 = vmatprep.subr.bf16.mxu0 0
    %2131 = vmatpush1.bf16.xpose.msra.mxu0 0
    %2132 = vmatprep.subr.bf16.mxu0 0
    %2133 = vmatpush1.bf16.xpose.msra.mxu0 0
    %2134 = vmatprep.mubr.bf16.mxu0 0
    %2135 = vmatmul.mubr.bf16.gmra.mrb[0].mxu0 %v2097
    %v2136 = vpop.f32.mrb[0].mxu0
    %v2137 = vadd.f32 %v644, %v2136
    %v2138 = vpop.f32.mrb[0].mxu0
    %v2139 = vpop.f32.mrb[0].mxu0
    %v2140 = vpop.f32.mrb[0].mxu0
    %2141 = vdwg.mxu0
    %v2142 = vsel %vm186, %v2137, -inf
    %2143 = vmax.xlane.f32.xlu0 %v2142
    %v2144 = vpop.xlane.xlu0 %2143
    %v2145 = vsub.f32 %v2137, %v2144
    %v2146 = vmul.f32 %v2145, 1.442695
    %v2147 = vpow.pop %v2146
    %v2148 = vsel %vm186, %v2147, 0.0
    %2149 = vadd.xlane.f32.xlu0 %v2148
    %v2150 = vpop.xlane.xlu0 %2149
    %v2151 = vrcp.pop %v2150
    %v2152 = vmul.f32 %v2147, %v2151
    %v2153 = vpack.c.bf16 %v2152, %v2152
    %2154 = vrot.lane.b32.xlu0 %v1983, 56
    %v2155 = vpop.permute.xlu0 %2154
    %v2157 = vsel %vm186, %v2153, 0
    %v2160 = vsel %vm250, %v2155, 0
    %2162 = vmatprep.subr.bf16.mxu0 0
    %2163 = vmatpush1.bf16.msra.mxu0 %v2160
    %2164 = vmatprep.subr.bf16.mxu0 0
    %2165 = vmatpush1.bf16.msra.mxu0 0
    %2166 = vmatprep.subr.bf16.mxu0 0
    %2167 = vmatpush1.bf16.msra.mxu0 0
    %2168 = vmatprep.subr.bf16.mxu0 0
    %2169 = vmatpush1.bf16.msra.mxu0 0
    %2170 = vmatprep.subr.bf16.mxu0 0
    %2171 = vmatpush1.bf16.msra.mxu0 0
    %2172 = vmatprep.subr.bf16.mxu0 0
    %2173 = vmatpush1.bf16.msra.mxu0 0
    %2174 = vmatprep.subr.bf16.mxu0 0
    %2175 = vmatpush1.bf16.msra.mxu0 0
    %2176 = vmatprep.subr.bf16.mxu0 0
    %2177 = vmatpush1.bf16.msra.mxu0 0
    %2178 = vmatprep.subr.bf16.mxu0 0
    %2179 = vmatpush1.bf16.msra.mxu0 0
    %2180 = vmatprep.subr.bf16.mxu0 0
    %2181 = vmatpush1.bf16.msra.mxu0 0
    %2182 = vmatprep.subr.bf16.mxu0 0
    %2183 = vmatpush1.bf16.msra.mxu0 0
    %2184 = vmatprep.subr.bf16.mxu0 0
    %2185 = vmatpush1.bf16.msra.mxu0 0
    %2186 = vmatprep.subr.bf16.mxu0 0
    %2187 = vmatpush1.bf16.msra.mxu0 0
    %2188 = vmatprep.subr.bf16.mxu0 0
    %2189 = vmatpush1.bf16.msra.mxu0 0
    %2190 = vmatprep.subr.bf16.mxu0 0
    %2191 = vmatpush1.bf16.msra.mxu0 0
    %2192 = vmatprep.subr.bf16.mxu0 0
    %2193 = vmatpush1.bf16.msra.mxu0 0
    %2194 = vmatprep.mubr.bf16.mxu0 0
    %2195 = vmatmul.mubr.bf16.gmra.mrb[0].mxu0 %v2157
    %v2196 = vpop.f32.mrb[0].mxu0
    %v2197 = vadd.f32 0.0, %v2196
    %v2198 = vpop.f32.mrb[0].mxu0
    %v2199 = vpop.f32.mrb[0].mxu0
    %v2200 = vpop.f32.mrb[0].mxu0
    %2201 = vdwg.mxu0
    %2202 = vrot.lane.b32.xlu0 %v1983, 112
    %v2203 = vpop.permute.xlu0 %2202
    %2204 = vrot.lane.b32.xlu0 %v1983, 80
    %v2205 = vpop.permute.xlu0 %2204
    %v2207 = vsel %vm186, %v2203, 0
    %v2210 = vsel %vm186, %v2205, 0
    %2212 = vmatprep.subr.bf16.mxu0 0
    %2213 = vmatpush1.bf16.xpose.msra.mxu0 %v2210
    %2214 = vmatprep.subr.bf16.mxu0 0
    %2215 = vmatpush1.bf16.xpose.msra.mxu0 0
    %2216 = vmatprep.subr.bf16.mxu0 0
    %2217 = vmatpush1.bf16.xpose.msra.mxu0 0
    %2218 = vmatprep.subr.bf16.mxu0 0
    %2219 = vmatpush1.bf16.xpose.msra.mxu0 0
    %2220 = vmatprep.subr.bf16.mxu0 0
    %2221 = vmatpush1.bf16.xpose.msra.mxu0 0
    %2222 = vmatprep.subr.bf16.mxu0 0
    %2223 = vmatpush1.bf16.xpose.msra.mxu0 0
    %2224 = vmatprep.subr.bf16.mxu0 0
    %2225 = vmatpush1.bf16.xpose.msra.mxu0 0
    %2226 = vmatprep.subr.bf16.mxu0 0
    %2227 = vmatpush1.bf16.xpose.msra.mxu0 0
    %2228 = vmatprep.subr.bf16.mxu0 0
    %2229 = vmatpush1.bf16.xpose.msra.mxu0 0
    %2230 = vmatprep.subr.bf16.mxu0 0
    %2231 = vmatpush1.bf16.xpose.msra.mxu0 0
    %2232 = vmatprep.subr.bf16.mxu0 0
    %2233 = vmatpush1.bf16.xpose.msra.mxu0 0
    %2234 = vmatprep.subr.bf16.mxu0 0
    %2235 = vmatpush1.bf16.xpose.msra.mxu0 0
    %2236 = vmatprep.subr.bf16.mxu0 0
    %2237 = vmatpush1.bf16.xpose.msra.mxu0 0
    %2238 = vmatprep.subr.bf16.mxu0 0
    %2239 = vmatpush1.bf16.xpose.msra.mxu0 0
    %2240 = vmatprep.subr.bf16.mxu0 0
    %2241 = vmatpush1.bf16.xpose.msra.mxu0 0
    %2242 = vmatprep.subr.bf16.mxu0 0
    %2243 = vmatpush1.bf16.xpose.msra.mxu0 0
    %2244 = vmatprep.mubr.bf16.mxu0 0
    %2245 = vmatmul.mubr.bf16.gmra.mrb[0].mxu0 %v2207
    %v2246 = vpop.f32.mrb[0].mxu0
    %v2247 = vadd.f32 %v644, %v2246
    %v2248 = vpop.f32.mrb[0].mxu0
    %v2249 = vpop.f32.mrb[0].mxu0
    %v2250 = vpop.f32.mrb[0].mxu0
    %2251 = vdwg.mxu0
    %v2252 = vsel %vm186, %v2247, -inf
    %2253 = vmax.xlane.f32.xlu0 %v2252
    %v2254 = vpop.xlane.xlu0 %2253
    %v2255 = vsub.f32 %v2247, %v2254
    %v2256 = vmul.f32 %v2255, 1.442695
    %v2257 = vpow.pop %v2256
    %v2258 = vsel %vm186, %v2257, 0.0
    %2259 = vadd.xlane.f32.xlu0 %v2258
    %v2260 = vpop.xlane.xlu0 %2259
    %v2261 = vrcp.pop %v2260
    %v2262 = vmul.f32 %v2257, %v2261
    %v2263 = vpack.c.bf16 %v2262, %v2262
    %2264 = vrot.lane.b32.xlu0 %v1983, 48
    %v2265 = vpop.permute.xlu0 %2264
    %v2267 = vsel %vm186, %v2263, 0
    %v2270 = vsel %vm250, %v2265, 0
    %2272 = vmatprep.subr.bf16.mxu0 0
    %2273 = vmatpush1.bf16.msra.mxu0 %v2270
    %2274 = vmatprep.subr.bf16.mxu0 0
    %2275 = vmatpush1.bf16.msra.mxu0 0
    %2276 = vmatprep.subr.bf16.mxu0 0
    %2277 = vmatpush1.bf16.msra.mxu0 0
    %2278 = vmatprep.subr.bf16.mxu0 0
    %2279 = vmatpush1.bf16.msra.mxu0 0
    %2280 = vmatprep.subr.bf16.mxu0 0
    %2281 = vmatpush1.bf16.msra.mxu0 0
    %2282 = vmatprep.subr.bf16.mxu0 0
    %2283 = vmatpush1.bf16.msra.mxu0 0
    %2284 = vmatprep.subr.bf16.mxu0 0
    %2285 = vmatpush1.bf16.msra.mxu0 0
    %2286 = vmatprep.subr.bf16.mxu0 0
    %2287 = vmatpush1.bf16.msra.mxu0 0
    %2288 = vmatprep.subr.bf16.mxu0 0
    %2289 = vmatpush1.bf16.msra.mxu0 0
    %2290 = vmatprep.subr.bf16.mxu0 0
    %2291 = vmatpush1.bf16.msra.mxu0 0
    %2292 = vmatprep.subr.bf16.mxu0 0
    %2293 = vmatpush1.bf16.msra.mxu0 0
    %2294 = vmatprep.subr.bf16.mxu0 0
    %2295 = vmatpush1.bf16.msra.mxu0 0
    %2296 = vmatprep.subr.bf16.mxu0 0
    %2297 = vmatpush1.bf16.msra.mxu0 0
    %2298 = vmatprep.subr.bf16.mxu0 0
    %2299 = vmatpush1.bf16.msra.mxu0 0
    %2300 = vmatprep.subr.bf16.mxu0 0
    %2301 = vmatpush1.bf16.msra.mxu0 0
    %2302 = vmatprep.subr.bf16.mxu0 0
    %2303 = vmatpush1.bf16.msra.mxu0 0
    %2304 = vmatprep.mubr.bf16.mxu0 0
    %2305 = vmatmul.mubr.bf16.gmra.mrb[0].mxu0 %v2267
    %v2306 = vpop.f32.mrb[0].mxu0
    %v2307 = vadd.f32 0.0, %v2306
    %v2308 = vpop.f32.mrb[0].mxu0
    %v2309 = vpop.f32.mrb[0].mxu0
    %v2310 = vpop.f32.mrb[0].mxu0
    %2311 = vdwg.mxu0
    %2312 = vrot.lane.b32.xlu0 %v1983, 104
    %v2313 = vpop.permute.xlu0 %2312
    %2314 = vrot.lane.b32.xlu0 %v1983, 72
    %v2315 = vpop.permute.xlu0 %2314
    %v2317 = vsel %vm186, %v2313, 0
    %v2320 = vsel %vm186, %v2315, 0
    %2322 = vmatprep.subr.bf16.mxu0 0
    %2323 = vmatpush1.bf16.xpose.msra.mxu0 %v2320
    %2324 = vmatprep.subr.bf16.mxu0 0
    %2325 = vmatpush1.bf16.xpose.msra.mxu0 0
    %2326 = vmatprep.subr.bf16.mxu0 0
    %2327 = vmatpush1.bf16.xpose.msra.mxu0 0
    %2328 = vmatprep.subr.bf16.mxu0 0
    %2329 = vmatpush1.bf16.xpose.msra.mxu0 0
    %2330 = vmatprep.subr.bf16.mxu0 0
    %2331 = vmatpush1.bf16.xpose.msra.mxu0 0
    %2332 = vmatprep.subr.bf16.mxu0 0
    %2333 = vmatpush1.bf16.xpose.msra.mxu0 0
    %2334 = vmatprep.subr.bf16.mxu0 0
    %2335 = vmatpush1.bf16.xpose.msra.mxu0 0
    %2336 = vmatprep.subr.bf16.mxu0 0
    %2337 = vmatpush1.bf16.xpose.msra.mxu0 0
    %2338 = vmatprep.subr.bf16.mxu0 0
    %2339 = vmatpush1.bf16.xpose.msra.mxu0 0
    %2340 = vmatprep.subr.bf16.mxu0 0
    %2341 = vmatpush1.bf16.xpose.msra.mxu0 0
    %2342 = vmatprep.subr.bf16.mxu0 0
    %2343 = vmatpush1.bf16.xpose.msra.mxu0 0
    %2344 = vmatprep.subr.bf16.mxu0 0
    %2345 = vmatpush1.bf16.xpose.msra.mxu0 0
    %2346 = vmatprep.subr.bf16.mxu0 0
    %2347 = vmatpush1.bf16.xpose.msra.mxu0 0
    %2348 = vmatprep.subr.bf16.mxu0 0
    %2349 = vmatpush1.bf16.xpose.msra.mxu0 0
    %2350 = vmatprep.subr.bf16.mxu0 0
    %2351 = vmatpush1.bf16.xpose.msra.mxu0 0
    %2352 = vmatprep.subr.bf16.mxu0 0
    %2353 = vmatpush1.bf16.xpose.msra.mxu0 0
    %2354 = vmatprep.mubr.bf16.mxu0 0
    %2355 = vmatmul.mubr.bf16.gmra.mrb[0].mxu0 %v2317
    %v2356 = vpop.f32.mrb[0].mxu0
    %v2357 = vadd.f32 %v644, %v2356
    %v2358 = vpop.f32.mrb[0].mxu0
    %v2359 = vpop.f32.mrb[0].mxu0
    %v2360 = vpop.f32.mrb[0].mxu0
    %2361 = vdwg.mxu0
    %v2362 = vsel %vm186, %v2357, -inf
    %2363 = vmax.xlane.f32.xlu0 %v2362
    %v2364 = vpop.xlane.xlu0 %2363
    %v2365 = vsub.f32 %v2357, %v2364
    %v2366 = vmul.f32 %v2365, 1.442695
    %v2367 = vpow.pop %v2366
    %v2368 = vsel %vm186, %v2367, 0.0
    %2369 = vadd.xlane.f32.xlu0 %v2368
    %v2370 = vpop.xlane.xlu0 %2369
    %v2371 = vrcp.pop %v2370
    %v2372 = vmul.f32 %v2367, %v2371
    %v2373 = vpack.c.bf16 %v2372, %v2372
    %2374 = vrot.lane.b32.xlu0 %v1983, 40
    %v2375 = vpop.permute.xlu0 %2374
    %v2377 = vsel %vm186, %v2373, 0
    %v2380 = vsel %vm250, %v2375, 0
    %2382 = vmatprep.subr.bf16.mxu0 0
    %2383 = vmatpush1.bf16.msra.mxu0 %v2380
    %2384 = vmatprep.subr.bf16.mxu0 0
    %2385 = vmatpush1.bf16.msra.mxu0 0
    %2386 = vmatprep.subr.bf16.mxu0 0
    %2387 = vmatpush1.bf16.msra.mxu0 0
    %2388 = vmatprep.subr.bf16.mxu0 0
    %2389 = vmatpush1.bf16.msra.mxu0 0
    %2390 = vmatprep.subr.bf16.mxu0 0
    %2391 = vmatpush1.bf16.msra.mxu0 0
    %2392 = vmatprep.subr.bf16.mxu0 0
    %2393 = vmatpush1.bf16.msra.mxu0 0
    %2394 = vmatprep.subr.bf16.mxu0 0
    %2395 = vmatpush1.bf16.msra.mxu0 0
    %2396 = vmatprep.subr.bf16.mxu0 0
    %2397 = vmatpush1.bf16.msra.mxu0 0
    %2398 = vmatprep.subr.bf16.mxu0 0
    %2399 = vmatpush1.bf16.msra.mxu0 0
    %2400 = vmatprep.subr.bf16.mxu0 0
    %2401 = vmatpush1.bf16.msra.mxu0 0
    %2402 = vmatprep.subr.bf16.mxu0 0
    %2403 = vmatpush1.bf16.msra.mxu0 0
    %2404 = vmatprep.subr.bf16.mxu0 0
    %2405 = vmatpush1.bf16.msra.mxu0 0
    %2406 = vmatprep.subr.bf16.mxu0 0
    %2407 = vmatpush1.bf16.msra.mxu0 0
    %2408 = vmatprep.subr.bf16.mxu0 0
    %2409 = vmatpush1.bf16.msra.mxu0 0
    %2410 = vmatprep.subr.bf16.mxu0 0
    %2411 = vmatpush1.bf16.msra.mxu0 0
    %2412 = vmatprep.subr.bf16.mxu0 0
    %2413 = vmatpush1.bf16.msra.mxu0 0
    %2414 = vmatprep.mubr.bf16.mxu0 0
    %2415 = vmatmul.mubr.bf16.gmra.mrb[0].mxu0 %v2377
    %v2416 = vpop.f32.mrb[0].mxu0
    %v2417 = vadd.f32 0.0, %v2416
    %v2418 = vpop.f32.mrb[0].mxu0
    %v2419 = vpop.f32.mrb[0].mxu0
    %v2420 = vpop.f32.mrb[0].mxu0
    %2421 = vdwg.mxu0
    %2423 = vrot.lane.b32.xlu0 %v2197, 8
    %v2424 = vpop.permute.xlu0 %2423
    %2427 = vrot.lane.b32.xlu0 %v2307, 16
    %v2428 = vpop.permute.xlu0 %2427
    %2431 = vrot.lane.b32.xlu0 %v2417, 24
    %v2432 = vpop.permute.xlu0 %2431
    %v2434 = vsel %vm186, %v2087, %v2424
    %v2435 = vsel %vm637, %v2434, %v2428
    %v2436 = vsel %vm639, %v2435, %v2432
    %s2437 = scalar_lea.vmem %s6, 16
    %v2438 = vld [vmem:[%s2437] sm:$0xf]
    %v2439 = vld [vmem:[%s2437 + $0x4] sm:$0xf]
    %v2440 = vld [vmem:[%s2437 + $0x8] sm:$0xf]
    %v2441 = vld [vmem:[%s2437 + $0xc] sm:$0xf]
    %v2442 = vpack.c.bf16 %v2436, %v1982
    %s2443 = scalar_lea.vmem %s7, 1
    %v2444 = vld [vmem:[%s2443] sm:$0x1]
    %v2446 = vlaneseq
    %v2447 = vshrl.u32 %v2446, 7
    %v2448 = vsub.s32 0, %v2447
    %v2449 = vrot.slane %v2444, %v2448
    %v2455 = vunpack.c.l.b16 %v2438
    %v2456 = vunpack.c.l.b16 %v2439
    %v2457 = vunpack.c.l.b16 %v2440
    %v2458 = vunpack.c.l.b16 %v2441
    %v2459 = vpack.c.b16 %v2456, %v2455
    %v2460 = vpack.c.b16 %v2458, %v2457
    %v2464 = vsel %vm65, %v2442, 0
    %2466 = vmatprep.subr.bf16.mxu0 0
    %2467 = vmatpush1.bf16.msra.mxu0 %v2459
    %2468 = vmatprep.subr.bf16.mxu0 0
    %2469 = vmatpush1.bf16.msra.mxu0 %v2460
    %2470 = vmatprep.subr.bf16.mxu0 0
    %2471 = vmatpush1.bf16.msra.mxu0 0
    %2472 = vmatprep.subr.bf16.mxu0 0
    %2473 = vmatpush1.bf16.msra.mxu0 0
    %2474 = vmatprep.subr.bf16.mxu0 0
    %2475 = vmatpush1.bf16.msra.mxu0 0
    %2476 = vmatprep.subr.bf16.mxu0 0
    %2477 = vmatpush1.bf16.msra.mxu0 0
    %2478 = vmatprep.subr.bf16.mxu0 0
    %2479 = vmatpush1.bf16.msra.mxu0 0
    %2480 = vmatprep.subr.bf16.mxu0 0
    %2481 = vmatpush1.bf16.msra.mxu0 0
    %2482 = vmatprep.subr.bf16.mxu0 0
    %2483 = vmatpush1.bf16.msra.mxu0 0
    %2484 = vmatprep.subr.bf16.mxu0 0
    %2485 = vmatpush1.bf16.msra.mxu0 0
    %2486 = vmatprep.subr.bf16.mxu0 0
    %2487 = vmatpush1.bf16.msra.mxu0 0
    %2488 = vmatprep.subr.bf16.mxu0 0
    %2489 = vmatpush1.bf16.msra.mxu0 0
    %2490 = vmatprep.subr.bf16.mxu0 0
    %2491 = vmatpush1.bf16.msra.mxu0 0
    %2492 = vmatprep.subr.bf16.mxu0 0
    %2493 = vmatpush1.bf16.msra.mxu0 0
    %2494 = vmatprep.subr.bf16.mxu0 0
    %2495 = vmatpush1.bf16.msra.mxu0 0
    %2496 = vmatprep.subr.bf16.mxu0 0
    %2497 = vmatpush1.bf16.msra.mxu0 0
    %2498 = vmatprep.mubr.bf16.mxu0 0
    %2499 = vmatmul.mubr.bf16.gmra.mrb[0].mxu0 %v2464
    %v2500 = vpop.f32.mrb[0].mxu0
    %v2501 = vadd.f32 %v2449, %v2500
    %v2502 = vpop.f32.mrb[0].mxu0
    %v2503 = vpop.f32.mrb[0].mxu0
    %v2504 = vadd.f32 %v2449, %v2503
    %v2505 = vpop.f32.mrb[0].mxu0
    %2506 = vdwg.mxu0
    %v2507 = vadd.f32 %v1456, %v2501
    %v2508 = vadd.f32 %v1457, %v2504
    %s2509 = scalar_lea.vmem %s8, 1
    %v2510 = vld [vmem:[%s2509] sm:$0x1]
    %s2511 = scalar_lea.vmem %s9, 1
    %v2512 = vld [vmem:[%s2511] sm:$0x1]
    %v2513 = vsel %vm65, %v2507, 0.0
    %2514 = vadd.xlane.f32.xlu0 %v2513
    %v2515 = vpop.xlane.xlu0 %2514
    %v2516 = vsel %vm65, %v2508, 0.0
    %2517 = vadd.xlane.f32.xlu0 %v2516
    %v2518 = vpop.xlane.xlu0 %2517
    %v2519 = vmul.f32 %v2515, %v72
    %v2520 = vmul.f32 %v2518, %v72
    %v2521 = vsub.f32 %v2507, %v2519
    %v2522 = vsub.f32 %v2508, %v2520
    %v2523 = vmul.f32 %v2521, %v2521
    %v2524 = vmul.f32 %v2522, %v2522
    %v2525 = vsel %vm65, %v2523, 0.0
    %2526 = vadd.xlane.f32.xlu0 %v2525
    %v2527 = vpop.xlane.xlu0 %2526
    %v2528 = vsel %vm65, %v2524, 0.0
    %2529 = vadd.xlane.f32.xlu0 %v2528
    %v2530 = vpop.xlane.xlu0 %2529
    %v2531 = vmul.f32 %v2527, %v72
    %v2532 = vmul.f32 %v2530, %v72
    %v2533 = vadd.f32 %v2531, 1e-12
    %v2534 = vadd.f32 %v2532, 1e-12
    %v2535 = vrsqrt.pop %v2533
    %v2536 = vrsqrt.pop %v2534
    %v2537 = vmul.f32 %v2521, %v2535
    %v2538 = vmul.f32 %v2522, %v2536
    %v2540 = vlaneseq
    %v2541 = vshrl.u32 %v2540, 7
    %v2542 = vsub.s32 0, %v2541
    %v2543 = vrot.slane %v2510, %v2542
    %v2545 = vmul.f32 %v2537, %v2543
    %v2546 = vmul.f32 %v2538, %v2543
    %v2548 = vlaneseq
    %v2549 = vshrl.u32 %v2548, 7
    %v2550 = vsub.s32 0, %v2549
    %v2551 = vrot.slane %v2512, %v2550
    %v2553 = vadd.f32 %v2545, %v2551
    %v2554 = vadd.f32 %v2546, %v2551
    %s2555 = scalar_lea.vmem %s10, 16
    %v2556 = vld [vmem:[%s2555] sm:$0xf]
    %v2557 = vld [vmem:[%s2555 + $0x4] sm:$0xf]
    %v2558 = vld [vmem:[%s2555 + $0x8] sm:$0xf]
    %v2559 = vld [vmem:[%s2555 + $0xc] sm:$0xf]
    %v2560 = vpack.c.bf16 %v2554, %v2553
    %s2561 = scalar_lea.vmem %s11, 1
    %v2562 = vld [vmem:[%s2561] sm:$0x1]
    %v2564 = vlaneseq
    %v2565 = vshrl.u32 %v2564, 7
    %v2566 = vsub.s32 0, %v2565
    %v2567 = vrot.slane %v2562, %v2566
    %v2573 = vunpack.c.l.b16 %v2556
    %v2574 = vunpack.c.l.b16 %v2557
    %v2575 = vunpack.c.l.b16 %v2558
    %v2576 = vunpack.c.l.b16 %v2559
    %v2577 = vpack.c.b16 %v2574, %v2573
    %v2578 = vpack.c.b16 %v2576, %v2575
    %v2582 = vsel %vm65, %v2560, 0
    %2584 = vmatprep.subr.bf16.mxu0 0
    %2585 = vmatpush1.bf16.msra.mxu0 %v2577
    %2586 = vmatprep.subr.bf16.mxu0 0
    %2587 = vmatpush1.bf16.msra.mxu0 %v2578
    %2588 = vmatprep.subr.bf16.mxu0 0
    %2589 = vmatpush1.bf16.msra.mxu0 0
    %2590 = vmatprep.subr.bf16.mxu0 0
    %2591 = vmatpush1.bf16.msra.mxu0 0
    %2592 = vmatprep.subr.bf16.mxu0 0
    %2593 = vmatpush1.bf16.msra.mxu0 0
    %2594 = vmatprep.subr.bf16.mxu0 0
    %2595 = vmatpush1.bf16.msra.mxu0 0
    %2596 = vmatprep.subr.bf16.mxu0 0
    %2597 = vmatpush1.bf16.msra.mxu0 0
    %2598 = vmatprep.subr.bf16.mxu0 0
    %2599 = vmatpush1.bf16.msra.mxu0 0
    %2600 = vmatprep.subr.bf16.mxu0 0
    %2601 = vmatpush1.bf16.msra.mxu0 0
    %2602 = vmatprep.subr.bf16.mxu0 0
    %2603 = vmatpush1.bf16.msra.mxu0 0
    %2604 = vmatprep.subr.bf16.mxu0 0
    %2605 = vmatpush1.bf16.msra.mxu0 0
    %2606 = vmatprep.subr.bf16.mxu0 0
    %2607 = vmatpush1.bf16.msra.mxu0 0
    %2608 = vmatprep.subr.bf16.mxu0 0
    %2609 = vmatpush1.bf16.msra.mxu0 0
    %2610 = vmatprep.subr.bf16.mxu0 0
    %2611 = vmatpush1.bf16.msra.mxu0 0
    %2612 = vmatprep.subr.bf16.mxu0 0
    %2613 = vmatpush1.bf16.msra.mxu0 0
    %2614 = vmatprep.subr.bf16.mxu0 0
    %2615 = vmatpush1.bf16.msra.mxu0 0
    %2616 = vmatprep.mubr.bf16.mxu0 0
    %2617 = vmatmul.mubr.bf16.gmra.mrb[0].mxu0 %v2582
    %v2618 = vpop.f32.mrb[0].mxu0
    %v2619 = vadd.f32 %v2567, %v2618
    %v2620 = vpop.f32.mrb[0].mxu0
    %v2621 = vpop.f32.mrb[0].mxu0
    %v2622 = vadd.f32 %v2567, %v2621
    %v2623 = vpop.f32.mrb[0].mxu0
    %2624 = vdwg.mxu0
    %v2625 = vmul.f32 %v2619, 0.5
    %v2626 = vmul.f32 %v2622, 0.5
    %v2627 = vmul.f32 %v2619, 0.044715
    %v2628 = vmul.f32 %v2622, 0.044715
    %v2629 = vmul.f32 %v2627, %v2619
    %v2630 = vmul.f32 %v2628, %v2622
    %v2631 = vmul.f32 %v2629, %v2619
    %v2632 = vmul.f32 %v2630, %v2622
    %v2633 = vadd.f32 %v2619, %v2631
    %v2634 = vadd.f32 %v2622, %v2632
    %v2635 = vmul.f32 %v2633, 0.7978846
    %v2636 = vmul.f32 %v2634, 0.7978846
    %v2637 = vtanh.pop %v2635
    %v2638 = vtanh.pop %v2636
    %v2639 = vadd.f32 %v2637, 1.0
    %v2640 = vadd.f32 %v2638, 1.0
    %v2641 = vmul.f32 %v2625, %v2639
    %v2642 = vmul.f32 %v2626, %v2640
    %s2643 = scalar_lea.vmem %s12, 64
    %v2644 = vld [vmem:[%s2643] sm:$0xf]
    %v2645 = vld [vmem:[%s2643 + $0x4] sm:$0xf]
    %v2646 = vld [vmem:[%s2643 + $0x8] sm:$0xf]
    %v2647 = vld [vmem:[%s2643 + $0xc] sm:$0xf]
    %v2648 = vld [vmem:[%s2643 + $0x10] sm:$0xf]
    %v2649 = vld [vmem:[%s2643 + $0x14] sm:$0xf]
    %v2650 = vld [vmem:[%s2643 + $0x18] sm:$0xf]
    %v2651 = vld [vmem:[%s2643 + $0x1c] sm:$0xf]
    %v2652 = vld [vmem:[%s2643 + $0x20] sm:$0xf]
    %v2653 = vld [vmem:[%s2643 + $0x24] sm:$0xf]
    %v2654 = vld [vmem:[%s2643 + $0x28] sm:$0xf]
    %v2655 = vld [vmem:[%s2643 + $0x2c] sm:$0xf]
    %v2656 = vld [vmem:[%s2643 + $0x30] sm:$0xf]
    %v2657 = vld [vmem:[%s2643 + $0x34] sm:$0xf]
    %v2658 = vld [vmem:[%s2643 + $0x38] sm:$0xf]
    %v2659 = vld [vmem:[%s2643 + $0x3c] sm:$0xf]
    %v2660 = vpack.c.bf16 %v2642, %v2641
    %s2661 = scalar_lea.vmem %s13, 1
    %v2662 = vld [vmem:[%s2661] sm:$0x1]
    %v2664 = vlaneseq
    %v2665 = vshrl.u32 %v2664, 7
    %v2666 = vsub.s32 0, %v2665
    %v2667 = vrot.slane %v2662, %v2666
    %v2685 = vunpack.c.l.b16 %v2644
    %v2686 = vunpack.c.l.b16 %v2645
    %v2687 = vunpack.c.l.b16 %v2646
    %v2688 = vunpack.c.l.b16 %v2647
    %v2689 = vunpack.c.l.b16 %v2648
    %v2690 = vunpack.c.l.b16 %v2649
    %v2691 = vunpack.c.l.b16 %v2650
    %v2692 = vunpack.c.l.b16 %v2651
    %v2693 = vunpack.c.l.b16 %v2652
    %v2694 = vunpack.c.l.b16 %v2653
    %v2695 = vunpack.c.l.b16 %v2654
    %v2696 = vunpack.c.l.b16 %v2655
    %v2697 = vunpack.c.l.b16 %v2656
    %v2698 = vunpack.c.l.b16 %v2657
    %v2699 = vunpack.c.l.b16 %v2658
    %v2700 = vunpack.c.l.b16 %v2659
    %v2701 = vpack.c.b16 %v2686, %v2685
    %v2702 = vpack.c.b16 %v2688, %v2687
    %v2703 = vpack.c.b16 %v2690, %v2689
    %v2704 = vpack.c.b16 %v2692, %v2691
    %v2705 = vpack.c.b16 %v2694, %v2693
    %v2706 = vpack.c.b16 %v2696, %v2695
    %v2707 = vpack.c.b16 %v2698, %v2697
    %v2708 = vpack.c.b16 %v2700, %v2699
    %2717 = vmatprep.subr.bf16.mxu0 0
    %2718 = vmatpush1.bf16.msra.mxu0 %v2701
    %2719 = vmatprep.subr.bf16.mxu0 0
    %2720 = vmatpush1.bf16.msra.mxu0 %v2702
    %2721 = vmatprep.subr.bf16.mxu0 0
    %2722 = vmatpush1.bf16.msra.mxu0 %v2703
    %2723 = vmatprep.subr.bf16.mxu0 0
    %2724 = vmatpush1.bf16.msra.mxu0 %v2704
    %2725 = vmatprep.subr.bf16.mxu0 0
    %2726 = vmatpush1.bf16.msra.mxu0 %v2705
    %2727 = vmatprep.subr.bf16.mxu0 0
    %2728 = vmatpush1.bf16.msra.mxu0 %v2706
    %2729 = vmatprep.subr.bf16.mxu0 0
    %2730 = vmatpush1.bf16.msra.mxu0 %v2707
    %2731 = vmatprep.subr.bf16.mxu0 0
    %2732 = vmatpush1.bf16.msra.mxu0 %v2708
    %2733 = vmatprep.subr.bf16.mxu0 0
    %2734 = vmatpush1.bf16.msra.mxu0 0
    %2735 = vmatprep.subr.bf16.mxu0 0
    %2736 = vmatpush1.bf16.msra.mxu0 0
    %2737 = vmatprep.subr.bf16.mxu0 0
    %2738 = vmatpush1.bf16.msra.mxu0 0
    %2739 = vmatprep.subr.bf16.mxu0 0
    %2740 = vmatpush1.bf16.msra.mxu0 0
    %2741 = vmatprep.subr.bf16.mxu0 0
    %2742 = vmatpush1.bf16.msra.mxu0 0
    %2743 = vmatprep.subr.bf16.mxu0 0
    %2744 = vmatpush1.bf16.msra.mxu0 0
    %2745 = vmatprep.subr.bf16.mxu0 0
    %2746 = vmatpush1.bf16.msra.mxu0 0
    %2747 = vmatprep.subr.bf16.mxu0 0
    %2748 = vmatpush1.bf16.msra.mxu0 0
    %2749 = vmatprep.mubr.bf16.mxu0 0
    %2750 = vmatmul.mubr.bf16.gmra.mrb[0].mxu0 %v2660
    %v2751 = vpop.f32.mrb[0].mxu0
    %v2752 = vadd.f32 %v2667, %v2751
    %v2753 = vpop.f32.mrb[0].mxu0
    %v2754 = vpop.f32.mrb[0].mxu0
    %v2755 = vadd.f32 %v2667, %v2754
    %v2756 = vpop.f32.mrb[0].mxu0
    %2757 = vdwg.mxu0
    %v2758 = vadd.f32 %v2553, %v2752
    %v2759 = vadd.f32 %v2554, %v2755
    %s2760 = scalar_lea.vmem %s14, 1
    %v2761 = vld [vmem:[%s2760] sm:$0x1]
    %s2762 = scalar_lea.vmem %s15, 1
    %v2763 = vld [vmem:[%s2762] sm:$0x1]
    %v2764 = vsel %vm65, %v2758, 0.0
    %2765 = vadd.xlane.f32.xlu0 %v2764
    %v2766 = vpop.xlane.xlu0 %2765
    %v2767 = vsel %vm65, %v2759, 0.0
    %2768 = vadd.xlane.f32.xlu0 %v2767
    %v2769 = vpop.xlane.xlu0 %2768
    %v2770 = vmul.f32 %v2766, %v72
    %v2771 = vmul.f32 %v2769, %v72
    %v2772 = vsub.f32 %v2758, %v2770
    %v2773 = vsub.f32 %v2759, %v2771
    %v2774 = vmul.f32 %v2772, %v2772
    %v2775 = vmul.f32 %v2773, %v2773
    %v2776 = vsel %vm65, %v2774, 0.0
    %2777 = vadd.xlane.f32.xlu0 %v2776
    %v2778 = vpop.xlane.xlu0 %2777
    %v2779 = vsel %vm65, %v2775, 0.0
    %2780 = vadd.xlane.f32.xlu0 %v2779
    %v2781 = vpop.xlane.xlu0 %2780
    %v2782 = vmul.f32 %v2778, %v72
    %v2783 = vmul.f32 %v2781, %v72
    %v2784 = vadd.f32 %v2782, 1e-12
    %v2785 = vadd.f32 %v2783, 1e-12
    %v2786 = vrsqrt.pop %v2784
    %v2787 = vrsqrt.pop %v2785
    %v2788 = vmul.f32 %v2772, %v2786
    %v2789 = vmul.f32 %v2773, %v2787
    %v2791 = vlaneseq
    %v2792 = vshrl.u32 %v2791, 7
    %v2793 = vsub.s32 0, %v2792
    %v2794 = vrot.slane %v2761, %v2793
    %v2796 = vmul.f32 %v2788, %v2794
    %v2797 = vmul.f32 %v2789, %v2794
    %v2799 = vlaneseq
    %v2800 = vshrl.u32 %v2799, 7
    %v2801 = vsub.s32 0, %v2800
    %v2802 = vrot.slane %v2763, %v2801
    %v2804 = vadd.f32 %v2796, %v2802
    %v2805 = vadd.f32 %v2797, %v2802
    %v2807 = vrot.slane %v2805, 7
    %vm2809 = vcmask 1040384
    %v2810 = vsel %vm2809, %v2804, %v2807
    %v2811 = vld [vmem:[%s16] sm:$0xf]
    %v2812 = vld [vmem:[%s16 + $0x4] sm:$0xf]
    %v2813 = vld [vmem:[%s16 + $0x8] sm:$0xf]
    %v2814 = vld [vmem:[%s16 + $0xc] sm:$0xf]
    %v2815 = vpack.c.bf16 %v2810, %v2810
    %v2816 = vld [vmem:[%s17] sm:$0x1]
    %v2818 = vlaneseq
    %v2819 = vshrl.u32 %v2818, 7
    %v2820 = vsub.s32 0, %v2819
    %v2821 = vrot.slane %v2816, %v2820
    %v2827 = vunpack.c.l.b16 %v2811
    %v2828 = vunpack.c.l.b16 %v2812
    %v2829 = vunpack.c.l.b16 %v2813
    %v2830 = vunpack.c.l.b16 %v2814
    %v2831 = vpack.c.b16 %v2828, %v2827
    %v2832 = vpack.c.b16 %v2830, %v2829
    %v2836 = vsel %vm65, %v2815, 0
    %2838 = vmatprep.subr.bf16.mxu0 0
    %2839 = vmatpush1.bf16.msra.mxu0 %v2831
    %2840 = vmatprep.subr.bf16.mxu0 0
    %2841 = vmatpush1.bf16.msra.mxu0 %v2832
    %2842 = vmatprep.subr.bf16.mxu0 0
    %2843 = vmatpush1.bf16.msra.mxu0 0
    %2844 = vmatprep.subr.bf16.mxu0 0
    %2845 = vmatpush1.bf16.msra.mxu0 0
    %2846 = vmatprep.subr.bf16.mxu0 0
    %2847 = vmatpush1.bf16.msra.mxu0 0
    %2848 = vmatprep.subr.bf16.mxu0 0
    %2849 = vmatpush1.bf16.msra.mxu0 0
    %2850 = vmatprep.subr.bf16.mxu0 0
    %2851 = vmatpush1.bf16.msra.mxu0 0
    %2852 = vmatprep.subr.bf16.mxu0 0
    %2853 = vmatpush1.bf16.msra.mxu0 0
    %2854 = vmatprep.subr.bf16.mxu0 0
    %2855 = vmatpush1.bf16.msra.mxu0 0
    %2856 = vmatprep.subr.bf16.mxu0 0
    %2857 = vmatpush1.bf16.msra.mxu0 0
    %2858 = vmatprep.subr.bf16.mxu0 0
    %2859 = vmatpush1.bf16.msra.mxu0 0
    %2860 = vmatprep.subr.bf16.mxu0 0
    %2861 = vmatpush1.bf16.msra.mxu0 0
    %2862 = vmatprep.subr.bf16.mxu0 0
    %2863 = vmatpush1.bf16.msra.mxu0 0
    %2864 = vmatprep.subr.bf16.mxu0 0
    %2865 = vmatpush1.bf16.msra.mxu0 0
    %2866 = vmatprep.subr.bf16.mxu0 0
    %2867 = vmatpush1.bf16.msra.mxu0 0
    %2868 = vmatprep.subr.bf16.mxu0 0
    %2869 = vmatpush1.bf16.msra.mxu0 0
    %2870 = vmatprep.mubr.bf16.mxu0 0
    %2871 = vmatmul.mubr.bf16.gmra.mrb[0].mxu0 %v2836
    %v2872 = vpop.f32.mrb[0].mxu0
    %v2873 = vadd.f32 %v2821, %v2872
    %v2874 = vpop.f32.mrb[0].mxu0
    %v2875 = vpop.f32.mrb[0].mxu0
    %v2876 = vpop.f32.mrb[0].mxu0
    %2877 = vdwg.mxu0
    %2878 = vst [vmem:[#allocation2] sm:$0x3] %v2873
    // Predicated region
    $region74: #{emotion_classifier_forward.1} parent=1 // pred_check
      _
    $region75: #{emotion_classifier_forward.1} parent=1 // pred_check_branch
      %2880 = sbr.rel (0) target = $region77
    $region76: #{emotion_classifier_forward.1} parent=1 // pred_region
      %s2882 = ssub.s32 32, 32
      %2883 = vsyncadd [#allocation3], %s2882
      %s2885 = sshll.u32 [#allocation2], 4
      %s2886 = int_to_ptr.vmem [resolvable:$true] %s2885
      %2888 = dma.vmem_to_hbm [thread:$0]  %s2886, 32, %s18, [#allocation3]
    $region77: #{emotion_classifier_forward.1} parent=1 // pred_fallthru
      _
    // Predicated region
    $region78: #{emotion_classifier_forward.1} parent=1 // pred_check
      _
    $region79: #{emotion_classifier_forward.1} parent=1 // pred_check_branch
      %2890 = sbr.rel (0) target = $region81
    $region80: #{emotion_classifier_forward.1} parent=1 // pred_region
      %2891 = dma.done [#allocation3], 32
    $region81: #{emotion_classifier_forward.1} parent=1 // pred_fallthru
      _
    %2892 = vsyncpa [#allocation3], 1

</llo_original>
